<compile_context>
chip_gen: v7x
topology: tpu7x:2x2x1
jax: 0.10.0
libtpu: 0.0.40
codegen_flags: <defaults>
</compile_context>

<pallas_src>
import functools
import math

import jax
import jax.numpy as jnp
from jax import lax
from jax.experimental import pallas as pl
from jax.experimental.pallas import tpu as pltpu


def _layernorm(x, gamma, beta, eps=1e-5):
    # x: (T, E) f32; gamma/beta: (1, E). Biased variance, like nn.LayerNorm.
    mean = jnp.mean(x, axis=-1, keepdims=True)
    xc = x - mean
    var = jnp.mean(xc * xc, axis=-1, keepdims=True)
    inv = lax.rsqrt(var + eps)
    return xc * inv * gamma + beta


def _gelu_exact(x):
    # PyTorch nn.GELU() default = exact erf-based GELU.
    return 0.5 * x * (1.0 + lax.erf(x * (1.0 / math.sqrt(2.0))))


def transformer_block_kernel(
    xq_ref,                    # (tq, E)  f32  query-row tile of x (residual path)
    xf_ref,                    # (T,  E)  bf16 full sequence (K/V source)
    g1_ref, b1_ref,            # (1, E)   layernorm1
    wq_ref, wk_ref, wv_ref,    # (E, E)   bf16, per-head columns concatenated
    wp_ref, bp_ref,            # (E, E) bf16, (1, E) f32 — attention out proj
    g2_ref, b2_ref,            # (1, E)   layernorm2
    w1_ref, bb1_ref,           # (E, 4E) bf16, (1, 4E) f32 — MLP fc1
    w2_ref, bb2_ref,           # (4E, E) bf16, (1, E)  f32 — MLP fc2
    o_ref,                     # (tq, E)
    k_cache, v_cache,          # (T, E) bf16 VMEM scratch — per-batch K/V cache
    attn_scratch,              # (tq, E) f32 VMEM scratch — per-head outputs
    *, num_heads, mlp_chunk,
):
    f32 = jnp.float32
    bf16 = jnp.bfloat16

    xq = xq_ref[...].astype(f32)           # (tq, E)
    tq, E = xq.shape
    H = num_heads
    hs = E // H
    scale = E ** (-0.5)                    # matches PyTorch: embedding_dim ** -0.5

    g1 = g1_ref[...]
    b1 = b1_ref[...]

    # ---- per-batch K/V cache: fill once on the first query tile -----------
    # t axis is "arbitrary" (sequential per batch), so this is safe.
    @pl.when(pl.program_id(1) == 0)
    def _():
        xnf = _layernorm(xf_ref[...].astype(f32), g1, b1).astype(bf16)   # (T, E)
        k_cache[...] = jnp.dot(xnf, wk_ref[...],
                               preferred_element_type=f32).astype(bf16)
        v_cache[...] = jnp.dot(xnf, wv_ref[...],
                               preferred_element_type=f32).astype(bf16)

    # ---- x = x + attention(norm1(x)) --------------------------------------
    xnq = _layernorm(xq, g1, b1).astype(bf16)                            # (tq, E)
    q = jnp.dot(xnq, wq_ref[...], preferred_element_type=f32)           # (tq, E)
    # Fold the attention scale into q (tq*E mults instead of H*tq*T).
    qb = (q * scale).astype(bf16)
    kb = k_cache[...]                                                    # (T, E) bf16
    vb = v_cache[...]                                                    # (T, E) bf16

    dim_nums = (((1,), (1,)), ((), ()))    # contract last dims, no batch dims
    # NOTE: per-head minor dim is hs; for best MXU utilization hs should be
    # >= 128 (v5e) / 256 (v6e/v7x).  Functionally correct for any hs.
    for h in range(H):                     # static loop: lane-aligned slices
        lo, hi = h * hs, (h + 1) * hs
        qh = qb[:, lo:hi]                  # (tq, hs)
        kh = kb[:, lo:hi]                  # (T,  hs)
        vh = vb[:, lo:hi]                  # (T,  hs)
        s = lax.dot_general(qh, kh, dim_nums,
                            preferred_element_type=f32)                  # (tq, T)
        m = jnp.max(s, axis=-1, keepdims=True)
        e = jnp.exp(s - m)                                               # f32 (v5e-safe)
        inv = pl.reciprocal(jnp.sum(e, axis=-1, keepdims=True), approx=True)
        p = (e * inv).astype(bf16)
        # Write this head's result straight into the scratch (no concat).
        attn_scratch[:, lo:hi] = jnp.dot(p, vh, preferred_element_type=f32)

    attn = attn_scratch[...].astype(bf16)                                # (tq, E)
    attn_out = jnp.dot(attn, wp_ref[...],
                       preferred_element_type=f32) + bp_ref[...]
    x1 = xq + attn_out                                                   # (tq, E) f32

    # ---- x = x + mlp(norm2(x)), hidden dim processed in chunks ------------
    xn2 = _layernorm(x1, g2_ref[...], b2_ref[...]).astype(bf16)          # (tq, E)
    F4 = w1_ref.shape[1]
    n_chunks = (F4 + mlp_chunk - 1) // mlp_chunk
    mlp = jnp.zeros((tq, E), f32)
    for c in range(n_chunks):              # static loop over hidden chunks
        lo = c * mlp_chunk
        hi = min(F4, lo + mlp_chunk)
        hcol = jnp.dot(xn2, w1_ref[:, lo:hi],
                       preferred_element_type=f32) + bb1_ref[:, lo:hi]
        hcol = _gelu_exact(hcol).astype(bf16)                            # (tq, chunk)
        mlp = mlp + jnp.dot(hcol, w2_ref[lo:hi, :],
                            preferred_element_type=f32)
    mlp = mlp + bb2_ref[...]

    o_ref[...] = (x1 + mlp).astype(o_ref.dtype)


def _tpu_vmem_capacity_bytes():
    """Physical per-core VMEM, with a conservative fallback."""
    try:
        info = pltpu.get_tpu_info()
        cap = getattr(info, "vmem_capacity_bytes", None)
        if cap:
            return int(cap)
    except Exception:
        pass
    return 64 * 1024 * 1024   # conservative (v7x-sized) fallback


def _pick_t_tile(T, cap):
    """Largest divisor of T <= cap, preferring MXU-aligned multiples."""
    if T <= cap:
        return T
    for align in (256, 128, 16, 8):
        start = cap - (cap % align)
        for d in range(start, 0, -align):
            if d <= cap and T % d == 0:
                return d
    # TODO(synk): no suitable divisor — falls back to a single tile, which may
    # exceed the VMEM limit for very large T (compile-time failure, not a
    # wrong answer).
    return T


def _pick_mlp_chunk(F4, cap=1024):
    """Chunk size that divides 4E exactly, 128-aligned when possible."""
    if F4 <= cap:
        return F4
    for d in range(cap - (cap % 128), 127, -128):
        if F4 % d == 0:
            return d
    for d in range(cap, 0, -1):
        if F4 % d == 0:
            return d
    return F4


def transformer_block(x, params, num_heads, t_tile=None, mlp_chunk=None):
    B, T, E = x.shape
    if E % num_heads != 0:
        raise ValueError(f"embedding_dim={E} must be divisible by num_heads={num_heads}")
    (g1, b1, wq, wk, wv, wp, bp, g2, b2, w1, bb1, w2, bb2) = params

    bf16 = jnp.bfloat16
    # bf16 MXU operands (f32 accumulation in-kernel); also halves weight DMA.
    # LayerNorm params and biases stay f32 (added to f32 accumulators).
    wq_c = wq.astype(bf16)
    wk_c = wk.astype(bf16)
    wv_c = wv.astype(bf16)
    wp_c = wp.astype(bf16)
    w1_c = w1.astype(bf16)
    w2_c = w2.astype(bf16)
    params_c = (g1, b1, wq_c, wk_c, wv_c, wp_c, bp, g2, b2, w1_c, bb1, w2_c, bb2)

    # Generation-aware VMEM budget (leave headroom for Mosaic scratch/sems).
    vmem_cap = _tpu_vmem_capacity_bytes()
    vmem_limit = min(int(vmem_cap * 0.85), 112 * 1024 * 1024)
    t_cap = 512 if vmem_cap <= 64 * 1024 * 1024 else 1024

    if t_tile is None:
        t_tile = _pick_t_tile(T, t_cap)
    if T % t_tile != 0:
        raise ValueError(f"t_tile={t_tile} must divide T={T}")
    n_t = T // t_tile
    if mlp_chunk is None:
        mlp_chunk = _pick_mlp_chunk(w1.shape[1])

    # K/V are derived from a bf16 copy of x (they are cast to bf16 for the
    # MXU right after layernorm anyway) — halves the full-sequence DMA.
    x_bf16 = x.astype(bf16)

    kernel = functools.partial(transformer_block_kernel,
                               num_heads=num_heads, mlp_chunk=mlp_chunk)

    def build_call(single_buffer_weights):
        def wspec(a):
            nd = a.ndim
            kwargs = {}
            if single_buffer_weights:
                # Grid-invariant inputs: one pipeline buffer is enough.
                kwargs["pipeline_mode"] = pl.Buffered(1)
            return pl.BlockSpec(a.shape, lambda *_idx, _nd=nd: (0,) * _nd, **kwargs)

        in_specs = (
            [
                # query-row tile (also the residual path and MLP rows)
                pl.BlockSpec((pl.Squeezed(), t_tile, E), lambda b, t: (b, t, 0)),
                # full sequence (bf16) for K/V — block index constant in t, so
                # it is only re-DMA'd when the batch index changes.
                pl.BlockSpec((pl.Squeezed(), T, E), lambda b, t: (b, 0, 0)),
            ]
            + [wspec(p) for p in params_c]
        )
        out_spec = pl.BlockSpec((pl.Squeezed(), t_tile, E), lambda b, t: (b, t, 0))

        return pl.pallas_call(
            kernel,
            out_shape=jax.ShapeDtypeStruct((B, T, E), x.dtype),
            grid_spec=pltpu.PrefetchScalarGridSpec(
                num_scalar_prefetch=0,
                grid=(B, n_t),
                in_specs=in_specs,
                out_specs=out_spec,
                scratch_shapes=[
                    pltpu.VMEM((T, E), bf16),            # k_cache (per-batch)
                    pltpu.VMEM((T, E), bf16),            # v_cache (per-batch)
                    pltpu.VMEM((t_tile, E), jnp.float32)  # per-head attn output
                ],
            ),
            compiler_params=pltpu.CompilerParams(
                # b is "parallel" (dual-TC sharding on v7x); t must be
                # "arbitrary" so one core walks all query tiles of a batch and
                # reuses the K/V cache filled at t == 0.
                dimension_semantics=("parallel", "arbitrary"),
                vmem_limit_bytes=vmem_limit,
            ),
        )

    try:
        return build_call(True)(x, x_bf16, *params_c)
    except Exception:
        # Fallback for JAX versions that reject pl.Buffered(1).
        return build_call(False)(x, x_bf16, *params_c)


# ---------------- pure-JAX f32 reference (for correctness check) -----------
def reference(x, params, num_heads):
    (g1, b1, wq, wk, wv, wp, bp, g2, b2, w1, bb1, w2, bb2) = params
    B, T, E = x.shape
    H = num_heads
    hs = E // H

    def ln(z, g, be):
        mu = jnp.mean(z, -1, keepdims=True)
        zc = z - mu
        var = jnp.mean(zc * zc, -1, keepdims=True)
        return zc * lax.rsqrt(var + 1e-5) * g + be

    xn = ln(x, g1, b1)
    q = (xn @ wq).reshape(B, T, H, hs)
    k = (xn @ wk).reshape(B, T, H, hs)
    v = (xn @ wv).reshape(B, T, H, hs)
    scores = jnp.einsum('bqhd,bkhd->bhqk', q, k) * (E ** -0.5)
    probs = jax.nn.softmax(scores, axis=-1)
    attn = jnp.einsum('bhqk,bkhd->bqhd', probs, v).reshape(B, T, E)
    x1 = x + attn @ wp + bp
    xn2 = ln(x1, g2, b2)
    h = jax.nn.gelu(xn2 @ w1 + bb1, approximate=False)
    return x1 + h @ w2 + bb2


if __name__ == "__main__":
    B, T, E, H = 2, 8, 32, 4
    key = jax.random.PRNGKey(0)
    ks = jax.random.split(key, 16)

    x = jax.random.normal(ks[0], (B, T, E), jnp.float32)

    s = 0.05
    g1 = jnp.ones((1, E), jnp.float32)
    b1 = jnp.zeros((1, E), jnp.float32)
    wq = s * jax.random.normal(ks[1], (E, E), jnp.float32)
    wk = s * jax.random.normal(ks[2], (E, E), jnp.float32)
    wv = s * jax.random.normal(ks[3], (E, E), jnp.float32)
    wp = s * jax.random.normal(ks[4], (E, E), jnp.float32)
    bp = s * jax.random.normal(ks[5], (1, E), jnp.float32)
    g2 = jnp.ones((1, E), jnp.float32)
    b2 = jnp.zeros((1, E), jnp.float32)
    w1 = s * jax.random.normal(ks[6], (E, 4 * E), jnp.float32)
    bb1 = s * jax.random.normal(ks[7], (1, 4 * E), jnp.float32)
    w2 = s * jax.random.normal(ks[8], (4 * E, E), jnp.float32)
    bb2 = s * jax.random.normal(ks[9], (1, E), jnp.float32)

    params = (g1, b1, wq, wk, wv, wp, bp, g2, b2, w1, bb1, w2, bb2)

    out = transformer_block(x, params, num_heads=H)
    out = jax.block_until_ready(out)

    ref = reference(x, params, num_heads=H)
    assert out.shape == (B, T, E)
    # Tolerance accounts for bf16 MXU operands / bf16 K-V path (f32
    # accumulation, f32 layernorm/softmax/GELU) and the approx softmax
    # reciprocal.
    assert jnp.allclose(out, ref, atol=3e-2, rtol=3e-2), "mismatch vs reference"

    print("KERNEL_OK")
</pallas_src>

<mosaic_0001>
module attributes {stable_mosaic.version = 11 : i64} {
  func.func @transformer_block_kernel(%arg0: i32, %arg1: i32, %arg2: memref<1x8x32xf32, #tpu.memory_space<vmem>>, %arg3: memref<1x8x32xbf16, #tpu.memory_space<vmem>>, %arg4: memref<1x32xf32, #tpu.memory_space<vmem>>, %arg5: memref<1x32xf32, #tpu.memory_space<vmem>>, %arg6: memref<32x32xbf16, #tpu.memory_space<vmem>>, %arg7: memref<32x32xbf16, #tpu.memory_space<vmem>>, %arg8: memref<32x32xbf16, #tpu.memory_space<vmem>>, %arg9: memref<32x32xbf16, #tpu.memory_space<vmem>>, %arg10: memref<1x32xf32, #tpu.memory_space<vmem>>, %arg11: memref<1x32xf32, #tpu.memory_space<vmem>>, %arg12: memref<1x32xf32, #tpu.memory_space<vmem>>, %arg13: memref<32x128xbf16, #tpu.memory_space<vmem>>, %arg14: memref<1x128xf32, #tpu.memory_space<vmem>>, %arg15: memref<128x32xbf16, #tpu.memory_space<vmem>>, %arg16: memref<1x32xf32, #tpu.memory_space<vmem>>, %arg17: memref<1x8x32xf32, #tpu.memory_space<vmem>>, %arg18: memref<8x32xbf16, #tpu.memory_space<vmem>>, %arg19: memref<8x32xbf16, #tpu.memory_space<vmem>>, %arg20: memref<8x32xf32, #tpu.memory_space<vmem>>) attributes {dimension_semantics = [#tpu.dimension_semantics<parallel>, #tpu.dimension_semantics<arbitrary>], iteration_bounds = array<i64: 2, 1>, scalar_prefetch = 0 : i64, scratch_operands = 3 : i64, tpu.core_type = #tpu.core_type<tc>, window_params = [{transform_indices = @transform_0, window_bounds = array<i64: 1, 8, 32>}, {transform_indices = @transform_1, window_bounds = array<i64: 1, 8, 32>}, {pipeline_mode = #tpu.pipeline_mode<synchronous>, transform_indices = @transform_2, window_bounds = array<i64: 1, 32>}, {pipeline_mode = #tpu.pipeline_mode<synchronous>, transform_indices = @transform_3, window_bounds = array<i64: 1, 32>}, {pipeline_mode = #tpu.pipeline_mode<synchronous>, transform_indices = @transform_4, window_bounds = array<i64: 32, 32>}, {pipeline_mode = #tpu.pipeline_mode<synchronous>, transform_indices = @transform_5, window_bounds = array<i64: 32, 32>}, {pipeline_mode = #tpu.pipeline_mode<synchronous>, transform_indices = @transform_6, window_bounds = array<i64: 32, 32>}, {pipeline_mode = #tpu.pipeline_mode<synchronous>, transform_indices = @transform_7, window_bounds = array<i64: 32, 32>}, {pipeline_mode = #tpu.pipeline_mode<synchronous>, transform_indices = @transform_8, window_bounds = array<i64: 1, 32>}, {pipeline_mode = #tpu.pipeline_mode<synchronous>, transform_indices = @transform_9, window_bounds = array<i64: 1, 32>}, {pipeline_mode = #tpu.pipeline_mode<synchronous>, transform_indices = @transform_10, window_bounds = array<i64: 1, 32>}, {pipeline_mode = #tpu.pipeline_mode<synchronous>, transform_indices = @transform_11, window_bounds = array<i64: 32, 128>}, {pipeline_mode = #tpu.pipeline_mode<synchronous>, transform_indices = @transform_12, window_bounds = array<i64: 1, 128>}, {pipeline_mode = #tpu.pipeline_mode<synchronous>, transform_indices = @transform_13, window_bounds = array<i64: 128, 32>}, {pipeline_mode = #tpu.pipeline_mode<synchronous>, transform_indices = @transform_14, window_bounds = array<i64: 1, 32>}, {transform_indices = @transform_15, window_bounds = array<i64: 1, 8, 32>}]} {
    %c0 = arith.constant 0 : index
    %c0_0 = arith.constant 0 : index
    %c0_1 = arith.constant 0 : index
    %0 = vector.load %arg2[%c0, %c0_0, %c0_1] : memref<1x8x32xf32, #tpu.memory_space<vmem>>, vector<1x8x32xf32>
    %1 = vector.shape_cast %0 : vector<1x8x32xf32> to vector<8x32xf32>
    %c0_2 = arith.constant 0 : index
    %c0_3 = arith.constant 0 : index
    %2 = vector.load %arg4[%c0_2, %c0_3] : memref<1x32xf32, #tpu.memory_space<vmem>>, vector<1x32xf32>
    %c0_4 = arith.constant 0 : index
    %c0_5 = arith.constant 0 : index
    %3 = vector.load %arg5[%c0_4, %c0_5] : memref<1x32xf32, #tpu.memory_space<vmem>>, vector<1x32xf32>
    %c0_i32 = arith.constant 0 : i32
    %4 = arith.cmpi eq, %arg1, %c0_i32 : i32
    %5 = arith.extui %4 : i1 to i32
    %c0_i32_6 = arith.constant 0 : i32
    %6 = arith.cmpi ne, %5, %c0_i32_6 : i32
    scf.if %6 {
      %c0_73 = arith.constant 0 : index
      %c0_74 = arith.constant 0 : index
      %c0_75 = arith.constant 0 : index
      %159 = vector.load %arg3[%c0_73, %c0_74, %c0_75] : memref<1x8x32xbf16, #tpu.memory_space<vmem>>, vector<1x8x32xbf16>
      %160 = vector.shape_cast %159 : vector<1x8x32xbf16> to vector<8x32xbf16>
      %161 = arith.extf %160 : vector<8x32xbf16> to vector<8x32xf32>
      %cst_76 = arith.constant dense<0.000000e+00> : vector<8xf32>
      %162 = vector.multi_reduction <add>, %161, %cst_76 [1] : vector<8x32xf32> to vector<8xf32>
      %163 = vector.shape_cast %162 : vector<8xf32> to vector<8x1xf32>
      %cst_77 = arith.constant 3.200000e+01 : f32
      %164 = vector.broadcast %cst_77 : f32 to vector<8x1xf32>
      %165 = arith.divf %163, %164 : vector<8x1xf32>
      %166 = vector.broadcast %165 : vector<8x1xf32> to vector<8x32xf32>
      %167 = arith.subf %161, %166 : vector<8x32xf32>
      %168 = arith.mulf %167, %167 : vector<8x32xf32>
      %cst_78 = arith.constant dense<0.000000e+00> : vector<8xf32>
      %169 = vector.multi_reduction <add>, %168, %cst_78 [1] : vector<8x32xf32> to vector<8xf32>
      %170 = vector.shape_cast %169 : vector<8xf32> to vector<8x1xf32>
      %cst_79 = arith.constant 3.200000e+01 : f32
      %171 = vector.broadcast %cst_79 : f32 to vector<8x1xf32>
      %172 = arith.divf %170, %171 : vector<8x1xf32>
      %cst_80 = arith.constant 9.99999974E-6 : f32
      %173 = vector.broadcast %cst_80 : f32 to vector<8x1xf32>
      %174 = arith.addf %172, %173 : vector<8x1xf32>
      %175 = math.rsqrt %174 : vector<8x1xf32>
      %176 = vector.broadcast %175 : vector<8x1xf32> to vector<8x32xf32>
      %177 = arith.mulf %167, %176 : vector<8x32xf32>
      %178 = vector.broadcast %2 : vector<1x32xf32> to vector<8x32xf32>
      %179 = arith.mulf %177, %178 : vector<8x32xf32>
      %180 = vector.broadcast %3 : vector<1x32xf32> to vector<8x32xf32>
      %181 = arith.addf %179, %180 : vector<8x32xf32>
      %182 = arith.truncf %181 : vector<8x32xf32> to vector<8x32xbf16>
      %c0_81 = arith.constant 0 : index
      %c0_82 = arith.constant 0 : index
      %183 = vector.load %arg7[%c0_81, %c0_82] : memref<32x32xbf16, #tpu.memory_space<vmem>>, vector<32x32xbf16>
      %cst_83 = arith.constant dense<0.000000e+00> : vector<8x32xf32>
      %184 = tpu.matmul %182, %183, %cst_83 {dimension_numbers = #tpu.dot_dimension_numbers<[1], [0], [0], [1], [0, 0, 1, 1], [], []>} : vector<8x32xbf16>, vector<32x32xbf16>, vector<8x32xf32> -> vector<8x32xf32>
      %185 = arith.truncf %184 : vector<8x32xf32> to vector<8x32xbf16>
      %c0_84 = arith.constant 0 : index
      %c0_85 = arith.constant 0 : index
      %186 = vector.load %arg18[%c0_84, %c0_85] : memref<8x32xbf16, #tpu.memory_space<vmem>>, vector<8x32xbf16>
      tpu.vector_store %arg18[%c0_84, %c0_85], %185 {strides = array<i32>} : memref<8x32xbf16, #tpu.memory_space<vmem>>, vector<8x32xbf16>,
      %c0_86 = arith.constant 0 : index
      %c0_87 = arith.constant 0 : index
      %187 = vector.load %arg8[%c0_86, %c0_87] : memref<32x32xbf16, #tpu.memory_space<vmem>>, vector<32x32xbf16>
      %cst_88 = arith.constant dense<0.000000e+00> : vector<8x32xf32>
      %188 = tpu.matmul %182, %187, %cst_88 {dimension_numbers = #tpu.dot_dimension_numbers<[1], [0], [0], [1], [0, 0, 1, 1], [], []>} : vector<8x32xbf16>, vector<32x32xbf16>, vector<8x32xf32> -> vector<8x32xf32>
      %189 = arith.truncf %188 : vector<8x32xf32> to vector<8x32xbf16>
      %c0_89 = arith.constant 0 : index
      %c0_90 = arith.constant 0 : index
      %190 = vector.load %arg19[%c0_89, %c0_90] : memref<8x32xbf16, #tpu.memory_space<vmem>>, vector<8x32xbf16>
      tpu.vector_store %arg19[%c0_89, %c0_90], %189 {strides = array<i32>} : memref<8x32xbf16, #tpu.memory_space<vmem>>, vector<8x32xbf16>,
    } else {
    }
    %cst = arith.constant dense<0.000000e+00> : vector<8xf32>
    %7 = vector.multi_reduction <add>, %1, %cst [1] : vector<8x32xf32> to vector<8xf32>
    %8 = vector.shape_cast %7 : vector<8xf32> to vector<8x1xf32>
    %cst_7 = arith.constant 3.200000e+01 : f32
    %9 = vector.broadcast %cst_7 : f32 to vector<8x1xf32>
    %10 = arith.divf %8, %9 : vector<8x1xf32>
    %11 = vector.broadcast %10 : vector<8x1xf32> to vector<8x32xf32>
    %12 = arith.subf %1, %11 : vector<8x32xf32>
    %13 = arith.mulf %12, %12 : vector<8x32xf32>
    %cst_8 = arith.constant dense<0.000000e+00> : vector<8xf32>
    %14 = vector.multi_reduction <add>, %13, %cst_8 [1] : vector<8x32xf32> to vector<8xf32>
    %15 = vector.shape_cast %14 : vector<8xf32> to vector<8x1xf32>
    %cst_9 = arith.constant 3.200000e+01 : f32
    %16 = vector.broadcast %cst_9 : f32 to vector<8x1xf32>
    %17 = arith.divf %15, %16 : vector<8x1xf32>
    %cst_10 = arith.constant 9.99999974E-6 : f32
    %18 = vector.broadcast %cst_10 : f32 to vector<8x1xf32>
    %19 = arith.addf %17, %18 : vector<8x1xf32>
    %20 = math.rsqrt %19 : vector<8x1xf32>
    %21 = vector.broadcast %20 : vector<8x1xf32> to vector<8x32xf32>
    %22 = arith.mulf %12, %21 : vector<8x32xf32>
    %23 = vector.broadcast %2 : vector<1x32xf32> to vector<8x32xf32>
    %24 = arith.mulf %22, %23 : vector<8x32xf32>
    %25 = vector.broadcast %3 : vector<1x32xf32> to vector<8x32xf32>
    %26 = arith.addf %24, %25 : vector<8x32xf32>
    %27 = arith.truncf %26 : vector<8x32xf32> to vector<8x32xbf16>
    %c0_11 = arith.constant 0 : index
    %c0_12 = arith.constant 0 : index
    %28 = vector.load %arg6[%c0_11, %c0_12] : memref<32x32xbf16, #tpu.memory_space<vmem>>, vector<32x32xbf16>
    %cst_13 = arith.constant dense<0.000000e+00> : vector<8x32xf32>
    %29 = tpu.matmul %27, %28, %cst_13 {dimension_numbers = #tpu.dot_dimension_numbers<[1], [0], [0], [1], [0, 0, 1, 1], [], []>} : vector<8x32xbf16>, vector<32x32xbf16>, vector<8x32xf32> -> vector<8x32xf32>
    %cst_14 = arith.constant 0.176776692 : f32
    %30 = vector.broadcast %cst_14 : f32 to vector<8x32xf32>
    %31 = arith.mulf %29, %30 : vector<8x32xf32>
    %32 = arith.truncf %31 : vector<8x32xf32> to vector<8x32xbf16>
    %c0_15 = arith.constant 0 : index
    %c0_16 = arith.constant 0 : index
    %33 = vector.load %arg18[%c0_15, %c0_16] : memref<8x32xbf16, #tpu.memory_space<vmem>>, vector<8x32xbf16>
    %c0_17 = arith.constant 0 : index
    %c0_18 = arith.constant 0 : index
    %34 = vector.load %arg19[%c0_17, %c0_18] : memref<8x32xbf16, #tpu.memory_space<vmem>>, vector<8x32xbf16>
    %35 = vector.extract_strided_slice %32 {offsets = [0, 0], sizes = [8, 8], strides = [1, 1]} : vector<8x32xbf16> to vector<8x8xbf16>
    %36 = vector.extract_strided_slice %33 {offsets = [0, 0], sizes = [8, 8], strides = [1, 1]} : vector<8x32xbf16> to vector<8x8xbf16>
    %37 = vector.extract_strided_slice %34 {offsets = [0, 0], sizes = [8, 8], strides = [1, 1]} : vector<8x32xbf16> to vector<8x8xbf16>
    %cst_19 = arith.constant dense<0.000000e+00> : vector<8x8xf32>
    %38 = tpu.matmul %35, %36, %cst_19 {dimension_numbers = #tpu.dot_dimension_numbers<[1], [1], [0], [0], [0, 0, 1, 0], [], []>} : vector<8x8xbf16>, vector<8x8xbf16>, vector<8x8xf32> -> vector<8x8xf32>
    %cst_20 = arith.constant dense<0xFF800000> : vector<8xf32>
    %39 = vector.multi_reduction <maximumf>, %38, %cst_20 [1] : vector<8x8xf32> to vector<8xf32>
    %40 = vector.shape_cast %39 : vector<8xf32> to vector<8x1xf32>
    %41 = vector.broadcast %40 : vector<8x1xf32> to vector<8x8xf32>
    %42 = arith.subf %38, %41 : vector<8x8xf32>
    %43 = math.exp %42 : vector<8x8xf32>
    %cst_21 = arith.constant dense<0.000000e+00> : vector<8xf32>
    %44 = vector.multi_reduction <add>, %43, %cst_21 [1] : vector<8x8xf32> to vector<8xf32>
    %45 = vector.shape_cast %44 : vector<8xf32> to vector<8x1xf32>
    %46 = tpu.reciprocal %45 {approx = true} : vector<8x1xf32> -> vector<8x1xf32>
    %47 = vector.broadcast %46 : vector<8x1xf32> to vector<8x8xf32>
    %48 = arith.mulf %43, %47 : vector<8x8xf32>
    %49 = arith.truncf %48 : vector<8x8xf32> to vector<8x8xbf16>
    %cst_22 = arith.constant dense<0.000000e+00> : vector<8x8xf32>
    %50 = tpu.matmul %49, %37, %cst_22 {dimension_numbers = #tpu.dot_dimension_numbers<[1], [0], [0], [1], [0, 0, 1, 1], [], []>} : vector<8x8xbf16>, vector<8x8xbf16>, vector<8x8xf32> -> vector<8x8xf32>
    %c0_23 = arith.constant 0 : index
    %c0_24 = arith.constant 0 : index
    %51 = vector.load %arg20[%c0_23, %c0_24] : memref<8x32xf32, #tpu.memory_space<vmem>>, vector<8x8xf32>
    tpu.vector_store %arg20[%c0_23, %c0_24], %50 {strides = array<i32>} : memref<8x32xf32, #tpu.memory_space<vmem>>, vector<8x8xf32>,
    %52 = vector.extract_strided_slice %32 {offsets = [0, 8], sizes = [8, 8], strides = [1, 1]} : vector<8x32xbf16> to vector<8x8xbf16>
    %53 = vector.extract_strided_slice %33 {offsets = [0, 8], sizes = [8, 8], strides = [1, 1]} : vector<8x32xbf16> to vector<8x8xbf16>
    %54 = vector.extract_strided_slice %34 {offsets = [0, 8], sizes = [8, 8], strides = [1, 1]} : vector<8x32xbf16> to vector<8x8xbf16>
    %cst_25 = arith.constant dense<0.000000e+00> : vector<8x8xf32>
    %55 = tpu.matmul %52, %53, %cst_25 {dimension_numbers = #tpu.dot_dimension_numbers<[1], [1], [0], [0], [0, 0, 1, 0], [], []>} : vector<8x8xbf16>, vector<8x8xbf16>, vector<8x8xf32> -> vector<8x8xf32>
    %cst_26 = arith.constant dense<0xFF800000> : vector<8xf32>
    %56 = vector.multi_reduction <maximumf>, %55, %cst_26 [1] : vector<8x8xf32> to vector<8xf32>
    %57 = vector.shape_cast %56 : vector<8xf32> to vector<8x1xf32>
    %58 = vector.broadcast %57 : vector<8x1xf32> to vector<8x8xf32>
    %59 = arith.subf %55, %58 : vector<8x8xf32>
    %60 = math.exp %59 : vector<8x8xf32>
    %cst_27 = arith.constant dense<0.000000e+00> : vector<8xf32>
    %61 = vector.multi_reduction <add>, %60, %cst_27 [1] : vector<8x8xf32> to vector<8xf32>
    %62 = vector.shape_cast %61 : vector<8xf32> to vector<8x1xf32>
    %63 = tpu.reciprocal %62 {approx = true} : vector<8x1xf32> -> vector<8x1xf32>
    %64 = vector.broadcast %63 : vector<8x1xf32> to vector<8x8xf32>
    %65 = arith.mulf %60, %64 : vector<8x8xf32>
    %66 = arith.truncf %65 : vector<8x8xf32> to vector<8x8xbf16>
    %cst_28 = arith.constant dense<0.000000e+00> : vector<8x8xf32>
    %67 = tpu.matmul %66, %54, %cst_28 {dimension_numbers = #tpu.dot_dimension_numbers<[1], [0], [0], [1], [0, 0, 1, 1], [], []>} : vector<8x8xbf16>, vector<8x8xbf16>, vector<8x8xf32> -> vector<8x8xf32>
    %c0_29 = arith.constant 0 : index
    %c8 = arith.constant 8 : index
    %68 = vector.load %arg20[%c0_29, %c8] : memref<8x32xf32, #tpu.memory_space<vmem>>, vector<8x8xf32>
    tpu.vector_store %arg20[%c0_29, %c8], %67 {strides = array<i32>} : memref<8x32xf32, #tpu.memory_space<vmem>>, vector<8x8xf32>,
    %69 = vector.extract_strided_slice %32 {offsets = [0, 16], sizes = [8, 8], strides = [1, 1]} : vector<8x32xbf16> to vector<8x8xbf16>
    %70 = vector.extract_strided_slice %33 {offsets = [0, 16], sizes = [8, 8], strides = [1, 1]} : vector<8x32xbf16> to vector<8x8xbf16>
    %71 = vector.extract_strided_slice %34 {offsets = [0, 16], sizes = [8, 8], strides = [1, 1]} : vector<8x32xbf16> to vector<8x8xbf16>
    %cst_30 = arith.constant dense<0.000000e+00> : vector<8x8xf32>
    %72 = tpu.matmul %69, %70, %cst_30 {dimension_numbers = #tpu.dot_dimension_numbers<[1], [1], [0], [0], [0, 0, 1, 0], [], []>} : vector<8x8xbf16>, vector<8x8xbf16>, vector<8x8xf32> -> vector<8x8xf32>
    %cst_31 = arith.constant dense<0xFF800000> : vector<8xf32>
    %73 = vector.multi_reduction <maximumf>, %72, %cst_31 [1] : vector<8x8xf32> to vector<8xf32>
    %74 = vector.shape_cast %73 : vector<8xf32> to vector<8x1xf32>
    %75 = vector.broadcast %74 : vector<8x1xf32> to vector<8x8xf32>
    %76 = arith.subf %72, %75 : vector<8x8xf32>
    %77 = math.exp %76 : vector<8x8xf32>
    %cst_32 = arith.constant dense<0.000000e+00> : vector<8xf32>
    %78 = vector.multi_reduction <add>, %77, %cst_32 [1] : vector<8x8xf32> to vector<8xf32>
    %79 = vector.shape_cast %78 : vector<8xf32> to vector<8x1xf32>
    %80 = tpu.reciprocal %79 {approx = true} : vector<8x1xf32> -> vector<8x1xf32>
    %81 = vector.broadcast %80 : vector<8x1xf32> to vector<8x8xf32>
    %82 = arith.mulf %77, %81 : vector<8x8xf32>
    %83 = arith.truncf %82 : vector<8x8xf32> to vector<8x8xbf16>
    %cst_33 = arith.constant dense<0.000000e+00> : vector<8x8xf32>
    %84 = tpu.matmul %83, %71, %cst_33 {dimension_numbers = #tpu.dot_dimension_numbers<[1], [0], [0], [1], [0, 0, 1, 1], [], []>} : vector<8x8xbf16>, vector<8x8xbf16>, vector<8x8xf32> -> vector<8x8xf32>
    %c0_34 = arith.constant 0 : index
    %c16 = arith.constant 16 : index
    %85 = vector.load %arg20[%c0_34, %c16] : memref<8x32xf32, #tpu.memory_space<vmem>>, vector<8x8xf32>
    tpu.vector_store %arg20[%c0_34, %c16], %84 {strides = array<i32>} : memref<8x32xf32, #tpu.memory_space<vmem>>, vector<8x8xf32>,
    %86 = vector.extract_strided_slice %32 {offsets = [0, 24], sizes = [8, 8], strides = [1, 1]} : vector<8x32xbf16> to vector<8x8xbf16>
    %87 = vector.extract_strided_slice %33 {offsets = [0, 24], sizes = [8, 8], strides = [1, 1]} : vector<8x32xbf16> to vector<8x8xbf16>
    %88 = vector.extract_strided_slice %34 {offsets = [0, 24], sizes = [8, 8], strides = [1, 1]} : vector<8x32xbf16> to vector<8x8xbf16>
    %cst_35 = arith.constant dense<0.000000e+00> : vector<8x8xf32>
    %89 = tpu.matmul %86, %87, %cst_35 {dimension_numbers = #tpu.dot_dimension_numbers<[1], [1], [0], [0], [0, 0, 1, 0], [], []>} : vector<8x8xbf16>, vector<8x8xbf16>, vector<8x8xf32> -> vector<8x8xf32>
    %cst_36 = arith.constant dense<0xFF800000> : vector<8xf32>
    %90 = vector.multi_reduction <maximumf>, %89, %cst_36 [1] : vector<8x8xf32> to vector<8xf32>
    %91 = vector.shape_cast %90 : vector<8xf32> to vector<8x1xf32>
    %92 = vector.broadcast %91 : vector<8x1xf32> to vector<8x8xf32>
    %93 = arith.subf %89, %92 : vector<8x8xf32>
    %94 = math.exp %93 : vector<8x8xf32>
    %cst_37 = arith.constant dense<0.000000e+00> : vector<8xf32>
    %95 = vector.multi_reduction <add>, %94, %cst_37 [1] : vector<8x8xf32> to vector<8xf32>
    %96 = vector.shape_cast %95 : vector<8xf32> to vector<8x1xf32>
    %97 = tpu.reciprocal %96 {approx = true} : vector<8x1xf32> -> vector<8x1xf32>
    %98 = vector.broadcast %97 : vector<8x1xf32> to vector<8x8xf32>
    %99 = arith.mulf %94, %98 : vector<8x8xf32>
    %100 = arith.truncf %99 : vector<8x8xf32> to vector<8x8xbf16>
    %cst_38 = arith.constant dense<0.000000e+00> : vector<8x8xf32>
    %101 = tpu.matmul %100, %88, %cst_38 {dimension_numbers = #tpu.dot_dimension_numbers<[1], [0], [0], [1], [0, 0, 1, 1], [], []>} : vector<8x8xbf16>, vector<8x8xbf16>, vector<8x8xf32> -> vector<8x8xf32>
    %c0_39 = arith.constant 0 : index
    %c24 = arith.constant 24 : index
    %102 = vector.load %arg20[%c0_39, %c24] : memref<8x32xf32, #tpu.memory_space<vmem>>, vector<8x8xf32>
    tpu.vector_store %arg20[%c0_39, %c24], %101 {strides = array<i32>} : memref<8x32xf32, #tpu.memory_space<vmem>>, vector<8x8xf32>,
    %c0_40 = arith.constant 0 : index
    %c0_41 = arith.constant 0 : index
    %103 = vector.load %arg20[%c0_40, %c0_41] : memref<8x32xf32, #tpu.memory_space<vmem>>, vector<8x32xf32>
    %104 = arith.truncf %103 : vector<8x32xf32> to vector<8x32xbf16>
    %c0_42 = arith.constant 0 : index
    %c0_43 = arith.constant 0 : index
    %105 = vector.load %arg9[%c0_42, %c0_43] : memref<32x32xbf16, #tpu.memory_space<vmem>>, vector<32x32xbf16>
    %cst_44 = arith.constant dense<0.000000e+00> : vector<8x32xf32>
    %106 = tpu.matmul %104, %105, %cst_44 {dimension_numbers = #tpu.dot_dimension_numbers<[1], [0], [0], [1], [0, 0, 1, 1], [], []>} : vector<8x32xbf16>, vector<32x32xbf16>, vector<8x32xf32> -> vector<8x32xf32>
    %c0_45 = arith.constant 0 : index
    %c0_46 = arith.constant 0 : index
    %107 = vector.load %arg10[%c0_45, %c0_46] : memref<1x32xf32, #tpu.memory_space<vmem>>, vector<1x32xf32>
    %108 = vector.broadcast %107 : vector<1x32xf32> to vector<8x32xf32>
    %109 = arith.addf %106, %108 : vector<8x32xf32>
    %110 = arith.addf %1, %109 : vector<8x32xf32>
    %c0_47 = arith.constant 0 : index
    %c0_48 = arith.constant 0 : index
    %111 = vector.load %arg11[%c0_47, %c0_48] : memref<1x32xf32, #tpu.memory_space<vmem>>, vector<1x32xf32>
    %c0_49 = arith.constant 0 : index
    %c0_50 = arith.constant 0 : index
    %112 = vector.load %arg12[%c0_49, %c0_50] : memref<1x32xf32, #tpu.memory_space<vmem>>, vector<1x32xf32>
    %cst_51 = arith.constant dense<0.000000e+00> : vector<8xf32>
    %113 = vector.multi_reduction <add>, %110, %cst_51 [1] : vector<8x32xf32> to vector<8xf32>
    %114 = vector.shape_cast %113 : vector<8xf32> to vector<8x1xf32>
    %cst_52 = arith.constant 3.200000e+01 : f32
    %115 = vector.broadcast %cst_52 : f32 to vector<8x1xf32>
    %116 = arith.divf %114, %115 : vector<8x1xf32>
    %117 = vector.broadcast %116 : vector<8x1xf32> to vector<8x32xf32>
    %118 = arith.subf %110, %117 : vector<8x32xf32>
    %119 = arith.mulf %118, %118 : vector<8x32xf32>
    %cst_53 = arith.constant dense<0.000000e+00> : vector<8xf32>
    %120 = vector.multi_reduction <add>, %119, %cst_53 [1] : vector<8x32xf32> to vector<8xf32>
    %121 = vector.shape_cast %120 : vector<8xf32> to vector<8x1xf32>
    %cst_54 = arith.constant 3.200000e+01 : f32
    %122 = vector.broadcast %cst_54 : f32 to vector<8x1xf32>
    %123 = arith.divf %121, %122 : vector<8x1xf32>
    %cst_55 = arith.constant 9.99999974E-6 : f32
    %124 = vector.broadcast %cst_55 : f32 to vector<8x1xf32>
    %125 = arith.addf %123, %124 : vector<8x1xf32>
    %126 = math.rsqrt %125 : vector<8x1xf32>
    %127 = vector.broadcast %126 : vector<8x1xf32> to vector<8x32xf32>
    %128 = arith.mulf %118, %127 : vector<8x32xf32>
    %129 = vector.broadcast %111 : vector<1x32xf32> to vector<8x32xf32>
    %130 = arith.mulf %128, %129 : vector<8x32xf32>
    %131 = vector.broadcast %112 : vector<1x32xf32> to vector<8x32xf32>
    %132 = arith.addf %130, %131 : vector<8x32xf32>
    %133 = arith.truncf %132 : vector<8x32xf32> to vector<8x32xbf16>
    %cst_56 = arith.constant 0.000000e+00 : f32
    %134 = vector.broadcast %cst_56 : f32 to vector<8x32xf32>
    %c0_57 = arith.constant 0 : index
    %c0_58 = arith.constant 0 : index
    %135 = vector.load %arg13[%c0_57, %c0_58] : memref<32x128xbf16, #tpu.memory_space<vmem>>, vector<32x128xbf16>
    %cst_59 = arith.constant dense<0.000000e+00> : vector<8x128xf32>
    %136 = tpu.matmul %133, %135, %cst_59 {dimension_numbers = #tpu.dot_dimension_numbers<[1], [0], [0], [1], [0, 0, 1, 1], [], []>} : vector<8x32xbf16>, vector<32x128xbf16>, vector<8x128xf32> -> vector<8x128xf32>
    %c0_60 = arith.constant 0 : index
    %c0_61 = arith.constant 0 : index
    %137 = vector.load %arg14[%c0_60, %c0_61] : memref<1x128xf32, #tpu.memory_space<vmem>>, vector<1x128xf32>
    %138 = vector.broadcast %137 : vector<1x128xf32> to vector<8x128xf32>
    %139 = arith.addf %136, %138 : vector<8x128xf32>
    %cst_62 = arith.constant 5.000000e-01 : f32
    %140 = vector.broadcast %cst_62 : f32 to vector<8x128xf32>
    %141 = arith.mulf %140, %139 : vector<8x128xf32>
    %cst_63 = arith.constant 0.707106769 : f32
    %142 = vector.broadcast %cst_63 : f32 to vector<8x128xf32>
    %143 = arith.mulf %139, %142 : vector<8x128xf32>
    %144 = math.erf %143 : vector<8x128xf32>
    %cst_64 = arith.constant 1.000000e+00 : f32
    %145 = vector.broadcast %cst_64 : f32 to vector<8x128xf32>
    %146 = arith.addf %145, %144 : vector<8x128xf32>
    %147 = arith.mulf %141, %146 : vector<8x128xf32>
    %148 = arith.truncf %147 : vector<8x128xf32> to vector<8x128xbf16>
    %c0_65 = arith.constant 0 : index
    %c0_66 = arith.constant 0 : index
    %149 = vector.load %arg15[%c0_65, %c0_66] : memref<128x32xbf16, #tpu.memory_space<vmem>>, vector<128x32xbf16>
    %cst_67 = arith.constant dense<0.000000e+00> : vector<8x32xf32>
    %150 = tpu.matmul %148, %149, %cst_67 {dimension_numbers = #tpu.dot_dimension_numbers<[1], [0], [0], [1], [0, 0, 1, 1], [], []>} : vector<8x128xbf16>, vector<128x32xbf16>, vector<8x32xf32> -> vector<8x32xf32>
    %151 = arith.addf %134, %150 : vector<8x32xf32>
    %c0_68 = arith.constant 0 : index
    %c0_69 = arith.constant 0 : index
    %152 = vector.load %arg16[%c0_68, %c0_69] : memref<1x32xf32, #tpu.memory_space<vmem>>, vector<1x32xf32>
    %153 = vector.broadcast %152 : vector<1x32xf32> to vector<8x32xf32>
    %154 = arith.addf %151, %153 : vector<8x32xf32>
    %155 = arith.addf %110, %154 : vector<8x32xf32>
    %c0_70 = arith.constant 0 : index
    %c0_71 = arith.constant 0 : index
    %c0_72 = arith.constant 0 : index
    %156 = vector.load %arg17[%c0_70, %c0_71, %c0_72] : memref<1x8x32xf32, #tpu.memory_space<vmem>>, vector<1x8x32xf32>
    %157 = vector.shape_cast %156 : vector<1x8x32xf32> to vector<8x32xf32>
    %158 = vector.shape_cast %155 : vector<8x32xf32> to vector<1x8x32xf32>
    tpu.vector_store %arg17[%c0_70, %c0_71, %c0_72], %158 {strides = array<i32>} : memref<1x8x32xf32, #tpu.memory_space<vmem>>, vector<1x8x32xf32>,
    return
  }
  func.func @transform_0(%arg0: i32, %arg1: i32) -> (i32, i32, i32) {
    %c0_i32 = arith.constant 0 : i32
    %c0_i32_0 = arith.constant 0 : i32
    return %arg0, %arg1, %c0_i32 : i32, i32, i32
  }
  func.func @transform_1(%arg0: i32, %arg1: i32) -> (i32, i32, i32) {
    %c0_i32 = arith.constant 0 : i32
    %c0_i32_0 = arith.constant 0 : i32
    %c0_i32_1 = arith.constant 0 : i32
    return %arg0, %c0_i32, %c0_i32_0 : i32, i32, i32
  }
  func.func @transform_2(%arg0: i32, %arg1: i32) -> (i32, i32) {
    %c0_i32 = arith.constant 0 : i32
    %c0_i32_0 = arith.constant 0 : i32
    %c0_i32_1 = arith.constant 0 : i32
    return %c0_i32, %c0_i32_0 : i32, i32
  }
  func.func @transform_3(%arg0: i32, %arg1: i32) -> (i32, i32) {
    %c0_i32 = arith.constant 0 : i32
    %c0_i32_0 = arith.constant 0 : i32
    %c0_i32_1 = arith.constant 0 : i32
    return %c0_i32, %c0_i32_0 : i32, i32
  }
  func.func @transform_4(%arg0: i32, %arg1: i32) -> (i32, i32) {
    %c0_i32 = arith.constant 0 : i32
    %c0_i32_0 = arith.constant 0 : i32
    %c0_i32_1 = arith.constant 0 : i32
    return %c0_i32, %c0_i32_0 : i32, i32
  }
  func.func @transform_5(%arg0: i32, %arg1: i32) -> (i32, i32) {
    %c0_i32 = arith.constant 0 : i32
    %c0_i32_0 = arith.constant 0 : i32
    %c0_i32_1 = arith.constant 0 : i32
    return %c0_i32, %c0_i32_0 : i32, i32
  }
  func.func @transform_6(%arg0: i32, %arg1: i32) -> (i32, i32) {
    %c0_i32 = arith.constant 0 : i32
    %c0_i32_0 = arith.constant 0 : i32
    %c0_i32_1 = arith.constant 0 : i32
    return %c0_i32, %c0_i32_0 : i32, i32
  }
  func.func @transform_7(%arg0: i32, %arg1: i32) -> (i32, i32) {
    %c0_i32 = arith.constant 0 : i32
    %c0_i32_0 = arith.constant 0 : i32
    %c0_i32_1 = arith.constant 0 : i32
    return %c0_i32, %c0_i32_0 : i32, i32
  }
  func.func @transform_8(%arg0: i32, %arg1: i32) -> (i32, i32) {
    %c0_i32 = arith.constant 0 : i32
    %c0_i32_0 = arith.constant 0 : i32
    %c0_i32_1 = arith.constant 0 : i32
    return %c0_i32, %c0_i32_0 : i32, i32
  }
  func.func @transform_9(%arg0: i32, %arg1: i32) -> (i32, i32) {
    %c0_i32 = arith.constant 0 : i32
    %c0_i32_0 = arith.constant 0 : i32
    %c0_i32_1 = arith.constant 0 : i32
    return %c0_i32, %c0_i32_0 : i32, i32
  }
  func.func @transform_10(%arg0: i32, %arg1: i32) -> (i32, i32) {
    %c0_i32 = arith.constant 0 : i32
    %c0_i32_0 = arith.constant 0 : i32
    %c0_i32_1 = arith.constant 0 : i32
    return %c0_i32, %c0_i32_0 : i32, i32
  }
  func.func @transform_11(%arg0: i32, %arg1: i32) -> (i32, i32) {
    %c0_i32 = arith.constant 0 : i32
    %c0_i32_0 = arith.constant 0 : i32
    %c0_i32_1 = arith.constant 0 : i32
    return %c0_i32, %c0_i32_0 : i32, i32
  }
  func.func @transform_12(%arg0: i32, %arg1: i32) -> (i32, i32) {
    %c0_i32 = arith.constant 0 : i32
    %c0_i32_0 = arith.constant 0 : i32
    %c0_i32_1 = arith.constant 0 : i32
    return %c0_i32, %c0_i32_0 : i32, i32
  }
  func.func @transform_13(%arg0: i32, %arg1: i32) -> (i32, i32) {
    %c0_i32 = arith.constant 0 : i32
    %c0_i32_0 = arith.constant 0 : i32
    %c0_i32_1 = arith.constant 0 : i32
    return %c0_i32, %c0_i32_0 : i32, i32
  }
  func.func @transform_14(%arg0: i32, %arg1: i32) -> (i32, i32) {
    %c0_i32 = arith.constant 0 : i32
    %c0_i32_0 = arith.constant 0 : i32
    %c0_i32_1 = arith.constant 0 : i32
    return %c0_i32, %c0_i32_0 : i32, i32
  }
  func.func @transform_15(%arg0: i32, %arg1: i32) -> (i32, i32, i32) {
    %c0_i32 = arith.constant 0 : i32
    %c0_i32_0 = arith.constant 0 : i32
    return %arg0, %arg1, %c0_i32 : i32, i32, i32
  }
}

module attributes {stable_mosaic.version = 11 : i64} {
  func.func @transformer_block_kernel(%arg0: i32, %arg1: i32, %arg2: memref<1x8x32xf32, #tpu.memory_space<vmem>>, %arg3: memref<1x8x32xbf16, #tpu.memory_space<vmem>>, %arg4: memref<1x32xf32, #tpu.memory_space<vmem>>, %arg5: memref<1x32xf32, #tpu.memory_space<vmem>>, %arg6: memref<32x32xbf16, #tpu.memory_space<vmem>>, %arg7: memref<32x32xbf16, #tpu.memory_space<vmem>>, %arg8: memref<32x32xbf16, #tpu.memory_space<vmem>>, %arg9: memref<32x32xbf16, #tpu.memory_space<vmem>>, %arg10: memref<1x32xf32, #tpu.memory_space<vmem>>, %arg11: memref<1x32xf32, #tpu.memory_space<vmem>>, %arg12: memref<1x32xf32, #tpu.memory_space<vmem>>, %arg13: memref<32x128xbf16, #tpu.memory_space<vmem>>, %arg14: memref<1x128xf32, #tpu.memory_space<vmem>>, %arg15: memref<128x32xbf16, #tpu.memory_space<vmem>>, %arg16: memref<1x32xf32, #tpu.memory_space<vmem>>, %arg17: memref<1x8x32xf32, #tpu.memory_space<vmem>>, %arg18: memref<8x32xbf16, #tpu.memory_space<vmem>>, %arg19: memref<8x32xbf16, #tpu.memory_space<vmem>>, %arg20: memref<8x32xf32, #tpu.memory_space<vmem>>) attributes {dimension_semantics = [#tpu.dimension_semantics<parallel>, #tpu.dimension_semantics<arbitrary>], iteration_bounds = array<i64: 2, 1>, scalar_prefetch = 0 : i64, scratch_operands = 3 : i64, tpu.core_type = #tpu.core_type<tc>, window_params = [{transform_indices = @transform_0, window_bounds = array<i64: 1, 8, 32>}, {transform_indices = @transform_1, window_bounds = array<i64: 1, 8, 32>}, {pipeline_mode = #tpu.pipeline_mode<synchronous>, transform_indices = @transform_2, window_bounds = array<i64: 1, 32>}, {pipeline_mode = #tpu.pipeline_mode<synchronous>, transform_indices = @transform_3, window_bounds = array<i64: 1, 32>}, {pipeline_mode = #tpu.pipeline_mode<synchronous>, transform_indices = @transform_4, window_bounds = array<i64: 32, 32>}, {pipeline_mode = #tpu.pipeline_mode<synchronous>, transform_indices = @transform_5, window_bounds = array<i64: 32, 32>}, {pipeline_mode = #tpu.pipeline_mode<synchronous>, transform_indices = @transform_6, window_bounds = array<i64: 32, 32>}, {pipeline_mode = #tpu.pipeline_mode<synchronous>, transform_indices = @transform_7, window_bounds = array<i64: 32, 32>}, {pipeline_mode = #tpu.pipeline_mode<synchronous>, transform_indices = @transform_8, window_bounds = array<i64: 1, 32>}, {pipeline_mode = #tpu.pipeline_mode<synchronous>, transform_indices = @transform_9, window_bounds = array<i64: 1, 32>}, {pipeline_mode = #tpu.pipeline_mode<synchronous>, transform_indices = @transform_10, window_bounds = array<i64: 1, 32>}, {pipeline_mode = #tpu.pipeline_mode<synchronous>, transform_indices = @transform_11, window_bounds = array<i64: 32, 128>}, {pipeline_mode = #tpu.pipeline_mode<synchronous>, transform_indices = @transform_12, window_bounds = array<i64: 1, 128>}, {pipeline_mode = #tpu.pipeline_mode<synchronous>, transform_indices = @transform_13, window_bounds = array<i64: 128, 32>}, {pipeline_mode = #tpu.pipeline_mode<synchronous>, transform_indices = @transform_14, window_bounds = array<i64: 1, 32>}, {transform_indices = @transform_15, window_bounds = array<i64: 1, 8, 32>}]} {
    %c0 = arith.constant 0 : index
    %c0_0 = arith.constant 0 : index
    %c0_1 = arith.constant 0 : index
    %0 = vector.load %arg2[%c0, %c0_0, %c0_1] : memref<1x8x32xf32, #tpu.memory_space<vmem>>, vector<1x8x32xf32>
    %1 = vector.shape_cast %0 : vector<1x8x32xf32> to vector<8x32xf32>
    %c0_2 = arith.constant 0 : index
    %c0_3 = arith.constant 0 : index
    %2 = vector.load %arg4[%c0_2, %c0_3] : memref<1x32xf32, #tpu.memory_space<vmem>>, vector<1x32xf32>
    %c0_4 = arith.constant 0 : index
    %c0_5 = arith.constant 0 : index
    %3 = vector.load %arg5[%c0_4, %c0_5] : memref<1x32xf32, #tpu.memory_space<vmem>>, vector<1x32xf32>
    %c0_i32 = arith.constant 0 : i32
    %4 = arith.cmpi eq, %arg1, %c0_i32 : i32
    %5 = arith.extui %4 : i1 to i32
    %c0_i32_6 = arith.constant 0 : i32
    %6 = arith.cmpi ne, %5, %c0_i32_6 : i32
    scf.if %6 {
      %c0_73 = arith.constant 0 : index
      %c0_74 = arith.constant 0 : index
      %c0_75 = arith.constant 0 : index
      %159 = vector.load %arg3[%c0_73, %c0_74, %c0_75] : memref<1x8x32xbf16, #tpu.memory_space<vmem>>, vector<1x8x32xbf16>
      %160 = vector.shape_cast %159 : vector<1x8x32xbf16> to vector<8x32xbf16>
      %161 = arith.extf %160 : vector<8x32xbf16> to vector<8x32xf32>
      %cst_76 = arith.constant dense<0.000000e+00> : vector<8xf32>
      %162 = vector.multi_reduction <add>, %161, %cst_76 [1] : vector<8x32xf32> to vector<8xf32>
      %163 = vector.shape_cast %162 : vector<8xf32> to vector<8x1xf32>
      %cst_77 = arith.constant 3.200000e+01 : f32
      %164 = vector.broadcast %cst_77 : f32 to vector<8x1xf32>
      %165 = arith.divf %163, %164 : vector<8x1xf32>
      %166 = vector.broadcast %165 : vector<8x1xf32> to vector<8x32xf32>
      %167 = arith.subf %161, %166 : vector<8x32xf32>
      %168 = arith.mulf %167, %167 : vector<8x32xf32>
      %cst_78 = arith.constant dense<0.000000e+00> : vector<8xf32>
      %169 = vector.multi_reduction <add>, %168, %cst_78 [1] : vector<8x32xf32> to vector<8xf32>
      %170 = vector.shape_cast %169 : vector<8xf32> to vector<8x1xf32>
      %cst_79 = arith.constant 3.200000e+01 : f32
      %171 = vector.broadcast %cst_79 : f32 to vector<8x1xf32>
      %172 = arith.divf %170, %171 : vector<8x1xf32>
      %cst_80 = arith.constant 9.99999974E-6 : f32
      %173 = vector.broadcast %cst_80 : f32 to vector<8x1xf32>
      %174 = arith.addf %172, %173 : vector<8x1xf32>
      %175 = math.rsqrt %174 : vector<8x1xf32>
      %176 = vector.broadcast %175 : vector<8x1xf32> to vector<8x32xf32>
      %177 = arith.mulf %167, %176 : vector<8x32xf32>
      %178 = vector.broadcast %2 : vector<1x32xf32> to vector<8x32xf32>
      %179 = arith.mulf %177, %178 : vector<8x32xf32>
      %180 = vector.broadcast %3 : vector<1x32xf32> to vector<8x32xf32>
      %181 = arith.addf %179, %180 : vector<8x32xf32>
      %182 = arith.truncf %181 : vector<8x32xf32> to vector<8x32xbf16>
      %c0_81 = arith.constant 0 : index
      %c0_82 = arith.constant 0 : index
      %183 = vector.load %arg7[%c0_81, %c0_82] : memref<32x32xbf16, #tpu.memory_space<vmem>>, vector<32x32xbf16>
      %cst_83 = arith.constant dense<0.000000e+00> : vector<8x32xf32>
      %184 = tpu.matmul %182, %183, %cst_83 {dimension_numbers = #tpu.dot_dimension_numbers<[1], [0], [0], [1], [0, 0, 1, 1], [], []>} : vector<8x32xbf16>, vector<32x32xbf16>, vector<8x32xf32> -> vector<8x32xf32>
      %185 = arith.truncf %184 : vector<8x32xf32> to vector<8x32xbf16>
      %c0_84 = arith.constant 0 : index
      %c0_85 = arith.constant 0 : index
      %186 = vector.load %arg18[%c0_84, %c0_85] : memref<8x32xbf16, #tpu.memory_space<vmem>>, vector<8x32xbf16>
      tpu.vector_store %arg18[%c0_84, %c0_85], %185 {strides = array<i32>} : memref<8x32xbf16, #tpu.memory_space<vmem>>, vector<8x32xbf16>,
      %c0_86 = arith.constant 0 : index
      %c0_87 = arith.constant 0 : index
      %187 = vector.load %arg8[%c0_86, %c0_87] : memref<32x32xbf16, #tpu.memory_space<vmem>>, vector<32x32xbf16>
      %cst_88 = arith.constant dense<0.000000e+00> : vector<8x32xf32>
      %188 = tpu.matmul %182, %187, %cst_88 {dimension_numbers = #tpu.dot_dimension_numbers<[1], [0], [0], [1], [0, 0, 1, 1], [], []>} : vector<8x32xbf16>, vector<32x32xbf16>, vector<8x32xf32> -> vector<8x32xf32>
      %189 = arith.truncf %188 : vector<8x32xf32> to vector<8x32xbf16>
      %c0_89 = arith.constant 0 : index
      %c0_90 = arith.constant 0 : index
      %190 = vector.load %arg19[%c0_89, %c0_90] : memref<8x32xbf16, #tpu.memory_space<vmem>>, vector<8x32xbf16>
      tpu.vector_store %arg19[%c0_89, %c0_90], %189 {strides = array<i32>} : memref<8x32xbf16, #tpu.memory_space<vmem>>, vector<8x32xbf16>,
    } else {
    }
    %cst = arith.constant dense<0.000000e+00> : vector<8xf32>
    %7 = vector.multi_reduction <add>, %1, %cst [1] : vector<8x32xf32> to vector<8xf32>
    %8 = vector.shape_cast %7 : vector<8xf32> to vector<8x1xf32>
    %cst_7 = arith.constant 3.200000e+01 : f32
    %9 = vector.broadcast %cst_7 : f32 to vector<8x1xf32>
    %10 = arith.divf %8, %9 : vector<8x1xf32>
    %11 = vector.broadcast %10 : vector<8x1xf32> to vector<8x32xf32>
    %12 = arith.subf %1, %11 : vector<8x32xf32>
    %13 = arith.mulf %12, %12 : vector<8x32xf32>
    %cst_8 = arith.constant dense<0.000000e+00> : vector<8xf32>
    %14 = vector.multi_reduction <add>, %13, %cst_8 [1] : vector<8x32xf32> to vector<8xf32>
    %15 = vector.shape_cast %14 : vector<8xf32> to vector<8x1xf32>
    %cst_9 = arith.constant 3.200000e+01 : f32
    %16 = vector.broadcast %cst_9 : f32 to vector<8x1xf32>
    %17 = arith.divf %15, %16 : vector<8x1xf32>
    %cst_10 = arith.constant 9.99999974E-6 : f32
    %18 = vector.broadcast %cst_10 : f32 to vector<8x1xf32>
    %19 = arith.addf %17, %18 : vector<8x1xf32>
    %20 = math.rsqrt %19 : vector<8x1xf32>
    %21 = vector.broadcast %20 : vector<8x1xf32> to vector<8x32xf32>
    %22 = arith.mulf %12, %21 : vector<8x32xf32>
    %23 = vector.broadcast %2 : vector<1x32xf32> to vector<8x32xf32>
    %24 = arith.mulf %22, %23 : vector<8x32xf32>
    %25 = vector.broadcast %3 : vector<1x32xf32> to vector<8x32xf32>
    %26 = arith.addf %24, %25 : vector<8x32xf32>
    %27 = arith.truncf %26 : vector<8x32xf32> to vector<8x32xbf16>
    %c0_11 = arith.constant 0 : index
    %c0_12 = arith.constant 0 : index
    %28 = vector.load %arg6[%c0_11, %c0_12] : memref<32x32xbf16, #tpu.memory_space<vmem>>, vector<32x32xbf16>
    %cst_13 = arith.constant dense<0.000000e+00> : vector<8x32xf32>
    %29 = tpu.matmul %27, %28, %cst_13 {dimension_numbers = #tpu.dot_dimension_numbers<[1], [0], [0], [1], [0, 0, 1, 1], [], []>} : vector<8x32xbf16>, vector<32x32xbf16>, vector<8x32xf32> -> vector<8x32xf32>
    %cst_14 = arith.constant 0.176776692 : f32
    %30 = vector.broadcast %cst_14 : f32 to vector<8x32xf32>
    %31 = arith.mulf %29, %30 : vector<8x32xf32>
    %32 = arith.truncf %31 : vector<8x32xf32> to vector<8x32xbf16>
    %c0_15 = arith.constant 0 : index
    %c0_16 = arith.constant 0 : index
    %33 = vector.load %arg18[%c0_15, %c0_16] : memref<8x32xbf16, #tpu.memory_space<vmem>>, vector<8x32xbf16>
    %c0_17 = arith.constant 0 : index
    %c0_18 = arith.constant 0 : index
    %34 = vector.load %arg19[%c0_17, %c0_18] : memref<8x32xbf16, #tpu.memory_space<vmem>>, vector<8x32xbf16>
    %35 = vector.extract_strided_slice %32 {offsets = [0, 0], sizes = [8, 8], strides = [1, 1]} : vector<8x32xbf16> to vector<8x8xbf16>
    %36 = vector.extract_strided_slice %33 {offsets = [0, 0], sizes = [8, 8], strides = [1, 1]} : vector<8x32xbf16> to vector<8x8xbf16>
    %37 = vector.extract_strided_slice %34 {offsets = [0, 0], sizes = [8, 8], strides = [1, 1]} : vector<8x32xbf16> to vector<8x8xbf16>
    %cst_19 = arith.constant dense<0.000000e+00> : vector<8x8xf32>
    %38 = tpu.matmul %35, %36, %cst_19 {dimension_numbers = #tpu.dot_dimension_numbers<[1], [1], [0], [0], [0, 0, 1, 0], [], []>} : vector<8x8xbf16>, vector<8x8xbf16>, vector<8x8xf32> -> vector<8x8xf32>
    %cst_20 = arith.constant dense<0xFF800000> : vector<8xf32>
    %39 = vector.multi_reduction <maximumf>, %38, %cst_20 [1] : vector<8x8xf32> to vector<8xf32>
    %40 = vector.shape_cast %39 : vector<8xf32> to vector<8x1xf32>
    %41 = vector.broadcast %40 : vector<8x1xf32> to vector<8x8xf32>
    %42 = arith.subf %38, %41 : vector<8x8xf32>
    %43 = math.exp %42 : vector<8x8xf32>
    %cst_21 = arith.constant dense<0.000000e+00> : vector<8xf32>
    %44 = vector.multi_reduction <add>, %43, %cst_21 [1] : vector<8x8xf32> to vector<8xf32>
    %45 = vector.shape_cast %44 : vector<8xf32> to vector<8x1xf32>
    %46 = tpu.reciprocal %45 {approx = true} : vector<8x1xf32> -> vector<8x1xf32>
    %47 = vector.broadcast %46 : vector<8x1xf32> to vector<8x8xf32>
    %48 = arith.mulf %43, %47 : vector<8x8xf32>
    %49 = arith.truncf %48 : vector<8x8xf32> to vector<8x8xbf16>
    %cst_22 = arith.constant dense<0.000000e+00> : vector<8x8xf32>
    %50 = tpu.matmul %49, %37, %cst_22 {dimension_numbers = #tpu.dot_dimension_numbers<[1], [0], [0], [1], [0, 0, 1, 1], [], []>} : vector<8x8xbf16>, vector<8x8xbf16>, vector<8x8xf32> -> vector<8x8xf32>
    %c0_23 = arith.constant 0 : index
    %c0_24 = arith.constant 0 : index
    %51 = vector.load %arg20[%c0_23, %c0_24] : memref<8x32xf32, #tpu.memory_space<vmem>>, vector<8x8xf32>
    tpu.vector_store %arg20[%c0_23, %c0_24], %50 {strides = array<i32>} : memref<8x32xf32, #tpu.memory_space<vmem>>, vector<8x8xf32>,
    %52 = vector.extract_strided_slice %32 {offsets = [0, 8], sizes = [8, 8], strides = [1, 1]} : vector<8x32xbf16> to vector<8x8xbf16>
    %53 = vector.extract_strided_slice %33 {offsets = [0, 8], sizes = [8, 8], strides = [1, 1]} : vector<8x32xbf16> to vector<8x8xbf16>
    %54 = vector.extract_strided_slice %34 {offsets = [0, 8], sizes = [8, 8], strides = [1, 1]} : vector<8x32xbf16> to vector<8x8xbf16>
    %cst_25 = arith.constant dense<0.000000e+00> : vector<8x8xf32>
    %55 = tpu.matmul %52, %53, %cst_25 {dimension_numbers = #tpu.dot_dimension_numbers<[1], [1], [0], [0], [0, 0, 1, 0], [], []>} : vector<8x8xbf16>, vector<8x8xbf16>, vector<8x8xf32> -> vector<8x8xf32>
    %cst_26 = arith.constant dense<0xFF800000> : vector<8xf32>
    %56 = vector.multi_reduction <maximumf>, %55, %cst_26 [1] : vector<8x8xf32> to vector<8xf32>
    %57 = vector.shape_cast %56 : vector<8xf32> to vector<8x1xf32>
    %58 = vector.broadcast %57 : vector<8x1xf32> to vector<8x8xf32>
    %59 = arith.subf %55, %58 : vector<8x8xf32>
    %60 = math.exp %59 : vector<8x8xf32>
    %cst_27 = arith.constant dense<0.000000e+00> : vector<8xf32>
    %61 = vector.multi_reduction <add>, %60, %cst_27 [1] : vector<8x8xf32> to vector<8xf32>
    %62 = vector.shape_cast %61 : vector<8xf32> to vector<8x1xf32>
    %63 = tpu.reciprocal %62 {approx = true} : vector<8x1xf32> -> vector<8x1xf32>
    %64 = vector.broadcast %63 : vector<8x1xf32> to vector<8x8xf32>
    %65 = arith.mulf %60, %64 : vector<8x8xf32>
    %66 = arith.truncf %65 : vector<8x8xf32> to vector<8x8xbf16>
    %cst_28 = arith.constant dense<0.000000e+00> : vector<8x8xf32>
    %67 = tpu.matmul %66, %54, %cst_28 {dimension_numbers = #tpu.dot_dimension_numbers<[1], [0], [0], [1], [0, 0, 1, 1], [], []>} : vector<8x8xbf16>, vector<8x8xbf16>, vector<8x8xf32> -> vector<8x8xf32>
    %c0_29 = arith.constant 0 : index
    %c8 = arith.constant 8 : index
    %68 = vector.load %arg20[%c0_29, %c8] : memref<8x32xf32, #tpu.memory_space<vmem>>, vector<8x8xf32>
    tpu.vector_store %arg20[%c0_29, %c8], %67 {strides = array<i32>} : memref<8x32xf32, #tpu.memory_space<vmem>>, vector<8x8xf32>,
    %69 = vector.extract_strided_slice %32 {offsets = [0, 16], sizes = [8, 8], strides = [1, 1]} : vector<8x32xbf16> to vector<8x8xbf16>
    %70 = vector.extract_strided_slice %33 {offsets = [0, 16], sizes = [8, 8], strides = [1, 1]} : vector<8x32xbf16> to vector<8x8xbf16>
    %71 = vector.extract_strided_slice %34 {offsets = [0, 16], sizes = [8, 8], strides = [1, 1]} : vector<8x32xbf16> to vector<8x8xbf16>
    %cst_30 = arith.constant dense<0.000000e+00> : vector<8x8xf32>
    %72 = tpu.matmul %69, %70, %cst_30 {dimension_numbers = #tpu.dot_dimension_numbers<[1], [1], [0], [0], [0, 0, 1, 0], [], []>} : vector<8x8xbf16>, vector<8x8xbf16>, vector<8x8xf32> -> vector<8x8xf32>
    %cst_31 = arith.constant dense<0xFF800000> : vector<8xf32>
    %73 = vector.multi_reduction <maximumf>, %72, %cst_31 [1] : vector<8x8xf32> to vector<8xf32>
    %74 = vector.shape_cast %73 : vector<8xf32> to vector<8x1xf32>
    %75 = vector.broadcast %74 : vector<8x1xf32> to vector<8x8xf32>
    %76 = arith.subf %72, %75 : vector<8x8xf32>
    %77 = math.exp %76 : vector<8x8xf32>
    %cst_32 = arith.constant dense<0.000000e+00> : vector<8xf32>
    %78 = vector.multi_reduction <add>, %77, %cst_32 [1] : vector<8x8xf32> to vector<8xf32>
    %79 = vector.shape_cast %78 : vector<8xf32> to vector<8x1xf32>
    %80 = tpu.reciprocal %79 {approx = true} : vector<8x1xf32> -> vector<8x1xf32>
    %81 = vector.broadcast %80 : vector<8x1xf32> to vector<8x8xf32>
    %82 = arith.mulf %77, %81 : vector<8x8xf32>
    %83 = arith.truncf %82 : vector<8x8xf32> to vector<8x8xbf16>
    %cst_33 = arith.constant dense<0.000000e+00> : vector<8x8xf32>
    %84 = tpu.matmul %83, %71, %cst_33 {dimension_numbers = #tpu.dot_dimension_numbers<[1], [0], [0], [1], [0, 0, 1, 1], [], []>} : vector<8x8xbf16>, vector<8x8xbf16>, vector<8x8xf32> -> vector<8x8xf32>
    %c0_34 = arith.constant 0 : index
    %c16 = arith.constant 16 : index
    %85 = vector.load %arg20[%c0_34, %c16] : memref<8x32xf32, #tpu.memory_space<vmem>>, vector<8x8xf32>
    tpu.vector_store %arg20[%c0_34, %c16], %84 {strides = array<i32>} : memref<8x32xf32, #tpu.memory_space<vmem>>, vector<8x8xf32>,
    %86 = vector.extract_strided_slice %32 {offsets = [0, 24], sizes = [8, 8], strides = [1, 1]} : vector<8x32xbf16> to vector<8x8xbf16>
    %87 = vector.extract_strided_slice %33 {offsets = [0, 24], sizes = [8, 8], strides = [1, 1]} : vector<8x32xbf16> to vector<8x8xbf16>
    %88 = vector.extract_strided_slice %34 {offsets = [0, 24], sizes = [8, 8], strides = [1, 1]} : vector<8x32xbf16> to vector<8x8xbf16>
    %cst_35 = arith.constant dense<0.000000e+00> : vector<8x8xf32>
    %89 = tpu.matmul %86, %87, %cst_35 {dimension_numbers = #tpu.dot_dimension_numbers<[1], [1], [0], [0], [0, 0, 1, 0], [], []>} : vector<8x8xbf16>, vector<8x8xbf16>, vector<8x8xf32> -> vector<8x8xf32>
    %cst_36 = arith.constant dense<0xFF800000> : vector<8xf32>
    %90 = vector.multi_reduction <maximumf>, %89, %cst_36 [1] : vector<8x8xf32> to vector<8xf32>
    %91 = vector.shape_cast %90 : vector<8xf32> to vector<8x1xf32>
    %92 = vector.broadcast %91 : vector<8x1xf32> to vector<8x8xf32>
    %93 = arith.subf %89, %92 : vector<8x8xf32>
    %94 = math.exp %93 : vector<8x8xf32>
    %cst_37 = arith.constant dense<0.000000e+00> : vector<8xf32>
    %95 = vector.multi_reduction <add>, %94, %cst_37 [1] : vector<8x8xf32> to vector<8xf32>
    %96 = vector.shape_cast %95 : vector<8xf32> to vector<8x1xf32>
    %97 = tpu.reciprocal %96 {approx = true} : vector<8x1xf32> -> vector<8x1xf32>
    %98 = vector.broadcast %97 : vector<8x1xf32> to vector<8x8xf32>
    %99 = arith.mulf %94, %98 : vector<8x8xf32>
    %100 = arith.truncf %99 : vector<8x8xf32> to vector<8x8xbf16>
    %cst_38 = arith.constant dense<0.000000e+00> : vector<8x8xf32>
    %101 = tpu.matmul %100, %88, %cst_38 {dimension_numbers = #tpu.dot_dimension_numbers<[1], [0], [0], [1], [0, 0, 1, 1], [], []>} : vector<8x8xbf16>, vector<8x8xbf16>, vector<8x8xf32> -> vector<8x8xf32>
    %c0_39 = arith.constant 0 : index
    %c24 = arith.constant 24 : index
    %102 = vector.load %arg20[%c0_39, %c24] : memref<8x32xf32, #tpu.memory_space<vmem>>, vector<8x8xf32>
    tpu.vector_store %arg20[%c0_39, %c24], %101 {strides = array<i32>} : memref<8x32xf32, #tpu.memory_space<vmem>>, vector<8x8xf32>,
    %c0_40 = arith.constant 0 : index
    %c0_41 = arith.constant 0 : index
    %103 = vector.load %arg20[%c0_40, %c0_41] : memref<8x32xf32, #tpu.memory_space<vmem>>, vector<8x32xf32>
    %104 = arith.truncf %103 : vector<8x32xf32> to vector<8x32xbf16>
    %c0_42 = arith.constant 0 : index
    %c0_43 = arith.constant 0 : index
    %105 = vector.load %arg9[%c0_42, %c0_43] : memref<32x32xbf16, #tpu.memory_space<vmem>>, vector<32x32xbf16>
    %cst_44 = arith.constant dense<0.000000e+00> : vector<8x32xf32>
    %106 = tpu.matmul %104, %105, %cst_44 {dimension_numbers = #tpu.dot_dimension_numbers<[1], [0], [0], [1], [0, 0, 1, 1], [], []>} : vector<8x32xbf16>, vector<32x32xbf16>, vector<8x32xf32> -> vector<8x32xf32>
    %c0_45 = arith.constant 0 : index
    %c0_46 = arith.constant 0 : index
    %107 = vector.load %arg10[%c0_45, %c0_46] : memref<1x32xf32, #tpu.memory_space<vmem>>, vector<1x32xf32>
    %108 = vector.broadcast %107 : vector<1x32xf32> to vector<8x32xf32>
    %109 = arith.addf %106, %108 : vector<8x32xf32>
    %110 = arith.addf %1, %109 : vector<8x32xf32>
    %c0_47 = arith.constant 0 : index
    %c0_48 = arith.constant 0 : index
    %111 = vector.load %arg11[%c0_47, %c0_48] : memref<1x32xf32, #tpu.memory_space<vmem>>, vector<1x32xf32>
    %c0_49 = arith.constant 0 : index
    %c0_50 = arith.constant 0 : index
    %112 = vector.load %arg12[%c0_49, %c0_50] : memref<1x32xf32, #tpu.memory_space<vmem>>, vector<1x32xf32>
    %cst_51 = arith.constant dense<0.000000e+00> : vector<8xf32>
    %113 = vector.multi_reduction <add>, %110, %cst_51 [1] : vector<8x32xf32> to vector<8xf32>
    %114 = vector.shape_cast %113 : vector<8xf32> to vector<8x1xf32>
    %cst_52 = arith.constant 3.200000e+01 : f32
    %115 = vector.broadcast %cst_52 : f32 to vector<8x1xf32>
    %116 = arith.divf %114, %115 : vector<8x1xf32>
    %117 = vector.broadcast %116 : vector<8x1xf32> to vector<8x32xf32>
    %118 = arith.subf %110, %117 : vector<8x32xf32>
    %119 = arith.mulf %118, %118 : vector<8x32xf32>
    %cst_53 = arith.constant dense<0.000000e+00> : vector<8xf32>
    %120 = vector.multi_reduction <add>, %119, %cst_53 [1] : vector<8x32xf32> to vector<8xf32>
    %121 = vector.shape_cast %120 : vector<8xf32> to vector<8x1xf32>
    %cst_54 = arith.constant 3.200000e+01 : f32
    %122 = vector.broadcast %cst_54 : f32 to vector<8x1xf32>
    %123 = arith.divf %121, %122 : vector<8x1xf32>
    %cst_55 = arith.constant 9.99999974E-6 : f32
    %124 = vector.broadcast %cst_55 : f32 to vector<8x1xf32>
    %125 = arith.addf %123, %124 : vector<8x1xf32>
    %126 = math.rsqrt %125 : vector<8x1xf32>
    %127 = vector.broadcast %126 : vector<8x1xf32> to vector<8x32xf32>
    %128 = arith.mulf %118, %127 : vector<8x32xf32>
    %129 = vector.broadcast %111 : vector<1x32xf32> to vector<8x32xf32>
    %130 = arith.mulf %128, %129 : vector<8x32xf32>
    %131 = vector.broadcast %112 : vector<1x32xf32> to vector<8x32xf32>
    %132 = arith.addf %130, %131 : vector<8x32xf32>
    %133 = arith.truncf %132 : vector<8x32xf32> to vector<8x32xbf16>
    %cst_56 = arith.constant 0.000000e+00 : f32
    %134 = vector.broadcast %cst_56 : f32 to vector<8x32xf32>
    %c0_57 = arith.constant 0 : index
    %c0_58 = arith.constant 0 : index
    %135 = vector.load %arg13[%c0_57, %c0_58] : memref<32x128xbf16, #tpu.memory_space<vmem>>, vector<32x128xbf16>
    %cst_59 = arith.constant dense<0.000000e+00> : vector<8x128xf32>
    %136 = tpu.matmul %133, %135, %cst_59 {dimension_numbers = #tpu.dot_dimension_numbers<[1], [0], [0], [1], [0, 0, 1, 1], [], []>} : vector<8x32xbf16>, vector<32x128xbf16>, vector<8x128xf32> -> vector<8x128xf32>
    %c0_60 = arith.constant 0 : index
    %c0_61 = arith.constant 0 : index
    %137 = vector.load %arg14[%c0_60, %c0_61] : memref<1x128xf32, #tpu.memory_space<vmem>>, vector<1x128xf32>
    %138 = vector.broadcast %137 : vector<1x128xf32> to vector<8x128xf32>
    %139 = arith.addf %136, %138 : vector<8x128xf32>
    %cst_62 = arith.constant 5.000000e-01 : f32
    %140 = vector.broadcast %cst_62 : f32 to vector<8x128xf32>
    %141 = arith.mulf %140, %139 : vector<8x128xf32>
    %cst_63 = arith.constant 0.707106769 : f32
    %142 = vector.broadcast %cst_63 : f32 to vector<8x128xf32>
    %143 = arith.mulf %139, %142 : vector<8x128xf32>
    %144 = math.erf %143 : vector<8x128xf32>
    %cst_64 = arith.constant 1.000000e+00 : f32
    %145 = vector.broadcast %cst_64 : f32 to vector<8x128xf32>
    %146 = arith.addf %145, %144 : vector<8x128xf32>
    %147 = arith.mulf %141, %146 : vector<8x128xf32>
    %148 = arith.truncf %147 : vector<8x128xf32> to vector<8x128xbf16>
    %c0_65 = arith.constant 0 : index
    %c0_66 = arith.constant 0 : index
    %149 = vector.load %arg15[%c0_65, %c0_66] : memref<128x32xbf16, #tpu.memory_space<vmem>>, vector<128x32xbf16>
    %cst_67 = arith.constant dense<0.000000e+00> : vector<8x32xf32>
    %150 = tpu.matmul %148, %149, %cst_67 {dimension_numbers = #tpu.dot_dimension_numbers<[1], [0], [0], [1], [0, 0, 1, 1], [], []>} : vector<8x128xbf16>, vector<128x32xbf16>, vector<8x32xf32> -> vector<8x32xf32>
    %151 = arith.addf %134, %150 : vector<8x32xf32>
    %c0_68 = arith.constant 0 : index
    %c0_69 = arith.constant 0 : index
    %152 = vector.load %arg16[%c0_68, %c0_69] : memref<1x32xf32, #tpu.memory_space<vmem>>, vector<1x32xf32>
    %153 = vector.broadcast %152 : vector<1x32xf32> to vector<8x32xf32>
    %154 = arith.addf %151, %153 : vector<8x32xf32>
    %155 = arith.addf %110, %154 : vector<8x32xf32>
    %c0_70 = arith.constant 0 : index
    %c0_71 = arith.constant 0 : index
    %c0_72 = arith.constant 0 : index
    %156 = vector.load %arg17[%c0_70, %c0_71, %c0_72] : memref<1x8x32xf32, #tpu.memory_space<vmem>>, vector<1x8x32xf32>
    %157 = vector.shape_cast %156 : vector<1x8x32xf32> to vector<8x32xf32>
    %158 = vector.shape_cast %155 : vector<8x32xf32> to vector<1x8x32xf32>
    tpu.vector_store %arg17[%c0_70, %c0_71, %c0_72], %158 {strides = array<i32>} : memref<1x8x32xf32, #tpu.memory_space<vmem>>, vector<1x8x32xf32>,
    return
  }
  func.func @transform_0(%arg0: i32, %arg1: i32) -> (i32, i32, i32) {
    %c0_i32 = arith.constant 0 : i32
    %c0_i32_0 = arith.constant 0 : i32
    return %arg0, %arg1, %c0_i32 : i32, i32, i32
  }
  func.func @transform_1(%arg0: i32, %arg1: i32) -> (i32, i32, i32) {
    %c0_i32 = arith.constant 0 : i32
    %c0_i32_0 = arith.constant 0 : i32
    %c0_i32_1 = arith.constant 0 : i32
    return %arg0, %c0_i32, %c0_i32_0 : i32, i32, i32
  }
  func.func @transform_2(%arg0: i32, %arg1: i32) -> (i32, i32) {
    %c0_i32 = arith.constant 0 : i32
    %c0_i32_0 = arith.constant 0 : i32
    %c0_i32_1 = arith.constant 0 : i32
    return %c0_i32, %c0_i32_0 : i32, i32
  }
  func.func @transform_3(%arg0: i32, %arg1: i32) -> (i32, i32) {
    %c0_i32 = arith.constant 0 : i32
    %c0_i32_0 = arith.constant 0 : i32
    %c0_i32_1 = arith.constant 0 : i32
    return %c0_i32, %c0_i32_0 : i32, i32
  }
  func.func @transform_4(%arg0: i32, %arg1: i32) -> (i32, i32) {
    %c0_i32 = arith.constant 0 : i32
    %c0_i32_0 = arith.constant 0 : i32
    %c0_i32_1 = arith.constant 0 : i32
    return %c0_i32, %c0_i32_0 : i32, i32
  }
  func.func @transform_5(%arg0: i32, %arg1: i32) -> (i32, i32) {
    %c0_i32 = arith.constant 0 : i32
    %c0_i32_0 = arith.constant 0 : i32
    %c0_i32_1 = arith.constant 0 : i32
    return %c0_i32, %c0_i32_0 : i32, i32
  }
  func.func @transform_6(%arg0: i32, %arg1: i32) -> (i32, i32) {
    %c0_i32 = arith.constant 0 : i32
    %c0_i32_0 = arith.constant 0 : i32
    %c0_i32_1 = arith.constant 0 : i32
    return %c0_i32, %c0_i32_0 : i32, i32
  }
  func.func @transform_7(%arg0: i32, %arg1: i32) -> (i32, i32) {
    %c0_i32 = arith.constant 0 : i32
    %c0_i32_0 = arith.constant 0 : i32
    %c0_i32_1 = arith.constant 0 : i32
    return %c0_i32, %c0_i32_0 : i32, i32
  }
  func.func @transform_8(%arg0: i32, %arg1: i32) -> (i32, i32) {
    %c0_i32 = arith.constant 0 : i32
    %c0_i32_0 = arith.constant 0 : i32
    %c0_i32_1 = arith.constant 0 : i32
    return %c0_i32, %c0_i32_0 : i32, i32
  }
  func.func @transform_9(%arg0: i32, %arg1: i32) -> (i32, i32) {
    %c0_i32 = arith.constant 0 : i32
    %c0_i32_0 = arith.constant 0 : i32
    %c0_i32_1 = arith.constant 0 : i32
    return %c0_i32, %c0_i32_0 : i32, i32
  }
  func.func @transform_10(%arg0: i32, %arg1: i32) -> (i32, i32) {
    %c0_i32 = arith.constant 0 : i32
    %c0_i32_0 = arith.constant 0 : i32
    %c0_i32_1 = arith.constant 0 : i32
    return %c0_i32, %c0_i32_0 : i32, i32
  }
  func.func @transform_11(%arg0: i32, %arg1: i32) -> (i32, i32) {
    %c0_i32 = arith.constant 0 : i32
    %c0_i32_0 = arith.constant 0 : i32
    %c0_i32_1 = arith.constant 0 : i32
    return %c0_i32, %c0_i32_0 : i32, i32
  }
  func.func @transform_12(%arg0: i32, %arg1: i32) -> (i32, i32) {
    %c0_i32 = arith.constant 0 : i32
    %c0_i32_0 = arith.constant 0 : i32
    %c0_i32_1 = arith.constant 0 : i32
    return %c0_i32, %c0_i32_0 : i32, i32
  }
  func.func @transform_13(%arg0: i32, %arg1: i32) -> (i32, i32) {
    %c0_i32 = arith.constant 0 : i32
    %c0_i32_0 = arith.constant 0 : i32
    %c0_i32_1 = arith.constant 0 : i32
    return %c0_i32, %c0_i32_0 : i32, i32
  }
  func.func @transform_14(%arg0: i32, %arg1: i32) -> (i32, i32) {
    %c0_i32 = arith.constant 0 : i32
    %c0_i32_0 = arith.constant 0 : i32
    %c0_i32_1 = arith.constant 0 : i32
    return %c0_i32, %c0_i32_0 : i32, i32
  }
  func.func @transform_15(%arg0: i32, %arg1: i32) -> (i32, i32, i32) {
    %c0_i32 = arith.constant 0 : i32
    %c0_i32_0 = arith.constant 0 : i32
    return %arg0, %arg1, %c0_i32 : i32, i32, i32
  }
}

</mosaic_0001>

<llo_original>
// kernel: tpu_custom_call.1
$region0: #{tpu_custom_call.1}
  #allocation0 [shape = 'u32[]', space=smem, size = 0x4, offset = 0x4, fixed_abs, tag = 'smem constant byte address 0x4 - core index']
  #allocation1 [shape = 'u32[144,128]{1,0:T(1,128)}', space=vmem, size = 0x12000, scoped, tag = 'internal scratch']
  #allocation2 [shape = 'bf16[8,32]{1,0:T(8,128)(2,1)}', space=vmem, size = 0x800, scoped, tag = 'scratch operand']
  #allocation3 [shape = 'bf16[8,32]{1,0:T(8,128)(2,1)}', space=vmem, size = 0x800, scoped, tag = 'scratch operand']
  #allocation4 [shape = 'f32[8,32]{1,0:T(8,128)}', space=vmem, size = 0x1000, scoped, tag = 'scratch operand']
  %s0 = inlined_call_operand.vmem [shape: f32[2,8,32], index: 0, kind: input, shape index: {}]
  %s1 = inlined_call_operand.hbm [shape: bf16[2,8,32], index: 1, kind: input, shape index: {}]
  %s2 = inlined_call_operand.vmem [shape: f32[1,32], index: 2, kind: input, shape index: {}]
  %s3 = inlined_call_operand.vmem [shape: f32[1,32], index: 3, kind: input, shape index: {}]
  %s4 = inlined_call_operand.vmem [shape: bf16[32,32], index: 4, kind: input, shape index: {}]
  %s5 = inlined_call_operand.vmem [shape: bf16[32,32], index: 5, kind: input, shape index: {}]
  %s6 = inlined_call_operand.vmem [shape: bf16[32,32], index: 6, kind: input, shape index: {}]
  %s7 = inlined_call_operand.vmem [shape: bf16[32,32], index: 7, kind: input, shape index: {}]
  %s8 = inlined_call_operand.hbm [shape: f32[1,32], index: 8, kind: input, shape index: {}]
  %s9 = inlined_call_operand.hbm [shape: f32[1,32], index: 9, kind: input, shape index: {}]
  %s10 = inlined_call_operand.vmem [shape: f32[1,32], index: 10, kind: input, shape index: {}]
  %s11 = inlined_call_operand.vmem [shape: bf16[32,128], index: 11, kind: input, shape index: {}]
  %s12 = inlined_call_operand.vmem [shape: f32[1,128], index: 12, kind: input, shape index: {}]
  %s13 = inlined_call_operand.vmem [shape: bf16[128,32], index: 13, kind: input, shape index: {}]
  %s14 = inlined_call_operand.vmem [shape: f32[1,32], index: 14, kind: input, shape index: {}]
  %s15 = inlined_call_operand.hbm [shape: f32[2,8,32], index: 15, kind: output, shape index: {}]
  %s16 = sld [smem:[#allocation0]]
  $region109: #{tpu_custom_call.1} parent=0
    _
  %s18 = ssub.s32 1, %s16
  %s19 = scalar_select 0, %s18, %s16
  $region1: #{tpu_custom_call.1} parent=0
    #allocation5 [shape = 'u8[4096]{0}', space=vmem, size = 0x1000, scoped, tag = 'input window, operand 1']
    #allocation6 [shape = 's32[2]{0}', space=sflag, size = 0x8, scoped, tag = 'scoped memory for tpu_custom_call.1']
    #allocation7 [shape = 's32[2]{0}', space=sflag, size = 0x8, scoped, tag = 'scoped memory for tpu_custom_call.1']
    #allocation8 [shape = 'u8[512]{0}', space=vmem, size = 0x400, scoped, tag = 'input window, operand 8, single buffered']
    #allocation9 [shape = 's32[1]{0}', space=sflag, size = 0x4, scoped, tag = 'scoped memory for tpu_custom_call.1']
    #allocation10 [shape = 'u8[512]{0}', space=vmem, size = 0x400, scoped, tag = 'input window, operand 9, single buffered']
    #allocation11 [shape = 'u8[8192]{0}', space=vmem, size = 0x2000, scoped, tag = 'output window, operand 0']
    %20 = vsyncpa [#allocation6], 0
    %s21 = scalar_lea.sflag [#allocation6], 1
    %22 = vsyncpa %s21, 0
    %23 = vsyncpa [#allocation9], 0
    %24 = vsyncpa [#allocation7], 0
    %s25 = scalar_lea.sflag [#allocation7], 1
    %26 = vsyncpa %s25, 0
    loop: start=0, step=1, limit=4
    $region2: #{tpu_custom_call.1} parent=1 // loop_pre_header
      _
    $region3: #{tpu_custom_call.1} parent=1 // loop_header
      %s28 = sphi 0, %s32
      %p29 = scmp.ge.s32.totalorder %s28, 4
      %s35 = sphi 0, %s47
      %s36 = sphi 0, %s43
      %s37 = sphi 0, %s35
      %s38 = sphi 0, %s36
      %s39 = sphi 0, %s37
      %s40 = sphi 0, %s38
      %s52 = sphi 0, %s54
      %s55 = sphi 0, %s52
      %s56 = sphi 0, %s55
      %s72 = sphi 0, %s56
      %s78 = sphi 0, %s80
      %s81 = sphi 0, %s78
      %s82 = sphi 0, %s81
      %s98 = sphi 0, %s82
      %s102 = sphi 0, %s102
      %s104 = sphi 0, %s102
      %s105 = sphi 0, %s104
      %s119 = sphi 0, %s105
      %s123 = sphi 0, %s123
      %s125 = sphi 0, %s123
      %s126 = sphi 0, %s125
      %s140 = sphi 0, %s126
      %s144 = sphi 0, %s144
      %s146 = sphi 0, %s144
      %s147 = sphi 0, %s146
      %s161 = sphi 0, %s147
      %s165 = sphi 0, %s165
      %s167 = sphi 0, %s165
      %s168 = sphi 0, %s167
      %s182 = sphi 0, %s168
      %s186 = sphi 0, %s186
      %s188 = sphi 0, %s186
      %s189 = sphi 0, %s188
      %s203 = sphi 0, %s189
      %s207 = sphi 0, %s207
      %s209 = sphi 0, %s207
      %s210 = sphi 0, %s209
      %s224 = sphi 0, %s210
      %s228 = sphi 0, %s228
      %s230 = sphi 0, %s228
      %s231 = sphi 0, %s230
      %s245 = sphi 0, %s231
      %s249 = sphi 0, %s249
      %s251 = sphi 0, %s249
      %s252 = sphi 0, %s251
      %s266 = sphi 0, %s252
      %s270 = sphi 0, %s270
      %s272 = sphi 0, %s270
      %s273 = sphi 0, %s272
      %s287 = sphi 0, %s273
      %s291 = sphi 0, %s291
      %s293 = sphi 0, %s291
      %s294 = sphi 0, %s293
      %s308 = sphi 0, %s294
      %s312 = sphi 0, %s312
      %s314 = sphi 0, %s312
      %s315 = sphi 0, %s314
      %s329 = sphi 0, %s315
      %s333 = sphi 0, %s333
      %s335 = sphi 0, %s333
      %s336 = sphi 0, %s335
      %s350 = sphi 0, %s336
      %s354 = sphi 0, %s354
      %s356 = sphi 0, %s354
      %s357 = sphi 0, %s356
      %s371 = sphi 0, %s357
      %s379 = sphi 0, %s381
      %s382 = sphi 0, %s379
      %s383 = sphi 0, %s382
      %s399 = sphi 0, %s383
    $region4: #{tpu_custom_call.1} parent=1 // loop_header_branch
      %31 = sbr.rel (%p29) target = $region8
    $region5: #{tpu_custom_call.1} parent=1 // loop_body
      %s33 = ssub.s32 %s28, 1
      %s34 = ssub.s32 %s28, 2
      %s41 = sadd.s32 1, %s36
      %p42 = scmp.ge.s32.totalorder %s41, 1
      %s43 = scalar_select %p42, 0, %s41
      %s44 = sadd.s32 1, %s35
      %s45 = scalar_select %p42, %s44, %s35
      %p46 = scmp.ge.s32.totalorder %s45, 2
      %s47 = scalar_select %p46, 0, %s45
      %s48 = ssub.s32 %s35, %s47
      %s49 = ssub.s32 %s36, %s43
      %s50 = sor.u32 %s48, %s49
      %p51 = scmp.eq.s32.totalorder %s50, 0
      %s53 = sadd.s32 %s52, 1
      %s54 = scalar_select %p51, %s52, %s53
      %p57 = pneg %p51
      %p58 = scmp.eq.s32.totalorder %s28, 1
      %p59 = por %p57, %p58
      %p60 = scmp.ne.s32.totalorder %s52, %s55
      %p61 = scmp.eq.s32.totalorder %s28, 0
      %p62 = por %p60, %p61
      %p63 = scmp.ne.s32.totalorder %s52, %s55
      %p64 = scmp.eq.s32.totalorder %s33, 1
      %p65 = por %p63, %p64
      %p66 = scmp.ne.s32.totalorder %s55, %s56
      %p67 = scmp.eq.s32.totalorder %s33, 0
      %p68 = por %p66, %p67
      %p69 = scmp.ne.s32.totalorder %s55, %s56
      %p70 = scmp.eq.s32.totalorder %s34, 1
      %p71 = por %p69, %p70
      %p73 = scmp.ne.s32.totalorder %s56, %s72
      %p74 = scmp.eq.s32.totalorder %s34, 0
      %p75 = por %p73, %p74
      %s76 = ssub.s32 %s35, %s47
      %p77 = scmp.eq.s32.totalorder %s76, 0
      %s79 = sadd.s32 %s78, 1
      %s80 = scalar_select %p77, %s78, %s79
      %p83 = pneg %p77
      %p84 = scmp.eq.s32.totalorder %s28, 1
      %p85 = por %p83, %p84
      %p86 = scmp.ne.s32.totalorder %s78, %s81
      %p87 = scmp.eq.s32.totalorder %s28, 0
      %p88 = por %p86, %p87
      %p89 = scmp.ne.s32.totalorder %s78, %s81
      %p90 = scmp.eq.s32.totalorder %s33, 1
      %p91 = por %p89, %p90
      %p92 = scmp.ne.s32.totalorder %s81, %s82
      %p93 = scmp.eq.s32.totalorder %s33, 0
      %p94 = por %p92, %p93
      %p95 = scmp.ne.s32.totalorder %s81, %s82
      %p96 = scmp.eq.s32.totalorder %s34, 1
      %p97 = por %p95, %p96
      %p99 = scmp.ne.s32.totalorder %s82, %s98
      %p100 = scmp.eq.s32.totalorder %s34, 0
      %p101 = por %p99, %p100
      %s103 = sadd.s32 %s102, 1
      %p106 = scmp.eq.s32.totalorder %s28, 1
      %p107 = scmp.ne.s32.totalorder %s102, %s104
      %p108 = scmp.eq.s32.totalorder %s28, 0
      %p109 = por %p107, %p108
      %p110 = scmp.ne.s32.totalorder %s102, %s104
      %p111 = scmp.eq.s32.totalorder %s33, 1
      %p112 = por %p110, %p111
      %p113 = scmp.ne.s32.totalorder %s104, %s105
      %p114 = scmp.eq.s32.totalorder %s33, 0
      %p115 = por %p113, %p114
      %p116 = scmp.ne.s32.totalorder %s104, %s105
      %p117 = scmp.eq.s32.totalorder %s34, 1
      %p118 = por %p116, %p117
      %p120 = scmp.ne.s32.totalorder %s105, %s119
      %p121 = scmp.eq.s32.totalorder %s34, 0
      %p122 = por %p120, %p121
      %s124 = sadd.s32 %s123, 1
      %p127 = scmp.eq.s32.totalorder %s28, 1
      %p128 = scmp.ne.s32.totalorder %s123, %s125
      %p129 = scmp.eq.s32.totalorder %s28, 0
      %p130 = por %p128, %p129
      %p131 = scmp.ne.s32.totalorder %s123, %s125
      %p132 = scmp.eq.s32.totalorder %s33, 1
      %p133 = por %p131, %p132
      %p134 = scmp.ne.s32.totalorder %s125, %s126
      %p135 = scmp.eq.s32.totalorder %s33, 0
      %p136 = por %p134, %p135
      %p137 = scmp.ne.s32.totalorder %s125, %s126
      %p138 = scmp.eq.s32.totalorder %s34, 1
      %p139 = por %p137, %p138
      %p141 = scmp.ne.s32.totalorder %s126, %s140
      %p142 = scmp.eq.s32.totalorder %s34, 0
      %p143 = por %p141, %p142
      %s145 = sadd.s32 %s144, 1
      %p148 = scmp.eq.s32.totalorder %s28, 1
      %p149 = scmp.ne.s32.totalorder %s144, %s146
      %p150 = scmp.eq.s32.totalorder %s28, 0
      %p151 = por %p149, %p150
      %p152 = scmp.ne.s32.totalorder %s144, %s146
      %p153 = scmp.eq.s32.totalorder %s33, 1
      %p154 = por %p152, %p153
      %p155 = scmp.ne.s32.totalorder %s146, %s147
      %p156 = scmp.eq.s32.totalorder %s33, 0
      %p157 = por %p155, %p156
      %p158 = scmp.ne.s32.totalorder %s146, %s147
      %p159 = scmp.eq.s32.totalorder %s34, 1
      %p160 = por %p158, %p159
      %p162 = scmp.ne.s32.totalorder %s147, %s161
      %p163 = scmp.eq.s32.totalorder %s34, 0
      %p164 = por %p162, %p163
      %s166 = sadd.s32 %s165, 1
      %p169 = scmp.eq.s32.totalorder %s28, 1
      %p170 = scmp.ne.s32.totalorder %s165, %s167
      %p171 = scmp.eq.s32.totalorder %s28, 0
      %p172 = por %p170, %p171
      %p173 = scmp.ne.s32.totalorder %s165, %s167
      %p174 = scmp.eq.s32.totalorder %s33, 1
      %p175 = por %p173, %p174
      %p176 = scmp.ne.s32.totalorder %s167, %s168
      %p177 = scmp.eq.s32.totalorder %s33, 0
      %p178 = por %p176, %p177
      %p179 = scmp.ne.s32.totalorder %s167, %s168
      %p180 = scmp.eq.s32.totalorder %s34, 1
      %p181 = por %p179, %p180
      %p183 = scmp.ne.s32.totalorder %s168, %s182
      %p184 = scmp.eq.s32.totalorder %s34, 0
      %p185 = por %p183, %p184
      %s187 = sadd.s32 %s186, 1
      %p190 = scmp.eq.s32.totalorder %s28, 1
      %p191 = scmp.ne.s32.totalorder %s186, %s188
      %p192 = scmp.eq.s32.totalorder %s28, 0
      %p193 = por %p191, %p192
      %p194 = scmp.ne.s32.totalorder %s186, %s188
      %p195 = scmp.eq.s32.totalorder %s33, 1
      %p196 = por %p194, %p195
      %p197 = scmp.ne.s32.totalorder %s188, %s189
      %p198 = scmp.eq.s32.totalorder %s33, 0
      %p199 = por %p197, %p198
      %p200 = scmp.ne.s32.totalorder %s188, %s189
      %p201 = scmp.eq.s32.totalorder %s34, 1
      %p202 = por %p200, %p201
      %p204 = scmp.ne.s32.totalorder %s189, %s203
      %p205 = scmp.eq.s32.totalorder %s34, 0
      %p206 = por %p204, %p205
      %s208 = sadd.s32 %s207, 1
      %p211 = scmp.eq.s32.totalorder %s28, 1
      %p212 = scmp.ne.s32.totalorder %s207, %s209
      %p213 = scmp.eq.s32.totalorder %s28, 0
      %p214 = por %p212, %p213
      %p215 = scmp.ne.s32.totalorder %s207, %s209
      %p216 = scmp.eq.s32.totalorder %s33, 1
      %p217 = por %p215, %p216
      %p218 = scmp.ne.s32.totalorder %s209, %s210
      %p219 = scmp.eq.s32.totalorder %s33, 0
      %p220 = por %p218, %p219
      %p221 = scmp.ne.s32.totalorder %s209, %s210
      %p222 = scmp.eq.s32.totalorder %s34, 1
      %p223 = por %p221, %p222
      %p225 = scmp.ne.s32.totalorder %s210, %s224
      %p226 = scmp.eq.s32.totalorder %s34, 0
      %p227 = por %p225, %p226
      %s229 = sadd.s32 %s228, 1
      %p232 = scmp.eq.s32.totalorder %s28, 1
      %p233 = scmp.ne.s32.totalorder %s228, %s230
      %p234 = scmp.eq.s32.totalorder %s28, 0
      %p235 = por %p233, %p234
      %p236 = scmp.ne.s32.totalorder %s228, %s230
      %p237 = scmp.eq.s32.totalorder %s33, 1
      %p238 = por %p236, %p237
      %p239 = scmp.ne.s32.totalorder %s230, %s231
      %p240 = scmp.eq.s32.totalorder %s33, 0
      %p241 = por %p239, %p240
      %p242 = scmp.ne.s32.totalorder %s230, %s231
      %p243 = scmp.eq.s32.totalorder %s34, 1
      %p244 = por %p242, %p243
      %p246 = scmp.ne.s32.totalorder %s231, %s245
      %p247 = scmp.eq.s32.totalorder %s34, 0
      %p248 = por %p246, %p247
      %s250 = sadd.s32 %s249, 1
      %p253 = scmp.eq.s32.totalorder %s28, 1
      %p254 = scmp.ne.s32.totalorder %s249, %s251
      %p255 = scmp.eq.s32.totalorder %s28, 0
      %p256 = por %p254, %p255
      %p257 = scmp.ne.s32.totalorder %s249, %s251
      %p258 = scmp.eq.s32.totalorder %s33, 1
      %p259 = por %p257, %p258
      %p260 = scmp.ne.s32.totalorder %s251, %s252
      %p261 = scmp.eq.s32.totalorder %s33, 0
      %p262 = por %p260, %p261
      %p263 = scmp.ne.s32.totalorder %s251, %s252
      %p264 = scmp.eq.s32.totalorder %s34, 1
      %p265 = por %p263, %p264
      %p267 = scmp.ne.s32.totalorder %s252, %s266
      %p268 = scmp.eq.s32.totalorder %s34, 0
      %p269 = por %p267, %p268
      %s271 = sadd.s32 %s270, 1
      %p274 = scmp.eq.s32.totalorder %s28, 1
      %p275 = scmp.ne.s32.totalorder %s270, %s272
      %p276 = scmp.eq.s32.totalorder %s28, 0
      %p277 = por %p275, %p276
      %p278 = scmp.ne.s32.totalorder %s270, %s272
      %p279 = scmp.eq.s32.totalorder %s33, 1
      %p280 = por %p278, %p279
      %p281 = scmp.ne.s32.totalorder %s272, %s273
      %p282 = scmp.eq.s32.totalorder %s33, 0
      %p283 = por %p281, %p282
      %p284 = scmp.ne.s32.totalorder %s272, %s273
      %p285 = scmp.eq.s32.totalorder %s34, 1
      %p286 = por %p284, %p285
      %p288 = scmp.ne.s32.totalorder %s273, %s287
      %p289 = scmp.eq.s32.totalorder %s34, 0
      %p290 = por %p288, %p289
      %s292 = sadd.s32 %s291, 1
      %p295 = scmp.eq.s32.totalorder %s28, 1
      %p296 = scmp.ne.s32.totalorder %s291, %s293
      %p297 = scmp.eq.s32.totalorder %s28, 0
      %p298 = por %p296, %p297
      %p299 = scmp.ne.s32.totalorder %s291, %s293
      %p300 = scmp.eq.s32.totalorder %s33, 1
      %p301 = por %p299, %p300
      %p302 = scmp.ne.s32.totalorder %s293, %s294
      %p303 = scmp.eq.s32.totalorder %s33, 0
      %p304 = por %p302, %p303
      %p305 = scmp.ne.s32.totalorder %s293, %s294
      %p306 = scmp.eq.s32.totalorder %s34, 1
      %p307 = por %p305, %p306
      %p309 = scmp.ne.s32.totalorder %s294, %s308
      %p310 = scmp.eq.s32.totalorder %s34, 0
      %p311 = por %p309, %p310
      %s313 = sadd.s32 %s312, 1
      %p316 = scmp.eq.s32.totalorder %s28, 1
      %p317 = scmp.ne.s32.totalorder %s312, %s314
      %p318 = scmp.eq.s32.totalorder %s28, 0
      %p319 = por %p317, %p318
      %p320 = scmp.ne.s32.totalorder %s312, %s314
      %p321 = scmp.eq.s32.totalorder %s33, 1
      %p322 = por %p320, %p321
      %p323 = scmp.ne.s32.totalorder %s314, %s315
      %p324 = scmp.eq.s32.totalorder %s33, 0
      %p325 = por %p323, %p324
      %p326 = scmp.ne.s32.totalorder %s314, %s315
      %p327 = scmp.eq.s32.totalorder %s34, 1
      %p328 = por %p326, %p327
      %p330 = scmp.ne.s32.totalorder %s315, %s329
      %p331 = scmp.eq.s32.totalorder %s34, 0
      %p332 = por %p330, %p331
      %s334 = sadd.s32 %s333, 1
      %p337 = scmp.eq.s32.totalorder %s28, 1
      %p338 = scmp.ne.s32.totalorder %s333, %s335
      %p339 = scmp.eq.s32.totalorder %s28, 0
      %p340 = por %p338, %p339
      %p341 = scmp.ne.s32.totalorder %s333, %s335
      %p342 = scmp.eq.s32.totalorder %s33, 1
      %p343 = por %p341, %p342
      %p344 = scmp.ne.s32.totalorder %s335, %s336
      %p345 = scmp.eq.s32.totalorder %s33, 0
      %p346 = por %p344, %p345
      %p347 = scmp.ne.s32.totalorder %s335, %s336
      %p348 = scmp.eq.s32.totalorder %s34, 1
      %p349 = por %p347, %p348
      %p351 = scmp.ne.s32.totalorder %s336, %s350
      %p352 = scmp.eq.s32.totalorder %s34, 0
      %p353 = por %p351, %p352
      %s355 = sadd.s32 %s354, 1
      %p358 = scmp.eq.s32.totalorder %s28, 1
      %p359 = scmp.ne.s32.totalorder %s354, %s356
      %p360 = scmp.eq.s32.totalorder %s28, 0
      %p361 = por %p359, %p360
      %p362 = scmp.ne.s32.totalorder %s354, %s356
      %p363 = scmp.eq.s32.totalorder %s33, 1
      %p364 = por %p362, %p363
      %p365 = scmp.ne.s32.totalorder %s356, %s357
      %p366 = scmp.eq.s32.totalorder %s33, 0
      %p367 = por %p365, %p366
      %p368 = scmp.ne.s32.totalorder %s356, %s357
      %p369 = scmp.eq.s32.totalorder %s34, 1
      %p370 = por %p368, %p369
      %p372 = scmp.ne.s32.totalorder %s357, %s371
      %p373 = scmp.eq.s32.totalorder %s34, 0
      %p374 = por %p372, %p373
      %s375 = ssub.s32 %s35, %s47
      %s376 = ssub.s32 %s36, %s43
      %s377 = sor.u32 %s375, %s376
      %p378 = scmp.eq.s32.totalorder %s377, 0
      %s380 = sadd.s32 %s379, 1
      %s381 = scalar_select %p378, %s379, %s380
      %p384 = pneg %p378
      %p385 = scmp.eq.s32.totalorder %s28, 1
      %p386 = por %p384, %p385
      %p387 = scmp.ne.s32.totalorder %s379, %s382
      %p388 = scmp.eq.s32.totalorder %s28, 0
      %p389 = por %p387, %p388
      %p390 = scmp.ne.s32.totalorder %s379, %s382
      %p391 = scmp.eq.s32.totalorder %s33, 1
      %p392 = por %p390, %p391
      %p393 = scmp.ne.s32.totalorder %s382, %s383
      %p394 = scmp.eq.s32.totalorder %s33, 0
      %p395 = por %p393, %p394
      %p396 = scmp.ne.s32.totalorder %s382, %s383
      %p397 = scmp.eq.s32.totalorder %s34, 1
      %p398 = por %p396, %p397
      %p400 = scmp.ne.s32.totalorder %s383, %s399
      %p401 = scmp.eq.s32.totalorder %s34, 0
      %p402 = por %p400, %p401
      %p403 = scmp.le.s32.totalorder 1, %s28
      %p404 = scmp.lt.s32.totalorder %s28, 3
      %p405 = pnand %p403, %p404
      %p406 = pneg %p405
      // Predicated region
      $region9: #{tpu_custom_call.1} parent=5 // pred_check
        _
      $region10: #{tpu_custom_call.1} parent=5 // pred_check_branch
        %408 = sbr.rel (%p405) target = $region12
      $region11: #{tpu_custom_call.1} parent=5 // pred_region
        %s409 = ssub.s32 %s28, 1
        // Predicated region
        $region13: #{tpu_custom_call.1} parent=11 // pred_check
          %p410 = pneg %p115
        $region14: #{tpu_custom_call.1} parent=11 // pred_check_branch
          %412 = sbr.rel (%p410) target = $region16
        $region15: #{tpu_custom_call.1} parent=11 // pred_region
          _
        $region16: #{tpu_custom_call.1} parent=11 // pred_fallthru
          _
        // Predicated region
        $region17: #{tpu_custom_call.1} parent=11 // pred_check
          %p413 = pneg %p136
        $region18: #{tpu_custom_call.1} parent=11 // pred_check_branch
          %415 = sbr.rel (%p413) target = $region20
        $region19: #{tpu_custom_call.1} parent=11 // pred_region
          _
        $region20: #{tpu_custom_call.1} parent=11 // pred_fallthru
          _
        // Predicated region
        $region21: #{tpu_custom_call.1} parent=11 // pred_check
          %p416 = pneg %p157
        $region22: #{tpu_custom_call.1} parent=11 // pred_check_branch
          %418 = sbr.rel (%p416) target = $region24
        $region23: #{tpu_custom_call.1} parent=11 // pred_region
          _
        $region24: #{tpu_custom_call.1} parent=11 // pred_fallthru
          _
        // Predicated region
        $region25: #{tpu_custom_call.1} parent=11 // pred_check
          %p419 = pneg %p178
        $region26: #{tpu_custom_call.1} parent=11 // pred_check_branch
          %421 = sbr.rel (%p419) target = $region28
        $region27: #{tpu_custom_call.1} parent=11 // pred_region
          _
        $region28: #{tpu_custom_call.1} parent=11 // pred_fallthru
          _
        // Predicated region
        $region29: #{tpu_custom_call.1} parent=11 // pred_check
          %p422 = pneg %p199
        $region30: #{tpu_custom_call.1} parent=11 // pred_check_branch
          %424 = sbr.rel (%p422) target = $region32
        $region31: #{tpu_custom_call.1} parent=11 // pred_region
          _
        $region32: #{tpu_custom_call.1} parent=11 // pred_fallthru
          _
        // Predicated region
        $region33: #{tpu_custom_call.1} parent=11 // pred_check
          %p425 = pneg %p220
        $region34: #{tpu_custom_call.1} parent=11 // pred_check_branch
          %427 = sbr.rel (%p425) target = $region36
        $region35: #{tpu_custom_call.1} parent=11 // pred_region
          _
        $region36: #{tpu_custom_call.1} parent=11 // pred_fallthru
          _
        // Predicated region
        $region37: #{tpu_custom_call.1} parent=11 // pred_check
          %p428 = pneg %p241
        $region38: #{tpu_custom_call.1} parent=11 // pred_check_branch
          %430 = sbr.rel (%p428) target = $region40
        $region39: #{tpu_custom_call.1} parent=11 // pred_region
          %s432 = ssub.s32 16, 16
          %433 = vsyncadd [#allocation9], %s432
          %s435 = sshll.u32 [#allocation8], 4
          %s436 = int_to_ptr.vmem [resolvable:$true] %s435
          %438 = dma.hbm_to_vmem [thread:$0]  %s8, 16, %s436, [#allocation9]
        $region40: #{tpu_custom_call.1} parent=11 // pred_fallthru
          _
        // Predicated region
        $region41: #{tpu_custom_call.1} parent=11 // pred_check
          %p439 = pneg %p262
        $region42: #{tpu_custom_call.1} parent=11 // pred_check_branch
          %441 = sbr.rel (%p439) target = $region44
        $region43: #{tpu_custom_call.1} parent=11 // pred_region
          %s443 = ssub.s32 16, 16
          %444 = vsyncadd [#allocation9], %s443
          %s446 = sshll.u32 [#allocation10], 4
          %s447 = int_to_ptr.vmem [resolvable:$true] %s446
          %449 = dma.hbm_to_vmem [thread:$0]  %s9, 16, %s447, [#allocation9]
        $region44: #{tpu_custom_call.1} parent=11 // pred_fallthru
          _
        // Predicated region
        $region45: #{tpu_custom_call.1} parent=11 // pred_check
          %p450 = pneg %p283
        $region46: #{tpu_custom_call.1} parent=11 // pred_check_branch
          %452 = sbr.rel (%p450) target = $region48
        $region47: #{tpu_custom_call.1} parent=11 // pred_region
          _
        $region48: #{tpu_custom_call.1} parent=11 // pred_fallthru
          _
        // Predicated region
        $region49: #{tpu_custom_call.1} parent=11 // pred_check
          %p453 = pneg %p304
        $region50: #{tpu_custom_call.1} parent=11 // pred_check_branch
          %455 = sbr.rel (%p453) target = $region52
        $region51: #{tpu_custom_call.1} parent=11 // pred_region
          _
        $region52: #{tpu_custom_call.1} parent=11 // pred_fallthru
          _
        // Predicated region
        $region53: #{tpu_custom_call.1} parent=11 // pred_check
          %p456 = pneg %p325
        $region54: #{tpu_custom_call.1} parent=11 // pred_check_branch
          %458 = sbr.rel (%p456) target = $region56
        $region55: #{tpu_custom_call.1} parent=11 // pred_region
          _
        $region56: #{tpu_custom_call.1} parent=11 // pred_fallthru
          _
        // Predicated region
        $region57: #{tpu_custom_call.1} parent=11 // pred_check
          %p459 = pneg %p346
        $region58: #{tpu_custom_call.1} parent=11 // pred_check_branch
          %461 = sbr.rel (%p459) target = $region60
        $region59: #{tpu_custom_call.1} parent=11 // pred_region
          _
        $region60: #{tpu_custom_call.1} parent=11 // pred_fallthru
          _
        // Predicated region
        $region61: #{tpu_custom_call.1} parent=11 // pred_check
          %p462 = pneg %p367
        $region62: #{tpu_custom_call.1} parent=11 // pred_check_branch
          %464 = sbr.rel (%p462) target = $region64
        $region63: #{tpu_custom_call.1} parent=11 // pred_region
          _
        $region64: #{tpu_custom_call.1} parent=11 // pred_fallthru
          _
      $region12: #{tpu_custom_call.1} parent=5 // pred_fallthru
        _
      %p465 = scmp.lt.s32.totalorder %s28, 2
      // Predicated region
      $region65: #{tpu_custom_call.1} parent=5 // pred_check
        %p466 = pneg %p465
      $region66: #{tpu_custom_call.1} parent=5 // pred_check_branch
        %468 = sbr.rel (%p466) target = $region68
      $region67: #{tpu_custom_call.1} parent=5 // pred_region
        // Predicated region
        $region69: #{tpu_custom_call.1} parent=67 // pred_check
          %p469 = pneg %p62
        $region70: #{tpu_custom_call.1} parent=67 // pred_check_branch
          %471 = sbr.rel (%p469) target = $region72
        $region71: #{tpu_custom_call.1} parent=67 // pred_region
          %p472 = scmp.lt.s32.totalorder %s35, 1
          %s473 = scalar_select %p472, %s35, 1
          %p474 = scmp.lt.s32.totalorder %s36, 0
          %s475 = scalar_select %p474, %s36, 0
          %s476 = sadd.s32 %s475, %s473
          %s477 = smul.addr %s476, 8
          %s478 = scalar_lea.vmem %s0, %s477
        $region72: #{tpu_custom_call.1} parent=67 // pred_fallthru
          _
        // Predicated region
        $region73: #{tpu_custom_call.1} parent=67 // pred_check
          %p479 = pneg %p88
        $region74: #{tpu_custom_call.1} parent=67 // pred_check_branch
          %481 = sbr.rel (%p479) target = $region76
        $region75: #{tpu_custom_call.1} parent=67 // pred_region
          %s482 = sand.u32 %s78, 1
          %s483 = scalar_lea.sflag [#allocation6], %s482
          %s484 = sand.u32 %s78, 1
          %s485 = smul.addr %s484, 4
          %s486 = scalar_lea.vmem [#allocation5], %s485
          %s488 = ssub.s32 64, 64
          %489 = vsyncadd %s483, %s488
          %s490 = smul.addr %s35, 64
          %s491 = scalar_lea.hbm %s1, %s490
          %s493 = sshll.u32 %s486, 4
          %s494 = int_to_ptr.vmem [resolvable:$true] %s493
          %496 = dma.hbm_to_vmem [thread:$0]  %s491, 64, %s494, %s483
        $region76: #{tpu_custom_call.1} parent=67 // pred_fallthru
          _
      $region68: #{tpu_custom_call.1} parent=5 // pred_fallthru
        _
      %p497 = scmp.le.s32.totalorder 1, %s28
      %p498 = scmp.lt.s32.totalorder %s28, 3
      %p499 = pnand %p497, %p498
      %p500 = pneg %p499
      // Predicated region
      $region77: #{tpu_custom_call.1} parent=5 // pred_check
        _
      $region78: #{tpu_custom_call.1} parent=5 // pred_check_branch
        %502 = sbr.rel (%p499) target = $region80
      $region79: #{tpu_custom_call.1} parent=5 // pred_region
        %s503 = ssub.s32 %s28, 1
        %s504 = sand.u32 %s81, 1
        %s505 = scalar_lea.sflag [#allocation6], %s504
        %s506 = sand.u32 %s81, 1
        %s507 = smul.addr %s506, 4
        %s508 = scalar_lea.vmem [#allocation5], %s507
        // Predicated region
        $region81: #{tpu_custom_call.1} parent=79 // pred_check
          %p509 = pneg %p94
        $region82: #{tpu_custom_call.1} parent=79 // pred_check_branch
          %511 = sbr.rel (%p509) target = $region84
        $region83: #{tpu_custom_call.1} parent=79 // pred_region
          %512 = dma.done %s505, 64
        $region84: #{tpu_custom_call.1} parent=79 // pred_fallthru
          _
        // Predicated region
        $region85: #{tpu_custom_call.1} parent=79 // pred_check
          %p513 = pneg %p241
        $region86: #{tpu_custom_call.1} parent=79 // pred_check_branch
          %515 = sbr.rel (%p513) target = $region88
        $region87: #{tpu_custom_call.1} parent=79 // pred_region
          %516 = dma.done [#allocation9], 16
        $region88: #{tpu_custom_call.1} parent=79 // pred_fallthru
          _
        // Predicated region
        $region89: #{tpu_custom_call.1} parent=79 // pred_check
          %p517 = pneg %p262
        $region90: #{tpu_custom_call.1} parent=79 // pred_check_branch
          %519 = sbr.rel (%p517) target = $region92
        $region91: #{tpu_custom_call.1} parent=79 // pred_region
          %520 = dma.done [#allocation9], 16
        $region92: #{tpu_custom_call.1} parent=79 // pred_fallthru
          _
        %p521 = scmp.lt.s32.totalorder %s37, 1
        %s522 = scalar_select %p521, %s37, 1
        %p523 = scmp.lt.s32.totalorder %s38, 0
        %s524 = scalar_select %p523, %s38, 0
        %s525 = sadd.s32 %s524, %s522
        %s526 = smul.addr %s525, 8
        %s527 = scalar_lea.vmem %s0, %s526
        %p528 = pneg %p68
        %p529 = pneg %p65
        %s530 = sand.u32 %s81, 1
        %s531 = scalar_lea.sflag [#allocation6], %s530
        %s532 = sand.u32 %s81, 1
        %s533 = smul.addr %s532, 4
        %s534 = scalar_lea.vmem [#allocation5], %s533
        %p535 = pneg %p94
        %p536 = pneg %p91
        %p537 = pneg %p115
        %p538 = pneg %p112
        %p539 = pneg %p136
        %p540 = pneg %p133
        %p541 = pneg %p157
        %p542 = pneg %p154
        %p543 = pneg %p178
        %p544 = pneg %p175
        %p545 = pneg %p199
        %p546 = pneg %p196
        %p547 = pneg %p220
        %p548 = pneg %p217
        %p549 = pneg %p241
        %p550 = pneg %p238
        %p551 = pneg %p262
        %p552 = pneg %p259
        %p553 = pneg %p283
        %p554 = pneg %p280
        %p555 = pneg %p304
        %p556 = pneg %p301
        %p557 = pneg %p325
        %p558 = pneg %p322
        %p559 = pneg %p346
        %p560 = pneg %p343
        %p561 = pneg %p367
        %p562 = pneg %p364
        %p563 = pneg %p395
        %p564 = pneg %p392
        %s565 = sand.u32 %s382, 1
        %s566 = scalar_lea.sflag [#allocation7], %s565
        %s567 = sand.u32 %s382, 1
        %s568 = smul.addr %s567, 8
        %s569 = scalar_lea.vmem [#allocation11], %s568
        %p570 = scmp.lt.s32.totalorder %s37, 1
        %s571 = scalar_select %p570, %s37, 1
        %p572 = scmp.lt.s32.totalorder %s38, 0
        %s573 = scalar_select %p572, %s38, 0
        %s574 = sadd.s32 %s573, %s571
        %s575 = smul.addr %s574, 8
        %s576 = scalar_lea.vmem %s0, %s575
        %v578 = vld [vmem:[%s576] sm:$0xff]
        %v579 = vld [vmem:[%s2] sm:$0x1]
        %v580 = vld [vmem:[%s3] sm:$0x1]
        %p581 = scmp.eq.s32.totalorder %s38, 0
        // Predicated region
        $region93: #{tpu_custom_call.1} parent=79 // pred_check
          %p582 = pneg %p581
        $region94: #{tpu_custom_call.1} parent=79 // pred_check_branch
          %584 = sbr.rel (%p582) target = $region96
        $region95: #{tpu_custom_call.1} parent=79 // pred_region
          %v585 = vld [vmem:[%s508] sm:$0xf]
          %v586 = vunpack.c.l.bf16 %v585
          %vm587 = vcmask 261120
          %v588 = vsel %vm587, %v586, 0.0
          %589 = vadd.xlane.f32.xlu0 %v588
          %v590 = vpop.xlane.xlu0 %589
          %v591 = vrcp.pop 32.0
          %v592 = vmul.f32 %v590, %v591
          %v593 = vsub.f32 %v586, %v592
          %v594 = vmul.f32 %v593, %v593
          %v595 = vsel %vm587, %v594, 0.0
          %596 = vadd.xlane.f32.xlu0 %v595
          %v597 = vpop.xlane.xlu0 %596
          %v598 = vmul.f32 %v597, %v591
          %v599 = vadd.f32 %v598, 1e-05
          %v600 = vrsqrt.pop %v599
          %v601 = vmul.f32 %v593, %v600
          %v603 = vlaneseq
          %v604 = vshrl.u32 %v603, 7
          %v605 = vsub.s32 0, %v604
          %v606 = vrot.slane %v579, %v605
          %v608 = vmul.f32 %v601, %v606
          %v610 = vlaneseq
          %v611 = vshrl.u32 %v610, 7
          %v612 = vsub.s32 0, %v611
          %v613 = vrot.slane %v580, %v612
          %v615 = vadd.f32 %v608, %v613
          %v616 = vpack.c.bf16 %v615, %v615
          %v617 = vld [vmem:[%s5] sm:$0xf]
          %v618 = vld [vmem:[%s5 + $0x4] sm:$0xf]
          %v619 = vld [vmem:[%s5 + $0x8] sm:$0xf]
          %v620 = vld [vmem:[%s5 + $0xc] sm:$0xf]
          %v625 = vunpack.c.l.b16 %v617
          %v626 = vunpack.c.l.b16 %v618
          %v627 = vunpack.c.l.b16 %v619
          %v628 = vunpack.c.l.b16 %v620
          %v629 = vpack.c.b16 %v626, %v625
          %v630 = vpack.c.b16 %v628, %v627
          %v634 = vsel %vm587, %v616, 0
          %636 = vmatprep.subr.bf16.mxu0 0
          %637 = vmatpush1.bf16.msra.mxu0 %v629
          %638 = vmatprep.subr.bf16.mxu0 0
          %639 = vmatpush1.bf16.msra.mxu0 %v630
          %640 = vmatprep.subr.bf16.mxu0 0
          %641 = vmatpush1.bf16.msra.mxu0 0
          %642 = vmatprep.subr.bf16.mxu0 0
          %643 = vmatpush1.bf16.msra.mxu0 0
          %644 = vmatprep.subr.bf16.mxu0 0
          %645 = vmatpush1.bf16.msra.mxu0 0
          %646 = vmatprep.subr.bf16.mxu0 0
          %647 = vmatpush1.bf16.msra.mxu0 0
          %648 = vmatprep.subr.bf16.mxu0 0
          %649 = vmatpush1.bf16.msra.mxu0 0
          %650 = vmatprep.subr.bf16.mxu0 0
          %651 = vmatpush1.bf16.msra.mxu0 0
          %652 = vmatprep.subr.bf16.mxu0 0
          %653 = vmatpush1.bf16.msra.mxu0 0
          %654 = vmatprep.subr.bf16.mxu0 0
          %655 = vmatpush1.bf16.msra.mxu0 0
          %656 = vmatprep.subr.bf16.mxu0 0
          %657 = vmatpush1.bf16.msra.mxu0 0
          %658 = vmatprep.subr.bf16.mxu0 0
          %659 = vmatpush1.bf16.msra.mxu0 0
          %660 = vmatprep.subr.bf16.mxu0 0
          %661 = vmatpush1.bf16.msra.mxu0 0
          %662 = vmatprep.subr.bf16.mxu0 0
          %663 = vmatpush1.bf16.msra.mxu0 0
          %664 = vmatprep.subr.bf16.mxu0 0
          %665 = vmatpush1.bf16.msra.mxu0 0
          %666 = vmatprep.subr.bf16.mxu0 0
          %667 = vmatpush1.bf16.msra.mxu0 0
          %668 = vmatprep.mubr.bf16.mxu0 0
          %669 = vmatmul.mubr.bf16.gmra.mrb[0].mxu0 %v634
          %v670 = vpop.f32.mrb[0].mxu0
          %v671 = vadd.f32 0.0, %v670
          %v672 = vpop.f32.mrb[0].mxu0
          %v673 = vpop.f32.mrb[0].mxu0
          %v674 = vpop.f32.mrb[0].mxu0
          %675 = vdwg.mxu0
          %v676 = vpack.c.bf16 %v671, %v671
          %vm677 = vcmask 257024
          %678 = vst.msk [vmem:[#allocation2] sm:$0xf] %vm677, %v676
          %v679 = vld [vmem:[%s6] sm:$0xf]
          %v680 = vld [vmem:[%s6 + $0x4] sm:$0xf]
          %v681 = vld [vmem:[%s6 + $0x8] sm:$0xf]
          %v682 = vld [vmem:[%s6 + $0xc] sm:$0xf]
          %v687 = vunpack.c.l.b16 %v679
          %v688 = vunpack.c.l.b16 %v680
          %v689 = vunpack.c.l.b16 %v681
          %v690 = vunpack.c.l.b16 %v682
          %v691 = vpack.c.b16 %v688, %v687
          %v692 = vpack.c.b16 %v690, %v689
          %695 = vmatprep.subr.bf16.mxu0 0
          %696 = vmatpush1.bf16.msra.mxu0 %v691
          %697 = vmatprep.subr.bf16.mxu0 0
          %698 = vmatpush1.bf16.msra.mxu0 %v692
          %699 = vmatprep.subr.bf16.mxu0 0
          %700 = vmatpush1.bf16.msra.mxu0 0
          %701 = vmatprep.subr.bf16.mxu0 0
          %702 = vmatpush1.bf16.msra.mxu0 0
          %703 = vmatprep.subr.bf16.mxu0 0
          %704 = vmatpush1.bf16.msra.mxu0 0
          %705 = vmatprep.subr.bf16.mxu0 0
          %706 = vmatpush1.bf16.msra.mxu0 0
          %707 = vmatprep.subr.bf16.mxu0 0
          %708 = vmatpush1.bf16.msra.mxu0 0
          %709 = vmatprep.subr.bf16.mxu0 0
          %710 = vmatpush1.bf16.msra.mxu0 0
          %711 = vmatprep.subr.bf16.mxu0 0
          %712 = vmatpush1.bf16.msra.mxu0 0
          %713 = vmatprep.subr.bf16.mxu0 0
          %714 = vmatpush1.bf16.msra.mxu0 0
          %715 = vmatprep.subr.bf16.mxu0 0
          %716 = vmatpush1.bf16.msra.mxu0 0
          %717 = vmatprep.subr.bf16.mxu0 0
          %718 = vmatpush1.bf16.msra.mxu0 0
          %719 = vmatprep.subr.bf16.mxu0 0
          %720 = vmatpush1.bf16.msra.mxu0 0
          %721 = vmatprep.subr.bf16.mxu0 0
          %722 = vmatpush1.bf16.msra.mxu0 0
          %723 = vmatprep.subr.bf16.mxu0 0
          %724 = vmatpush1.bf16.msra.mxu0 0
          %725 = vmatprep.subr.bf16.mxu0 0
          %726 = vmatpush1.bf16.msra.mxu0 0
          %727 = vmatprep.mubr.bf16.mxu0 0
          %728 = vmatmul.mubr.bf16.gmra.mrb[0].mxu0 %v634
          %v729 = vpop.f32.mrb[0].mxu0
          %v730 = vadd.f32 0.0, %v729
          %v731 = vpop.f32.mrb[0].mxu0
          %v732 = vpop.f32.mrb[0].mxu0
          %v733 = vpop.f32.mrb[0].mxu0
          %734 = vdwg.mxu0
          %v735 = vpack.c.bf16 %v730, %v730
          %736 = vst.msk [vmem:[#allocation3] sm:$0xf] %vm677, %v735
        $region96: #{tpu_custom_call.1} parent=79 // pred_fallthru
          _
        %vm737 = vcmask 261120
        %v738 = vsel %vm737, %v578, 0.0
        %739 = vadd.xlane.f32.xlu0 %v738
        %v740 = vpop.xlane.xlu0 %739
        %v741 = vrcp.pop 32.0
        %v742 = vmul.f32 %v740, %v741
        %v743 = vsub.f32 %v578, %v742
        %v744 = vmul.f32 %v743, %v743
        %v745 = vsel %vm737, %v744, 0.0
        %746 = vadd.xlane.f32.xlu0 %v745
        %v747 = vpop.xlane.xlu0 %746
        %v748 = vmul.f32 %v747, %v741
        %v749 = vadd.f32 %v748, 1e-05
        %v750 = vrsqrt.pop %v749
        %v751 = vmul.f32 %v743, %v750
        %v753 = vlaneseq
        %v754 = vshrl.u32 %v753, 7
        %v755 = vsub.s32 0, %v754
        %v756 = vrot.slane %v579, %v755
        %v758 = vmul.f32 %v751, %v756
        %v760 = vlaneseq
        %v761 = vshrl.u32 %v760, 7
        %v762 = vsub.s32 0, %v761
        %v763 = vrot.slane %v580, %v762
        %v765 = vadd.f32 %v758, %v763
        %v766 = vpack.c.bf16 %v765, %v765
        %v767 = vld [vmem:[%s4] sm:$0xf]
        %v768 = vld [vmem:[%s4 + $0x4] sm:$0xf]
        %v769 = vld [vmem:[%s4 + $0x8] sm:$0xf]
        %v770 = vld [vmem:[%s4 + $0xc] sm:$0xf]
        %v775 = vunpack.c.l.b16 %v767
        %v776 = vunpack.c.l.b16 %v768
        %v777 = vunpack.c.l.b16 %v769
        %v778 = vunpack.c.l.b16 %v770
        %v779 = vpack.c.b16 %v776, %v775
        %v780 = vpack.c.b16 %v778, %v777
        %v784 = vsel %vm737, %v766, 0
        %786 = vmatprep.subr.bf16.mxu0 0
        %787 = vmatpush1.bf16.msra.mxu0 %v779
        %788 = vmatprep.subr.bf16.mxu0 0
        %789 = vmatpush1.bf16.msra.mxu0 %v780
        %790 = vmatprep.subr.bf16.mxu0 0
        %791 = vmatpush1.bf16.msra.mxu0 0
        %792 = vmatprep.subr.bf16.mxu0 0
        %793 = vmatpush1.bf16.msra.mxu0 0
        %794 = vmatprep.subr.bf16.mxu0 0
        %795 = vmatpush1.bf16.msra.mxu0 0
        %796 = vmatprep.subr.bf16.mxu0 0
        %797 = vmatpush1.bf16.msra.mxu0 0
        %798 = vmatprep.subr.bf16.mxu0 0
        %799 = vmatpush1.bf16.msra.mxu0 0
        %800 = vmatprep.subr.bf16.mxu0 0
        %801 = vmatpush1.bf16.msra.mxu0 0
        %802 = vmatprep.subr.bf16.mxu0 0
        %803 = vmatpush1.bf16.msra.mxu0 0
        %804 = vmatprep.subr.bf16.mxu0 0
        %805 = vmatpush1.bf16.msra.mxu0 0
        %806 = vmatprep.subr.bf16.mxu0 0
        %807 = vmatpush1.bf16.msra.mxu0 0
        %808 = vmatprep.subr.bf16.mxu0 0
        %809 = vmatpush1.bf16.msra.mxu0 0
        %810 = vmatprep.subr.bf16.mxu0 0
        %811 = vmatpush1.bf16.msra.mxu0 0
        %812 = vmatprep.subr.bf16.mxu0 0
        %813 = vmatpush1.bf16.msra.mxu0 0
        %814 = vmatprep.subr.bf16.mxu0 0
        %815 = vmatpush1.bf16.msra.mxu0 0
        %816 = vmatprep.subr.bf16.mxu0 0
        %817 = vmatpush1.bf16.msra.mxu0 0
        %818 = vmatprep.mubr.bf16.mxu0 0
        %819 = vmatmul.mubr.bf16.gmra.mrb[0].mxu0 %v784
        %v820 = vpop.f32.mrb[0].mxu0
        %v821 = vadd.f32 0.0, %v820
        %v822 = vpop.f32.mrb[0].mxu0
        %v823 = vpop.f32.mrb[0].mxu0
        %v824 = vpop.f32.mrb[0].mxu0
        %825 = vdwg.mxu0
        %v826 = vmul.f32 %v821, 0.17677669
        %v827 = vpack.c.bf16 %v826, %v826
        %v828 = vld [vmem:[#allocation2] sm:$0xf]
        %v829 = vld [vmem:[#allocation3] sm:$0xf]
        %vm830 = vcmask 64512
        %v832 = vsel %vm830, %v827, 0
        %v835 = vsel %vm830, %v828, 0
        %837 = vmatprep.subr.bf16.mxu0 0
        %838 = vmatpush1.bf16.xpose.msra.mxu0 %v835
        %839 = vmatprep.subr.bf16.mxu0 0
        %840 = vmatpush1.bf16.xpose.msra.mxu0 0
        %841 = vmatprep.subr.bf16.mxu0 0
        %842 = vmatpush1.bf16.xpose.msra.mxu0 0
        %843 = vmatprep.subr.bf16.mxu0 0
        %844 = vmatpush1.bf16.xpose.msra.mxu0 0
        %845 = vmatprep.subr.bf16.mxu0 0
        %846 = vmatpush1.bf16.xpose.msra.mxu0 0
        %847 = vmatprep.subr.bf16.mxu0 0
        %848 = vmatpush1.bf16.xpose.msra.mxu0 0
        %849 = vmatprep.subr.bf16.mxu0 0
        %850 = vmatpush1.bf16.xpose.msra.mxu0 0
        %851 = vmatprep.subr.bf16.mxu0 0
        %852 = vmatpush1.bf16.xpose.msra.mxu0 0
        %853 = vmatprep.subr.bf16.mxu0 0
        %854 = vmatpush1.bf16.xpose.msra.mxu0 0
        %855 = vmatprep.subr.bf16.mxu0 0
        %856 = vmatpush1.bf16.xpose.msra.mxu0 0
        %857 = vmatprep.subr.bf16.mxu0 0
        %858 = vmatpush1.bf16.xpose.msra.mxu0 0
        %859 = vmatprep.subr.bf16.mxu0 0
        %860 = vmatpush1.bf16.xpose.msra.mxu0 0
        %861 = vmatprep.subr.bf16.mxu0 0
        %862 = vmatpush1.bf16.xpose.msra.mxu0 0
        %863 = vmatprep.subr.bf16.mxu0 0
        %864 = vmatpush1.bf16.xpose.msra.mxu0 0
        %865 = vmatprep.subr.bf16.mxu0 0
        %866 = vmatpush1.bf16.xpose.msra.mxu0 0
        %867 = vmatprep.subr.bf16.mxu0 0
        %868 = vmatpush1.bf16.xpose.msra.mxu0 0
        %869 = vmatprep.mubr.bf16.mxu0 0
        %870 = vmatmul.mubr.bf16.gmra.mrb[0].mxu0 %v832
        %v871 = vpop.f32.mrb[0].mxu0
        %v872 = vadd.f32 0.0, %v871
        %v873 = vpop.f32.mrb[0].mxu0
        %v874 = vpop.f32.mrb[0].mxu0
        %v875 = vpop.f32.mrb[0].mxu0
        %876 = vdwg.mxu0
        %v877 = vsel %vm830, %v872, -inf
        %878 = vmax.xlane.f32.xlu0 %v877
        %v879 = vpop.xlane.xlu0 %878
        %v880 = vsub.f32 %v872, %v879
        %v881 = vmul.f32 %v880, 1.442695
        %v882 = vpow.pop %v881
        %v883 = vsel %vm830, %v882, 0.0
        %884 = vadd.xlane.f32.xlu0 %v883
        %v885 = vpop.xlane.xlu0 %884
        %v886 = vrcp.pop %v885
        %v887 = vmul.f32 %v882, %v886
        %v888 = vpack.c.bf16 %v887, %v887
        %v890 = vsel %vm830, %v888, 0
        %vm892 = vcmask 1043456
        %v894 = vsel %vm892, %v829, 0
        %896 = vmatprep.subr.bf16.mxu0 0
        %897 = vmatpush1.bf16.msra.mxu0 %v894
        %898 = vmatprep.subr.bf16.mxu0 0
        %899 = vmatpush1.bf16.msra.mxu0 0
        %900 = vmatprep.subr.bf16.mxu0 0
        %901 = vmatpush1.bf16.msra.mxu0 0
        %902 = vmatprep.subr.bf16.mxu0 0
        %903 = vmatpush1.bf16.msra.mxu0 0
        %904 = vmatprep.subr.bf16.mxu0 0
        %905 = vmatpush1.bf16.msra.mxu0 0
        %906 = vmatprep.subr.bf16.mxu0 0
        %907 = vmatpush1.bf16.msra.mxu0 0
        %908 = vmatprep.subr.bf16.mxu0 0
        %909 = vmatpush1.bf16.msra.mxu0 0
        %910 = vmatprep.subr.bf16.mxu0 0
        %911 = vmatpush1.bf16.msra.mxu0 0
        %912 = vmatprep.subr.bf16.mxu0 0
        %913 = vmatpush1.bf16.msra.mxu0 0
        %914 = vmatprep.subr.bf16.mxu0 0
        %915 = vmatpush1.bf16.msra.mxu0 0
        %916 = vmatprep.subr.bf16.mxu0 0
        %917 = vmatpush1.bf16.msra.mxu0 0
        %918 = vmatprep.subr.bf16.mxu0 0
        %919 = vmatpush1.bf16.msra.mxu0 0
        %920 = vmatprep.subr.bf16.mxu0 0
        %921 = vmatpush1.bf16.msra.mxu0 0
        %922 = vmatprep.subr.bf16.mxu0 0
        %923 = vmatpush1.bf16.msra.mxu0 0
        %924 = vmatprep.subr.bf16.mxu0 0
        %925 = vmatpush1.bf16.msra.mxu0 0
        %926 = vmatprep.subr.bf16.mxu0 0
        %927 = vmatpush1.bf16.msra.mxu0 0
        %928 = vmatprep.mubr.bf16.mxu0 0
        %929 = vmatmul.mubr.bf16.gmra.mrb[0].mxu0 %v890
        %v930 = vpop.f32.mrb[0].mxu0
        %v931 = vadd.f32 0.0, %v930
        %v932 = vpop.f32.mrb[0].mxu0
        %v933 = vpop.f32.mrb[0].mxu0
        %v934 = vpop.f32.mrb[0].mxu0
        %935 = vdwg.mxu0
        %936 = vst.msk [vmem:[#allocation4] sm:$0xff] %vm830, %v931
        %938 = vrot.lane.b32.xlu0 %v827, 120
        %v939 = vpop.permute.xlu0 %938
        %v941 = vunpack.c.l.b16 %v828
        %v942 = vpack.c.b16 %v941, %v941
        %943 = vrot.lane.b32.xlu0 %v942, 120
        %v944 = vpop.permute.xlu0 %943
        %v946 = vsel %vm830, %v939, 0
        %v949 = vsel %vm830, %v944, 0
        %951 = vmatprep.subr.bf16.mxu0 0
        %952 = vmatpush1.bf16.xpose.msra.mxu0 %v949
        %953 = vmatprep.subr.bf16.mxu0 0
        %954 = vmatpush1.bf16.xpose.msra.mxu0 0
        %955 = vmatprep.subr.bf16.mxu0 0
        %956 = vmatpush1.bf16.xpose.msra.mxu0 0
        %957 = vmatprep.subr.bf16.mxu0 0
        %958 = vmatpush1.bf16.xpose.msra.mxu0 0
        %959 = vmatprep.subr.bf16.mxu0 0
        %960 = vmatpush1.bf16.xpose.msra.mxu0 0
        %961 = vmatprep.subr.bf16.mxu0 0
        %962 = vmatpush1.bf16.xpose.msra.mxu0 0
        %963 = vmatprep.subr.bf16.mxu0 0
        %964 = vmatpush1.bf16.xpose.msra.mxu0 0
        %965 = vmatprep.subr.bf16.mxu0 0
        %966 = vmatpush1.bf16.xpose.msra.mxu0 0
        %967 = vmatprep.subr.bf16.mxu0 0
        %968 = vmatpush1.bf16.xpose.msra.mxu0 0
        %969 = vmatprep.subr.bf16.mxu0 0
        %970 = vmatpush1.bf16.xpose.msra.mxu0 0
        %971 = vmatprep.subr.bf16.mxu0 0
        %972 = vmatpush1.bf16.xpose.msra.mxu0 0
        %973 = vmatprep.subr.bf16.mxu0 0
        %974 = vmatpush1.bf16.xpose.msra.mxu0 0
        %975 = vmatprep.subr.bf16.mxu0 0
        %976 = vmatpush1.bf16.xpose.msra.mxu0 0
        %977 = vmatprep.subr.bf16.mxu0 0
        %978 = vmatpush1.bf16.xpose.msra.mxu0 0
        %979 = vmatprep.subr.bf16.mxu0 0
        %980 = vmatpush1.bf16.xpose.msra.mxu0 0
        %981 = vmatprep.subr.bf16.mxu0 0
        %982 = vmatpush1.bf16.xpose.msra.mxu0 0
        %983 = vmatprep.mubr.bf16.mxu0 0
        %984 = vmatmul.mubr.bf16.gmra.mrb[0].mxu0 %v946
        %v985 = vpop.f32.mrb[0].mxu0
        %v986 = vadd.f32 0.0, %v985
        %v987 = vpop.f32.mrb[0].mxu0
        %v988 = vpop.f32.mrb[0].mxu0
        %v989 = vpop.f32.mrb[0].mxu0
        %990 = vdwg.mxu0
        %v991 = vsel %vm830, %v986, -inf
        %992 = vmax.xlane.f32.xlu0 %v991
        %v993 = vpop.xlane.xlu0 %992
        %v994 = vsub.f32 %v986, %v993
        %v995 = vmul.f32 %v994, 1.442695
        %v996 = vpow.pop %v995
        %v997 = vsel %vm830, %v996, 0.0
        %998 = vadd.xlane.f32.xlu0 %v997
        %v999 = vpop.xlane.xlu0 %998
        %v1000 = vrcp.pop %v999
        %v1001 = vmul.f32 %v996, %v1000
        %v1002 = vpack.c.bf16 %v1001, %v1001
        %v1004 = vunpack.c.l.b16 %v829
        %v1005 = vpack.c.b16 %v1004, %v1004
        %1006 = vrot.lane.b32.xlu0 %v1005, 120
        %v1007 = vpop.permute.xlu0 %1006
        %v1009 = vsel %vm830, %v1002, 0
        %v1012 = vsel %vm892, %v1007, 0
        %1014 = vmatprep.subr.bf16.mxu0 0
        %1015 = vmatpush1.bf16.msra.mxu0 %v1012
        %1016 = vmatprep.subr.bf16.mxu0 0
        %1017 = vmatpush1.bf16.msra.mxu0 0
        %1018 = vmatprep.subr.bf16.mxu0 0
        %1019 = vmatpush1.bf16.msra.mxu0 0
        %1020 = vmatprep.subr.bf16.mxu0 0
        %1021 = vmatpush1.bf16.msra.mxu0 0
        %1022 = vmatprep.subr.bf16.mxu0 0
        %1023 = vmatpush1.bf16.msra.mxu0 0
        %1024 = vmatprep.subr.bf16.mxu0 0
        %1025 = vmatpush1.bf16.msra.mxu0 0
        %1026 = vmatprep.subr.bf16.mxu0 0
        %1027 = vmatpush1.bf16.msra.mxu0 0
        %1028 = vmatprep.subr.bf16.mxu0 0
        %1029 = vmatpush1.bf16.msra.mxu0 0
        %1030 = vmatprep.subr.bf16.mxu0 0
        %1031 = vmatpush1.bf16.msra.mxu0 0
        %1032 = vmatprep.subr.bf16.mxu0 0
        %1033 = vmatpush1.bf16.msra.mxu0 0
        %1034 = vmatprep.subr.bf16.mxu0 0
        %1035 = vmatpush1.bf16.msra.mxu0 0
        %1036 = vmatprep.subr.bf16.mxu0 0
        %1037 = vmatpush1.bf16.msra.mxu0 0
        %1038 = vmatprep.subr.bf16.mxu0 0
        %1039 = vmatpush1.bf16.msra.mxu0 0
        %1040 = vmatprep.subr.bf16.mxu0 0
        %1041 = vmatpush1.bf16.msra.mxu0 0
        %1042 = vmatprep.subr.bf16.mxu0 0
        %1043 = vmatpush1.bf16.msra.mxu0 0
        %1044 = vmatprep.subr.bf16.mxu0 0
        %1045 = vmatpush1.bf16.msra.mxu0 0
        %1046 = vmatprep.mubr.bf16.mxu0 0
        %1047 = vmatmul.mubr.bf16.gmra.mrb[0].mxu0 %v1009
        %v1048 = vpop.f32.mrb[0].mxu0
        %v1049 = vadd.f32 0.0, %v1048
        %v1050 = vpop.f32.mrb[0].mxu0
        %v1051 = vpop.f32.mrb[0].mxu0
        %v1052 = vpop.f32.mrb[0].mxu0
        %1053 = vdwg.mxu0
        %1055 = vrot.lane.b32.xlu0 %v1049, 8
        %v1056 = vpop.permute.xlu0 %1055
        %vm1058 = vcmask 130112
        %1059 = vst.msk [vmem:[#allocation4] sm:$0xff] %vm1058, %v1056
        %1060 = vrot.lane.b32.xlu0 %v827, 112
        %v1061 = vpop.permute.xlu0 %1060
        %1062 = vrot.lane.b32.xlu0 %v942, 112
        %v1063 = vpop.permute.xlu0 %1062
        %v1065 = vsel %vm830, %v1061, 0
        %v1068 = vsel %vm830, %v1063, 0
        %1070 = vmatprep.subr.bf16.mxu0 0
        %1071 = vmatpush1.bf16.xpose.msra.mxu0 %v1068
        %1072 = vmatprep.subr.bf16.mxu0 0
        %1073 = vmatpush1.bf16.xpose.msra.mxu0 0
        %1074 = vmatprep.subr.bf16.mxu0 0
        %1075 = vmatpush1.bf16.xpose.msra.mxu0 0
        %1076 = vmatprep.subr.bf16.mxu0 0
        %1077 = vmatpush1.bf16.xpose.msra.mxu0 0
        %1078 = vmatprep.subr.bf16.mxu0 0
        %1079 = vmatpush1.bf16.xpose.msra.mxu0 0
        %1080 = vmatprep.subr.bf16.mxu0 0
        %1081 = vmatpush1.bf16.xpose.msra.mxu0 0
        %1082 = vmatprep.subr.bf16.mxu0 0
        %1083 = vmatpush1.bf16.xpose.msra.mxu0 0
        %1084 = vmatprep.subr.bf16.mxu0 0
        %1085 = vmatpush1.bf16.xpose.msra.mxu0 0
        %1086 = vmatprep.subr.bf16.mxu0 0
        %1087 = vmatpush1.bf16.xpose.msra.mxu0 0
        %1088 = vmatprep.subr.bf16.mxu0 0
        %1089 = vmatpush1.bf16.xpose.msra.mxu0 0
        %1090 = vmatprep.subr.bf16.mxu0 0
        %1091 = vmatpush1.bf16.xpose.msra.mxu0 0
        %1092 = vmatprep.subr.bf16.mxu0 0
        %1093 = vmatpush1.bf16.xpose.msra.mxu0 0
        %1094 = vmatprep.subr.bf16.mxu0 0
        %1095 = vmatpush1.bf16.xpose.msra.mxu0 0
        %1096 = vmatprep.subr.bf16.mxu0 0
        %1097 = vmatpush1.bf16.xpose.msra.mxu0 0
        %1098 = vmatprep.subr.bf16.mxu0 0
        %1099 = vmatpush1.bf16.xpose.msra.mxu0 0
        %1100 = vmatprep.subr.bf16.mxu0 0
        %1101 = vmatpush1.bf16.xpose.msra.mxu0 0
        %1102 = vmatprep.mubr.bf16.mxu0 0
        %1103 = vmatmul.mubr.bf16.gmra.mrb[0].mxu0 %v1065
        %v1104 = vpop.f32.mrb[0].mxu0
        %v1105 = vadd.f32 0.0, %v1104
        %v1106 = vpop.f32.mrb[0].mxu0
        %v1107 = vpop.f32.mrb[0].mxu0
        %v1108 = vpop.f32.mrb[0].mxu0
        %1109 = vdwg.mxu0
        %v1110 = vsel %vm830, %v1105, -inf
        %1111 = vmax.xlane.f32.xlu0 %v1110
        %v1112 = vpop.xlane.xlu0 %1111
        %v1113 = vsub.f32 %v1105, %v1112
        %v1114 = vmul.f32 %v1113, 1.442695
        %v1115 = vpow.pop %v1114
        %v1116 = vsel %vm830, %v1115, 0.0
        %1117 = vadd.xlane.f32.xlu0 %v1116
        %v1118 = vpop.xlane.xlu0 %1117
        %v1119 = vrcp.pop %v1118
        %v1120 = vmul.f32 %v1115, %v1119
        %v1121 = vpack.c.bf16 %v1120, %v1120
        %1122 = vrot.lane.b32.xlu0 %v1005, 112
        %v1123 = vpop.permute.xlu0 %1122
        %v1125 = vsel %vm830, %v1121, 0
        %v1128 = vsel %vm892, %v1123, 0
        %1130 = vmatprep.subr.bf16.mxu0 0
        %1131 = vmatpush1.bf16.msra.mxu0 %v1128
        %1132 = vmatprep.subr.bf16.mxu0 0
        %1133 = vmatpush1.bf16.msra.mxu0 0
        %1134 = vmatprep.subr.bf16.mxu0 0
        %1135 = vmatpush1.bf16.msra.mxu0 0
        %1136 = vmatprep.subr.bf16.mxu0 0
        %1137 = vmatpush1.bf16.msra.mxu0 0
        %1138 = vmatprep.subr.bf16.mxu0 0
        %1139 = vmatpush1.bf16.msra.mxu0 0
        %1140 = vmatprep.subr.bf16.mxu0 0
        %1141 = vmatpush1.bf16.msra.mxu0 0
        %1142 = vmatprep.subr.bf16.mxu0 0
        %1143 = vmatpush1.bf16.msra.mxu0 0
        %1144 = vmatprep.subr.bf16.mxu0 0
        %1145 = vmatpush1.bf16.msra.mxu0 0
        %1146 = vmatprep.subr.bf16.mxu0 0
        %1147 = vmatpush1.bf16.msra.mxu0 0
        %1148 = vmatprep.subr.bf16.mxu0 0
        %1149 = vmatpush1.bf16.msra.mxu0 0
        %1150 = vmatprep.subr.bf16.mxu0 0
        %1151 = vmatpush1.bf16.msra.mxu0 0
        %1152 = vmatprep.subr.bf16.mxu0 0
        %1153 = vmatpush1.bf16.msra.mxu0 0
        %1154 = vmatprep.subr.bf16.mxu0 0
        %1155 = vmatpush1.bf16.msra.mxu0 0
        %1156 = vmatprep.subr.bf16.mxu0 0
        %1157 = vmatpush1.bf16.msra.mxu0 0
        %1158 = vmatprep.subr.bf16.mxu0 0
        %1159 = vmatpush1.bf16.msra.mxu0 0
        %1160 = vmatprep.subr.bf16.mxu0 0
        %1161 = vmatpush1.bf16.msra.mxu0 0
        %1162 = vmatprep.mubr.bf16.mxu0 0
        %1163 = vmatmul.mubr.bf16.gmra.mrb[0].mxu0 %v1125
        %v1164 = vpop.f32.mrb[0].mxu0
        %v1165 = vadd.f32 0.0, %v1164
        %v1166 = vpop.f32.mrb[0].mxu0
        %v1167 = vpop.f32.mrb[0].mxu0
        %v1168 = vpop.f32.mrb[0].mxu0
        %1169 = vdwg.mxu0
        %1171 = vrot.lane.b32.xlu0 %v1165, 16
        %v1172 = vpop.permute.xlu0 %1171
        %vm1174 = vcmask 195712
        %1175 = vst.msk [vmem:[#allocation4] sm:$0xff] %vm1174, %v1172
        %1176 = vrot.lane.b32.xlu0 %v827, 104
        %v1177 = vpop.permute.xlu0 %1176
        %1178 = vrot.lane.b32.xlu0 %v942, 104
        %v1179 = vpop.permute.xlu0 %1178
        %v1181 = vsel %vm830, %v1177, 0
        %v1184 = vsel %vm830, %v1179, 0
        %1186 = vmatprep.subr.bf16.mxu0 0
        %1187 = vmatpush1.bf16.xpose.msra.mxu0 %v1184
        %1188 = vmatprep.subr.bf16.mxu0 0
        %1189 = vmatpush1.bf16.xpose.msra.mxu0 0
        %1190 = vmatprep.subr.bf16.mxu0 0
        %1191 = vmatpush1.bf16.xpose.msra.mxu0 0
        %1192 = vmatprep.subr.bf16.mxu0 0
        %1193 = vmatpush1.bf16.xpose.msra.mxu0 0
        %1194 = vmatprep.subr.bf16.mxu0 0
        %1195 = vmatpush1.bf16.xpose.msra.mxu0 0
        %1196 = vmatprep.subr.bf16.mxu0 0
        %1197 = vmatpush1.bf16.xpose.msra.mxu0 0
        %1198 = vmatprep.subr.bf16.mxu0 0
        %1199 = vmatpush1.bf16.xpose.msra.mxu0 0
        %1200 = vmatprep.subr.bf16.mxu0 0
        %1201 = vmatpush1.bf16.xpose.msra.mxu0 0
        %1202 = vmatprep.subr.bf16.mxu0 0
        %1203 = vmatpush1.bf16.xpose.msra.mxu0 0
        %1204 = vmatprep.subr.bf16.mxu0 0
        %1205 = vmatpush1.bf16.xpose.msra.mxu0 0
        %1206 = vmatprep.subr.bf16.mxu0 0
        %1207 = vmatpush1.bf16.xpose.msra.mxu0 0
        %1208 = vmatprep.subr.bf16.mxu0 0
        %1209 = vmatpush1.bf16.xpose.msra.mxu0 0
        %1210 = vmatprep.subr.bf16.mxu0 0
        %1211 = vmatpush1.bf16.xpose.msra.mxu0 0
        %1212 = vmatprep.subr.bf16.mxu0 0
        %1213 = vmatpush1.bf16.xpose.msra.mxu0 0
        %1214 = vmatprep.subr.bf16.mxu0 0
        %1215 = vmatpush1.bf16.xpose.msra.mxu0 0
        %1216 = vmatprep.subr.bf16.mxu0 0
        %1217 = vmatpush1.bf16.xpose.msra.mxu0 0
        %1218 = vmatprep.mubr.bf16.mxu0 0
        %1219 = vmatmul.mubr.bf16.gmra.mrb[0].mxu0 %v1181
        %v1220 = vpop.f32.mrb[0].mxu0
        %v1221 = vadd.f32 0.0, %v1220
        %v1222 = vpop.f32.mrb[0].mxu0
        %v1223 = vpop.f32.mrb[0].mxu0
        %v1224 = vpop.f32.mrb[0].mxu0
        %1225 = vdwg.mxu0
        %v1226 = vsel %vm830, %v1221, -inf
        %1227 = vmax.xlane.f32.xlu0 %v1226
        %v1228 = vpop.xlane.xlu0 %1227
        %v1229 = vsub.f32 %v1221, %v1228
        %v1230 = vmul.f32 %v1229, 1.442695
        %v1231 = vpow.pop %v1230
        %v1232 = vsel %vm830, %v1231, 0.0
        %1233 = vadd.xlane.f32.xlu0 %v1232
        %v1234 = vpop.xlane.xlu0 %1233
        %v1235 = vrcp.pop %v1234
        %v1236 = vmul.f32 %v1231, %v1235
        %v1237 = vpack.c.bf16 %v1236, %v1236
        %1238 = vrot.lane.b32.xlu0 %v1005, 104
        %v1239 = vpop.permute.xlu0 %1238
        %v1241 = vsel %vm830, %v1237, 0
        %v1244 = vsel %vm892, %v1239, 0
        %1246 = vmatprep.subr.bf16.mxu0 0
        %1247 = vmatpush1.bf16.msra.mxu0 %v1244
        %1248 = vmatprep.subr.bf16.mxu0 0
        %1249 = vmatpush1.bf16.msra.mxu0 0
        %1250 = vmatprep.subr.bf16.mxu0 0
        %1251 = vmatpush1.bf16.msra.mxu0 0
        %1252 = vmatprep.subr.bf16.mxu0 0
        %1253 = vmatpush1.bf16.msra.mxu0 0
        %1254 = vmatprep.subr.bf16.mxu0 0
        %1255 = vmatpush1.bf16.msra.mxu0 0
        %1256 = vmatprep.subr.bf16.mxu0 0
        %1257 = vmatpush1.bf16.msra.mxu0 0
        %1258 = vmatprep.subr.bf16.mxu0 0
        %1259 = vmatpush1.bf16.msra.mxu0 0
        %1260 = vmatprep.subr.bf16.mxu0 0
        %1261 = vmatpush1.bf16.msra.mxu0 0
        %1262 = vmatprep.subr.bf16.mxu0 0
        %1263 = vmatpush1.bf16.msra.mxu0 0
        %1264 = vmatprep.subr.bf16.mxu0 0
        %1265 = vmatpush1.bf16.msra.mxu0 0
        %1266 = vmatprep.subr.bf16.mxu0 0
        %1267 = vmatpush1.bf16.msra.mxu0 0
        %1268 = vmatprep.subr.bf16.mxu0 0
        %1269 = vmatpush1.bf16.msra.mxu0 0
        %1270 = vmatprep.subr.bf16.mxu0 0
        %1271 = vmatpush1.bf16.msra.mxu0 0
        %1272 = vmatprep.subr.bf16.mxu0 0
        %1273 = vmatpush1.bf16.msra.mxu0 0
        %1274 = vmatprep.subr.bf16.mxu0 0
        %1275 = vmatpush1.bf16.msra.mxu0 0
        %1276 = vmatprep.subr.bf16.mxu0 0
        %1277 = vmatpush1.bf16.msra.mxu0 0
        %1278 = vmatprep.mubr.bf16.mxu0 0
        %1279 = vmatmul.mubr.bf16.gmra.mrb[0].mxu0 %v1241
        %v1280 = vpop.f32.mrb[0].mxu0
        %v1281 = vadd.f32 0.0, %v1280
        %v1282 = vpop.f32.mrb[0].mxu0
        %v1283 = vpop.f32.mrb[0].mxu0
        %v1284 = vpop.f32.mrb[0].mxu0
        %1285 = vdwg.mxu0
        %1287 = vrot.lane.b32.xlu0 %v1281, 24
        %v1288 = vpop.permute.xlu0 %1287
        %vm1290 = vcmask 261312
        %1291 = vst.msk [vmem:[#allocation4] sm:$0xff] %vm1290, %v1288
        %v1292 = vld [vmem:[#allocation4] sm:$0xff]
        %v1293 = vpack.c.bf16 %v1292, %v1292
        %v1294 = vld [vmem:[%s7] sm:$0xf]
        %v1295 = vld [vmem:[%s7 + $0x4] sm:$0xf]
        %v1296 = vld [vmem:[%s7 + $0x8] sm:$0xf]
        %v1297 = vld [vmem:[%s7 + $0xc] sm:$0xf]
        %v1298 = vld [vmem:[#allocation8] sm:$0x1]
        %v1300 = vlaneseq
        %v1301 = vshrl.u32 %v1300, 7
        %v1302 = vsub.s32 0, %v1301
        %v1303 = vrot.slane %v1298, %v1302
        %v1309 = vunpack.c.l.b16 %v1294
        %v1310 = vunpack.c.l.b16 %v1295
        %v1311 = vunpack.c.l.b16 %v1296
        %v1312 = vunpack.c.l.b16 %v1297
        %v1313 = vpack.c.b16 %v1310, %v1309
        %v1314 = vpack.c.b16 %v1312, %v1311
        %v1318 = vsel %vm737, %v1293, 0
        %1320 = vmatprep.subr.bf16.mxu0 0
        %1321 = vmatpush1.bf16.msra.mxu0 %v1313
        %1322 = vmatprep.subr.bf16.mxu0 0
        %1323 = vmatpush1.bf16.msra.mxu0 %v1314
        %1324 = vmatprep.subr.bf16.mxu0 0
        %1325 = vmatpush1.bf16.msra.mxu0 0
        %1326 = vmatprep.subr.bf16.mxu0 0
        %1327 = vmatpush1.bf16.msra.mxu0 0
        %1328 = vmatprep.subr.bf16.mxu0 0
        %1329 = vmatpush1.bf16.msra.mxu0 0
        %1330 = vmatprep.subr.bf16.mxu0 0
        %1331 = vmatpush1.bf16.msra.mxu0 0
        %1332 = vmatprep.subr.bf16.mxu0 0
        %1333 = vmatpush1.bf16.msra.mxu0 0
        %1334 = vmatprep.subr.bf16.mxu0 0
        %1335 = vmatpush1.bf16.msra.mxu0 0
        %1336 = vmatprep.subr.bf16.mxu0 0
        %1337 = vmatpush1.bf16.msra.mxu0 0
        %1338 = vmatprep.subr.bf16.mxu0 0
        %1339 = vmatpush1.bf16.msra.mxu0 0
        %1340 = vmatprep.subr.bf16.mxu0 0
        %1341 = vmatpush1.bf16.msra.mxu0 0
        %1342 = vmatprep.subr.bf16.mxu0 0
        %1343 = vmatpush1.bf16.msra.mxu0 0
        %1344 = vmatprep.subr.bf16.mxu0 0
        %1345 = vmatpush1.bf16.msra.mxu0 0
        %1346 = vmatprep.subr.bf16.mxu0 0
        %1347 = vmatpush1.bf16.msra.mxu0 0
        %1348 = vmatprep.subr.bf16.mxu0 0
        %1349 = vmatpush1.bf16.msra.mxu0 0
        %1350 = vmatprep.subr.bf16.mxu0 0
        %1351 = vmatpush1.bf16.msra.mxu0 0
        %1352 = vmatprep.mubr.bf16.mxu0 0
        %1353 = vmatmul.mubr.bf16.gmra.mrb[0].mxu0 %v1318
        %v1354 = vpop.f32.mrb[0].mxu0
        %v1355 = vadd.f32 %v1303, %v1354
        %v1356 = vpop.f32.mrb[0].mxu0
        %v1357 = vpop.f32.mrb[0].mxu0
        %v1358 = vpop.f32.mrb[0].mxu0
        %1359 = vdwg.mxu0
        %v1360 = vadd.f32 %v578, %v1355
        %v1361 = vld [vmem:[#allocation10] sm:$0x1]
        %v1362 = vld [vmem:[%s10] sm:$0x1]
        %v1363 = vsel %vm737, %v1360, 0.0
        %1364 = vadd.xlane.f32.xlu0 %v1363
        %v1365 = vpop.xlane.xlu0 %1364
        %v1366 = vmul.f32 %v1365, %v741
        %v1367 = vsub.f32 %v1360, %v1366
        %v1368 = vmul.f32 %v1367, %v1367
        %v1369 = vsel %vm737, %v1368, 0.0
        %1370 = vadd.xlane.f32.xlu0 %v1369
        %v1371 = vpop.xlane.xlu0 %1370
        %v1372 = vmul.f32 %v1371, %v741
        %v1373 = vadd.f32 %v1372, 1e-05
        %v1374 = vrsqrt.pop %v1373
        %v1375 = vmul.f32 %v1367, %v1374
        %v1377 = vlaneseq
        %v1378 = vshrl.u32 %v1377, 7
        %v1379 = vsub.s32 0, %v1378
        %v1380 = vrot.slane %v1361, %v1379
        %v1382 = vmul.f32 %v1375, %v1380
        %v1384 = vlaneseq
        %v1385 = vshrl.u32 %v1384, 7
        %v1386 = vsub.s32 0, %v1385
        %v1387 = vrot.slane %v1362, %v1386
        %v1389 = vadd.f32 %v1382, %v1387
        %v1390 = vpack.c.bf16 %v1389, %v1389
        %v1391 = vld [vmem:[%s11] sm:$0xf]
        %v1392 = vld [vmem:[%s11 + $0x4] sm:$0xf]
        %v1393 = vld [vmem:[%s11 + $0x8] sm:$0xf]
        %v1394 = vld [vmem:[%s11 + $0xc] sm:$0xf]
        %v1395 = vld [vmem:[%s12] sm:$0x1]
        %v1397 = vlaneseq
        %v1398 = vshrl.u32 %v1397, 7
        %v1399 = vsub.s32 0, %v1398
        %v1400 = vrot.slane %v1395, %v1399
        %v1406 = vunpack.c.l.b16 %v1391
        %v1407 = vunpack.c.l.b16 %v1392
        %v1408 = vunpack.c.l.b16 %v1393
        %v1409 = vunpack.c.l.b16 %v1394
        %v1410 = vpack.c.b16 %v1407, %v1406
        %v1411 = vpack.c.b16 %v1409, %v1408
        %v1415 = vsel %vm737, %v1390, 0
        %1417 = vmatprep.subr.bf16.mxu0 0
        %1418 = vmatpush1.bf16.msra.mxu0 %v1410
        %1419 = vmatprep.subr.bf16.mxu0 0
        %1420 = vmatpush1.bf16.msra.mxu0 %v1411
        %1421 = vmatprep.subr.bf16.mxu0 0
        %1422 = vmatpush1.bf16.msra.mxu0 0
        %1423 = vmatprep.subr.bf16.mxu0 0
        %1424 = vmatpush1.bf16.msra.mxu0 0
        %1425 = vmatprep.subr.bf16.mxu0 0
        %1426 = vmatpush1.bf16.msra.mxu0 0
        %1427 = vmatprep.subr.bf16.mxu0 0
        %1428 = vmatpush1.bf16.msra.mxu0 0
        %1429 = vmatprep.subr.bf16.mxu0 0
        %1430 = vmatpush1.bf16.msra.mxu0 0
        %1431 = vmatprep.subr.bf16.mxu0 0
        %1432 = vmatpush1.bf16.msra.mxu0 0
        %1433 = vmatprep.subr.bf16.mxu0 0
        %1434 = vmatpush1.bf16.msra.mxu0 0
        %1435 = vmatprep.subr.bf16.mxu0 0
        %1436 = vmatpush1.bf16.msra.mxu0 0
        %1437 = vmatprep.subr.bf16.mxu0 0
        %1438 = vmatpush1.bf16.msra.mxu0 0
        %1439 = vmatprep.subr.bf16.mxu0 0
        %1440 = vmatpush1.bf16.msra.mxu0 0
        %1441 = vmatprep.subr.bf16.mxu0 0
        %1442 = vmatpush1.bf16.msra.mxu0 0
        %1443 = vmatprep.subr.bf16.mxu0 0
        %1444 = vmatpush1.bf16.msra.mxu0 0
        %1445 = vmatprep.subr.bf16.mxu0 0
        %1446 = vmatpush1.bf16.msra.mxu0 0
        %1447 = vmatprep.subr.bf16.mxu0 0
        %1448 = vmatpush1.bf16.msra.mxu0 0
        %1449 = vmatprep.mubr.bf16.mxu0 0
        %1450 = vmatmul.mubr.bf16.gmra.mrb[0].mxu0 %v1415
        %v1451 = vpop.f32.mrb[0].mxu0
        %v1452 = vadd.f32 %v1400, %v1451
        %v1453 = vpop.f32.mrb[0].mxu0
        %v1454 = vpop.f32.mrb[0].mxu0
        %v1455 = vpop.f32.mrb[0].mxu0
        %1456 = vdwg.mxu0
        %v1457 = vmul.f32 %v1452, 0.5
        %v1458 = vmul.f32 %v1452, 0.70710677
        %v1459 = verf.f32.pop %v1458
        %v1460 = vadd.f32 %v1459, 1.0
        %v1461 = vmul.f32 %v1457, %v1460
        %v1462 = vpack.c.bf16 %v1461, %v1461
        %v1463 = vld [vmem:[%s13] sm:$0xf]
        %v1464 = vld [vmem:[%s13 + $0x4] sm:$0xf]
        %v1465 = vld [vmem:[%s13 + $0x8] sm:$0xf]
        %v1466 = vld [vmem:[%s13 + $0xc] sm:$0xf]
        %v1467 = vld [vmem:[%s13 + $0x10] sm:$0xf]
        %v1468 = vld [vmem:[%s13 + $0x14] sm:$0xf]
        %v1469 = vld [vmem:[%s13 + $0x18] sm:$0xf]
        %v1470 = vld [vmem:[%s13 + $0x1c] sm:$0xf]
        %v1471 = vld [vmem:[%s13 + $0x20] sm:$0xf]
        %v1472 = vld [vmem:[%s13 + $0x24] sm:$0xf]
        %v1473 = vld [vmem:[%s13 + $0x28] sm:$0xf]
        %v1474 = vld [vmem:[%s13 + $0x2c] sm:$0xf]
        %v1475 = vld [vmem:[%s13 + $0x30] sm:$0xf]
        %v1476 = vld [vmem:[%s13 + $0x34] sm:$0xf]
        %v1477 = vld [vmem:[%s13 + $0x38] sm:$0xf]
        %v1478 = vld [vmem:[%s13 + $0x3c] sm:$0xf]
        %v1479 = vld [vmem:[%s14] sm:$0x1]
        %v1481 = vlaneseq
        %v1482 = vshrl.u32 %v1481, 7
        %v1483 = vsub.s32 0, %v1482
        %v1484 = vrot.slane %v1479, %v1483
        %v1502 = vunpack.c.l.b16 %v1463
        %v1503 = vunpack.c.l.b16 %v1464
        %v1504 = vunpack.c.l.b16 %v1465
        %v1505 = vunpack.c.l.b16 %v1466
        %v1506 = vunpack.c.l.b16 %v1467
        %v1507 = vunpack.c.l.b16 %v1468
        %v1508 = vunpack.c.l.b16 %v1469
        %v1509 = vunpack.c.l.b16 %v1470
        %v1510 = vunpack.c.l.b16 %v1471
        %v1511 = vunpack.c.l.b16 %v1472
        %v1512 = vunpack.c.l.b16 %v1473
        %v1513 = vunpack.c.l.b16 %v1474
        %v1514 = vunpack.c.l.b16 %v1475
        %v1515 = vunpack.c.l.b16 %v1476
        %v1516 = vunpack.c.l.b16 %v1477
        %v1517 = vunpack.c.l.b16 %v1478
        %v1518 = vpack.c.b16 %v1503, %v1502
        %v1519 = vpack.c.b16 %v1505, %v1504
        %v1520 = vpack.c.b16 %v1507, %v1506
        %v1521 = vpack.c.b16 %v1509, %v1508
        %v1522 = vpack.c.b16 %v1511, %v1510
        %v1523 = vpack.c.b16 %v1513, %v1512
        %v1524 = vpack.c.b16 %v1515, %v1514
        %v1525 = vpack.c.b16 %v1517, %v1516
        %1534 = vmatprep.subr.bf16.mxu0 0
        %1535 = vmatpush1.bf16.msra.mxu0 %v1518
        %1536 = vmatprep.subr.bf16.mxu0 0
        %1537 = vmatpush1.bf16.msra.mxu0 %v1519
        %1538 = vmatprep.subr.bf16.mxu0 0
        %1539 = vmatpush1.bf16.msra.mxu0 %v1520
        %1540 = vmatprep.subr.bf16.mxu0 0
        %1541 = vmatpush1.bf16.msra.mxu0 %v1521
        %1542 = vmatprep.subr.bf16.mxu0 0
        %1543 = vmatpush1.bf16.msra.mxu0 %v1522
        %1544 = vmatprep.subr.bf16.mxu0 0
        %1545 = vmatpush1.bf16.msra.mxu0 %v1523
        %1546 = vmatprep.subr.bf16.mxu0 0
        %1547 = vmatpush1.bf16.msra.mxu0 %v1524
        %1548 = vmatprep.subr.bf16.mxu0 0
        %1549 = vmatpush1.bf16.msra.mxu0 %v1525
        %1550 = vmatprep.subr.bf16.mxu0 0
        %1551 = vmatpush1.bf16.msra.mxu0 0
        %1552 = vmatprep.subr.bf16.mxu0 0
        %1553 = vmatpush1.bf16.msra.mxu0 0
        %1554 = vmatprep.subr.bf16.mxu0 0
        %1555 = vmatpush1.bf16.msra.mxu0 0
        %1556 = vmatprep.subr.bf16.mxu0 0
        %1557 = vmatpush1.bf16.msra.mxu0 0
        %1558 = vmatprep.subr.bf16.mxu0 0
        %1559 = vmatpush1.bf16.msra.mxu0 0
        %1560 = vmatprep.subr.bf16.mxu0 0
        %1561 = vmatpush1.bf16.msra.mxu0 0
        %1562 = vmatprep.subr.bf16.mxu0 0
        %1563 = vmatpush1.bf16.msra.mxu0 0
        %1564 = vmatprep.subr.bf16.mxu0 0
        %1565 = vmatpush1.bf16.msra.mxu0 0
        %1566 = vmatprep.mubr.bf16.mxu0 0
        %1567 = vmatmul.mubr.bf16.gmra.mrb[0].mxu0 %v1462
        %v1568 = vpop.f32.mrb[0].mxu0
        %v1569 = vadd.f32 %v1484, %v1568
        %v1570 = vpop.f32.mrb[0].mxu0
        %v1571 = vpop.f32.mrb[0].mxu0
        %v1572 = vpop.f32.mrb[0].mxu0
        %1573 = vdwg.mxu0
        %v1574 = vadd.f32 %v1360, %v1569
        %1575 = vst.msk [vmem:[%s569] sm:$0xff] %vm737, %v1574
        %s1576 = sand.u32 %s382, 1
        %s1577 = scalar_lea.sflag [#allocation7], %s1576
        %s1578 = sand.u32 %s382, 1
        %s1579 = smul.addr %s1578, 8
        %s1580 = scalar_lea.vmem [#allocation11], %s1579
        // Predicated region
        $region97: #{tpu_custom_call.1} parent=79 // pred_check
          %p1581 = pneg %p392
        $region98: #{tpu_custom_call.1} parent=79 // pred_check_branch
          %1583 = sbr.rel (%p1581) target = $region100
        $region99: #{tpu_custom_call.1} parent=79 // pred_region
          %s1585 = ssub.s32 128, 128
          %1586 = vsyncadd %s1577, %s1585
          %s1587 = sadd.s32 %s38, %s37
          %s1588 = smul.addr %s1587, 128
          %s1589 = scalar_lea.hbm %s15, %s1588
          %s1591 = sshll.u32 %s1580, 4
          %s1592 = int_to_ptr.vmem [resolvable:$true] %s1591
          %1594 = dma.vmem_to_hbm [thread:$0]  %s1592, 128, %s1589, %s1577
        $region100: #{tpu_custom_call.1} parent=79 // pred_fallthru
          _
      $region80: #{tpu_custom_call.1} parent=5 // pred_fallthru
        _
      %p1595 = scmp.le.s32.totalorder 2, %s28
      // Predicated region
      $region101: #{tpu_custom_call.1} parent=5 // pred_check
        %p1596 = pneg %p1595
      $region102: #{tpu_custom_call.1} parent=5 // pred_check_branch
        %1598 = sbr.rel (%p1596) target = $region104
      $region103: #{tpu_custom_call.1} parent=5 // pred_region
        %s1599 = ssub.s32 %s28, 2
        // Predicated region
        $region105: #{tpu_custom_call.1} parent=103 // pred_check
          %p1600 = pneg %p398
        $region106: #{tpu_custom_call.1} parent=103 // pred_check_branch
          %1602 = sbr.rel (%p1600) target = $region108
        $region107: #{tpu_custom_call.1} parent=103 // pred_region
          %s1603 = sand.u32 %s383, 1
          %s1604 = scalar_lea.sflag [#allocation7], %s1603
          %s1605 = sand.u32 %s383, 1
          %s1606 = smul.addr %s1605, 8
          %s1607 = scalar_lea.vmem [#allocation11], %s1606
          %1608 = dma.done %s1604, 128
        $region108: #{tpu_custom_call.1} parent=103 // pred_fallthru
          _
      $region104: #{tpu_custom_call.1} parent=5 // pred_fallthru
        _
    $region6: #{tpu_custom_call.1} parent=1 // loop_footer
      %s32 = sadd.s32 1, %s28
    $region7: #{tpu_custom_call.1} parent=1 // loop_footer_branch
      %27 = sbr.rel target = $region3
    $region8: #{tpu_custom_call.1} parent=1 // loop_exit
      _
    %1609 = vsyncpa [#allocation6], 1
    %s1610 = scalar_lea.sflag [#allocation6], 1
    %1611 = vsyncpa %s1610, 1
    %1612 = vsyncpa [#allocation9], 1
    %1613 = vsyncpa [#allocation7], 1
    %s1614 = scalar_lea.sflag [#allocation7], 1
    %1615 = vsyncpa %s1614, 1

// kernel: tpu_custom_call.1
$region0: #{tpu_custom_call.1}
  #allocation0 [shape = 'u32[]', space=smem, size = 0x4, offset = 0x4, fixed_abs, tag = 'smem constant byte address 0x4 - core index']
  #allocation1 [shape = 'u32[144,128]{1,0:T(1,128)}', space=vmem, size = 0x12000, scoped, tag = 'internal scratch']
  #allocation2 [shape = 'bf16[8,32]{1,0:T(8,128)(2,1)}', space=vmem, size = 0x800, scoped, tag = 'scratch operand']
  #allocation3 [shape = 'bf16[8,32]{1,0:T(8,128)(2,1)}', space=vmem, size = 0x800, scoped, tag = 'scratch operand']
  #allocation4 [shape = 'f32[8,32]{1,0:T(8,128)}', space=vmem, size = 0x1000, scoped, tag = 'scratch operand']
  %s0 = inlined_call_operand.vmem [shape: f32[2,8,32], index: 0, kind: input, shape index: {}]
  %s1 = inlined_call_operand.hbm [shape: bf16[2,8,32], index: 1, kind: input, shape index: {}]
  %s2 = inlined_call_operand.vmem [shape: f32[1,32], index: 2, kind: input, shape index: {}]
  %s3 = inlined_call_operand.vmem [shape: f32[1,32], index: 3, kind: input, shape index: {}]
  %s4 = inlined_call_operand.vmem [shape: bf16[32,32], index: 4, kind: input, shape index: {}]
  %s5 = inlined_call_operand.vmem [shape: bf16[32,32], index: 5, kind: input, shape index: {}]
  %s6 = inlined_call_operand.vmem [shape: bf16[32,32], index: 6, kind: input, shape index: {}]
  %s7 = inlined_call_operand.vmem [shape: bf16[32,32], index: 7, kind: input, shape index: {}]
  %s8 = inlined_call_operand.hbm [shape: f32[1,32], index: 8, kind: input, shape index: {}]
  %s9 = inlined_call_operand.hbm [shape: f32[1,32], index: 9, kind: input, shape index: {}]
  %s10 = inlined_call_operand.vmem [shape: f32[1,32], index: 10, kind: input, shape index: {}]
  %s11 = inlined_call_operand.vmem [shape: bf16[32,128], index: 11, kind: input, shape index: {}]
  %s12 = inlined_call_operand.vmem [shape: f32[1,128], index: 12, kind: input, shape index: {}]
  %s13 = inlined_call_operand.vmem [shape: bf16[128,32], index: 13, kind: input, shape index: {}]
  %s14 = inlined_call_operand.vmem [shape: f32[1,32], index: 14, kind: input, shape index: {}]
  %s15 = inlined_call_operand.hbm [shape: f32[2,8,32], index: 15, kind: output, shape index: {}]
  %s16 = sld [smem:[#allocation0]]
  $region109: #{tpu_custom_call.1} parent=0
    _
  %s18 = ssub.s32 1, %s16
  %s19 = scalar_select 0, %s18, %s16
  $region1: #{tpu_custom_call.1} parent=0
    #allocation5 [shape = 'u8[4096]{0}', space=vmem, size = 0x1000, scoped, tag = 'input window, operand 1']
    #allocation6 [shape = 's32[2]{0}', space=sflag, size = 0x8, scoped, tag = 'scoped memory for tpu_custom_call.1']
    #allocation7 [shape = 's32[2]{0}', space=sflag, size = 0x8, scoped, tag = 'scoped memory for tpu_custom_call.1']
    #allocation8 [shape = 'u8[512]{0}', space=vmem, size = 0x400, scoped, tag = 'input window, operand 8, single buffered']
    #allocation9 [shape = 's32[1]{0}', space=sflag, size = 0x4, scoped, tag = 'scoped memory for tpu_custom_call.1']
    #allocation10 [shape = 'u8[512]{0}', space=vmem, size = 0x400, scoped, tag = 'input window, operand 9, single buffered']
    #allocation11 [shape = 'u8[8192]{0}', space=vmem, size = 0x2000, scoped, tag = 'output window, operand 0']
    %20 = vsyncpa [#allocation6], 0
    %s21 = scalar_lea.sflag [#allocation6], 1
    %22 = vsyncpa %s21, 0
    %23 = vsyncpa [#allocation9], 0
    %24 = vsyncpa [#allocation7], 0
    %s25 = scalar_lea.sflag [#allocation7], 1
    %26 = vsyncpa %s25, 0
    loop: start=0, step=1, limit=4
    $region2: #{tpu_custom_call.1} parent=1 // loop_pre_header
      _
    $region3: #{tpu_custom_call.1} parent=1 // loop_header
      %s28 = sphi 0, %s32
      %p29 = scmp.ge.s32.totalorder %s28, 4
      %s35 = sphi 0, %s47
      %s36 = sphi 0, %s43
      %s37 = sphi 0, %s35
      %s38 = sphi 0, %s36
      %s39 = sphi 0, %s37
      %s40 = sphi 0, %s38
      %s52 = sphi 0, %s54
      %s55 = sphi 0, %s52
      %s56 = sphi 0, %s55
      %s72 = sphi 0, %s56
      %s78 = sphi 0, %s80
      %s81 = sphi 0, %s78
      %s82 = sphi 0, %s81
      %s98 = sphi 0, %s82
      %s102 = sphi 0, %s102
      %s104 = sphi 0, %s102
      %s105 = sphi 0, %s104
      %s119 = sphi 0, %s105
      %s123 = sphi 0, %s123
      %s125 = sphi 0, %s123
      %s126 = sphi 0, %s125
      %s140 = sphi 0, %s126
      %s144 = sphi 0, %s144
      %s146 = sphi 0, %s144
      %s147 = sphi 0, %s146
      %s161 = sphi 0, %s147
      %s165 = sphi 0, %s165
      %s167 = sphi 0, %s165
      %s168 = sphi 0, %s167
      %s182 = sphi 0, %s168
      %s186 = sphi 0, %s186
      %s188 = sphi 0, %s186
      %s189 = sphi 0, %s188
      %s203 = sphi 0, %s189
      %s207 = sphi 0, %s207
      %s209 = sphi 0, %s207
      %s210 = sphi 0, %s209
      %s224 = sphi 0, %s210
      %s228 = sphi 0, %s228
      %s230 = sphi 0, %s228
      %s231 = sphi 0, %s230
      %s245 = sphi 0, %s231
      %s249 = sphi 0, %s249
      %s251 = sphi 0, %s249
      %s252 = sphi 0, %s251
      %s266 = sphi 0, %s252
      %s270 = sphi 0, %s270
      %s272 = sphi 0, %s270
      %s273 = sphi 0, %s272
      %s287 = sphi 0, %s273
      %s291 = sphi 0, %s291
      %s293 = sphi 0, %s291
      %s294 = sphi 0, %s293
      %s308 = sphi 0, %s294
      %s312 = sphi 0, %s312
      %s314 = sphi 0, %s312
      %s315 = sphi 0, %s314
      %s329 = sphi 0, %s315
      %s333 = sphi 0, %s333
      %s335 = sphi 0, %s333
      %s336 = sphi 0, %s335
      %s350 = sphi 0, %s336
      %s354 = sphi 0, %s354
      %s356 = sphi 0, %s354
      %s357 = sphi 0, %s356
      %s371 = sphi 0, %s357
      %s379 = sphi 0, %s381
      %s382 = sphi 0, %s379
      %s383 = sphi 0, %s382
      %s399 = sphi 0, %s383
    $region4: #{tpu_custom_call.1} parent=1 // loop_header_branch
      %31 = sbr.rel (%p29) target = $region8
    $region5: #{tpu_custom_call.1} parent=1 // loop_body
      %s33 = ssub.s32 %s28, 1
      %s34 = ssub.s32 %s28, 2
      %s41 = sadd.s32 1, %s36
      %p42 = scmp.ge.s32.totalorder %s41, 1
      %s43 = scalar_select %p42, 0, %s41
      %s44 = sadd.s32 1, %s35
      %s45 = scalar_select %p42, %s44, %s35
      %p46 = scmp.ge.s32.totalorder %s45, 2
      %s47 = scalar_select %p46, 0, %s45
      %s48 = ssub.s32 %s35, %s47
      %s49 = ssub.s32 %s36, %s43
      %s50 = sor.u32 %s48, %s49
      %p51 = scmp.eq.s32.totalorder %s50, 0
      %s53 = sadd.s32 %s52, 1
      %s54 = scalar_select %p51, %s52, %s53
      %p57 = pneg %p51
      %p58 = scmp.eq.s32.totalorder %s28, 1
      %p59 = por %p57, %p58
      %p60 = scmp.ne.s32.totalorder %s52, %s55
      %p61 = scmp.eq.s32.totalorder %s28, 0
      %p62 = por %p60, %p61
      %p63 = scmp.ne.s32.totalorder %s52, %s55
      %p64 = scmp.eq.s32.totalorder %s33, 1
      %p65 = por %p63, %p64
      %p66 = scmp.ne.s32.totalorder %s55, %s56
      %p67 = scmp.eq.s32.totalorder %s33, 0
      %p68 = por %p66, %p67
      %p69 = scmp.ne.s32.totalorder %s55, %s56
      %p70 = scmp.eq.s32.totalorder %s34, 1
      %p71 = por %p69, %p70
      %p73 = scmp.ne.s32.totalorder %s56, %s72
      %p74 = scmp.eq.s32.totalorder %s34, 0
      %p75 = por %p73, %p74
      %s76 = ssub.s32 %s35, %s47
      %p77 = scmp.eq.s32.totalorder %s76, 0
      %s79 = sadd.s32 %s78, 1
      %s80 = scalar_select %p77, %s78, %s79
      %p83 = pneg %p77
      %p84 = scmp.eq.s32.totalorder %s28, 1
      %p85 = por %p83, %p84
      %p86 = scmp.ne.s32.totalorder %s78, %s81
      %p87 = scmp.eq.s32.totalorder %s28, 0
      %p88 = por %p86, %p87
      %p89 = scmp.ne.s32.totalorder %s78, %s81
      %p90 = scmp.eq.s32.totalorder %s33, 1
      %p91 = por %p89, %p90
      %p92 = scmp.ne.s32.totalorder %s81, %s82
      %p93 = scmp.eq.s32.totalorder %s33, 0
      %p94 = por %p92, %p93
      %p95 = scmp.ne.s32.totalorder %s81, %s82
      %p96 = scmp.eq.s32.totalorder %s34, 1
      %p97 = por %p95, %p96
      %p99 = scmp.ne.s32.totalorder %s82, %s98
      %p100 = scmp.eq.s32.totalorder %s34, 0
      %p101 = por %p99, %p100
      %s103 = sadd.s32 %s102, 1
      %p106 = scmp.eq.s32.totalorder %s28, 1
      %p107 = scmp.ne.s32.totalorder %s102, %s104
      %p108 = scmp.eq.s32.totalorder %s28, 0
      %p109 = por %p107, %p108
      %p110 = scmp.ne.s32.totalorder %s102, %s104
      %p111 = scmp.eq.s32.totalorder %s33, 1
      %p112 = por %p110, %p111
      %p113 = scmp.ne.s32.totalorder %s104, %s105
      %p114 = scmp.eq.s32.totalorder %s33, 0
      %p115 = por %p113, %p114
      %p116 = scmp.ne.s32.totalorder %s104, %s105
      %p117 = scmp.eq.s32.totalorder %s34, 1
      %p118 = por %p116, %p117
      %p120 = scmp.ne.s32.totalorder %s105, %s119
      %p121 = scmp.eq.s32.totalorder %s34, 0
      %p122 = por %p120, %p121
      %s124 = sadd.s32 %s123, 1
      %p127 = scmp.eq.s32.totalorder %s28, 1
      %p128 = scmp.ne.s32.totalorder %s123, %s125
      %p129 = scmp.eq.s32.totalorder %s28, 0
      %p130 = por %p128, %p129
      %p131 = scmp.ne.s32.totalorder %s123, %s125
      %p132 = scmp.eq.s32.totalorder %s33, 1
      %p133 = por %p131, %p132
      %p134 = scmp.ne.s32.totalorder %s125, %s126
      %p135 = scmp.eq.s32.totalorder %s33, 0
      %p136 = por %p134, %p135
      %p137 = scmp.ne.s32.totalorder %s125, %s126
      %p138 = scmp.eq.s32.totalorder %s34, 1
      %p139 = por %p137, %p138
      %p141 = scmp.ne.s32.totalorder %s126, %s140
      %p142 = scmp.eq.s32.totalorder %s34, 0
      %p143 = por %p141, %p142
      %s145 = sadd.s32 %s144, 1
      %p148 = scmp.eq.s32.totalorder %s28, 1
      %p149 = scmp.ne.s32.totalorder %s144, %s146
      %p150 = scmp.eq.s32.totalorder %s28, 0
      %p151 = por %p149, %p150
      %p152 = scmp.ne.s32.totalorder %s144, %s146
      %p153 = scmp.eq.s32.totalorder %s33, 1
      %p154 = por %p152, %p153
      %p155 = scmp.ne.s32.totalorder %s146, %s147
      %p156 = scmp.eq.s32.totalorder %s33, 0
      %p157 = por %p155, %p156
      %p158 = scmp.ne.s32.totalorder %s146, %s147
      %p159 = scmp.eq.s32.totalorder %s34, 1
      %p160 = por %p158, %p159
      %p162 = scmp.ne.s32.totalorder %s147, %s161
      %p163 = scmp.eq.s32.totalorder %s34, 0
      %p164 = por %p162, %p163
      %s166 = sadd.s32 %s165, 1
      %p169 = scmp.eq.s32.totalorder %s28, 1
      %p170 = scmp.ne.s32.totalorder %s165, %s167
      %p171 = scmp.eq.s32.totalorder %s28, 0
      %p172 = por %p170, %p171
      %p173 = scmp.ne.s32.totalorder %s165, %s167
      %p174 = scmp.eq.s32.totalorder %s33, 1
      %p175 = por %p173, %p174
      %p176 = scmp.ne.s32.totalorder %s167, %s168
      %p177 = scmp.eq.s32.totalorder %s33, 0
      %p178 = por %p176, %p177
      %p179 = scmp.ne.s32.totalorder %s167, %s168
      %p180 = scmp.eq.s32.totalorder %s34, 1
      %p181 = por %p179, %p180
      %p183 = scmp.ne.s32.totalorder %s168, %s182
      %p184 = scmp.eq.s32.totalorder %s34, 0
      %p185 = por %p183, %p184
      %s187 = sadd.s32 %s186, 1
      %p190 = scmp.eq.s32.totalorder %s28, 1
      %p191 = scmp.ne.s32.totalorder %s186, %s188
      %p192 = scmp.eq.s32.totalorder %s28, 0
      %p193 = por %p191, %p192
      %p194 = scmp.ne.s32.totalorder %s186, %s188
      %p195 = scmp.eq.s32.totalorder %s33, 1
      %p196 = por %p194, %p195
      %p197 = scmp.ne.s32.totalorder %s188, %s189
      %p198 = scmp.eq.s32.totalorder %s33, 0
      %p199 = por %p197, %p198
      %p200 = scmp.ne.s32.totalorder %s188, %s189
      %p201 = scmp.eq.s32.totalorder %s34, 1
      %p202 = por %p200, %p201
      %p204 = scmp.ne.s32.totalorder %s189, %s203
      %p205 = scmp.eq.s32.totalorder %s34, 0
      %p206 = por %p204, %p205
      %s208 = sadd.s32 %s207, 1
      %p211 = scmp.eq.s32.totalorder %s28, 1
      %p212 = scmp.ne.s32.totalorder %s207, %s209
      %p213 = scmp.eq.s32.totalorder %s28, 0
      %p214 = por %p212, %p213
      %p215 = scmp.ne.s32.totalorder %s207, %s209
      %p216 = scmp.eq.s32.totalorder %s33, 1
      %p217 = por %p215, %p216
      %p218 = scmp.ne.s32.totalorder %s209, %s210
      %p219 = scmp.eq.s32.totalorder %s33, 0
      %p220 = por %p218, %p219
      %p221 = scmp.ne.s32.totalorder %s209, %s210
      %p222 = scmp.eq.s32.totalorder %s34, 1
      %p223 = por %p221, %p222
      %p225 = scmp.ne.s32.totalorder %s210, %s224
      %p226 = scmp.eq.s32.totalorder %s34, 0
      %p227 = por %p225, %p226
      %s229 = sadd.s32 %s228, 1
      %p232 = scmp.eq.s32.totalorder %s28, 1
      %p233 = scmp.ne.s32.totalorder %s228, %s230
      %p234 = scmp.eq.s32.totalorder %s28, 0
      %p235 = por %p233, %p234
      %p236 = scmp.ne.s32.totalorder %s228, %s230
      %p237 = scmp.eq.s32.totalorder %s33, 1
      %p238 = por %p236, %p237
      %p239 = scmp.ne.s32.totalorder %s230, %s231
      %p240 = scmp.eq.s32.totalorder %s33, 0
      %p241 = por %p239, %p240
      %p242 = scmp.ne.s32.totalorder %s230, %s231
      %p243 = scmp.eq.s32.totalorder %s34, 1
      %p244 = por %p242, %p243
      %p246 = scmp.ne.s32.totalorder %s231, %s245
      %p247 = scmp.eq.s32.totalorder %s34, 0
      %p248 = por %p246, %p247
      %s250 = sadd.s32 %s249, 1
      %p253 = scmp.eq.s32.totalorder %s28, 1
      %p254 = scmp.ne.s32.totalorder %s249, %s251
      %p255 = scmp.eq.s32.totalorder %s28, 0
      %p256 = por %p254, %p255
      %p257 = scmp.ne.s32.totalorder %s249, %s251
      %p258 = scmp.eq.s32.totalorder %s33, 1
      %p259 = por %p257, %p258
      %p260 = scmp.ne.s32.totalorder %s251, %s252
      %p261 = scmp.eq.s32.totalorder %s33, 0
      %p262 = por %p260, %p261
      %p263 = scmp.ne.s32.totalorder %s251, %s252
      %p264 = scmp.eq.s32.totalorder %s34, 1
      %p265 = por %p263, %p264
      %p267 = scmp.ne.s32.totalorder %s252, %s266
      %p268 = scmp.eq.s32.totalorder %s34, 0
      %p269 = por %p267, %p268
      %s271 = sadd.s32 %s270, 1
      %p274 = scmp.eq.s32.totalorder %s28, 1
      %p275 = scmp.ne.s32.totalorder %s270, %s272
      %p276 = scmp.eq.s32.totalorder %s28, 0
      %p277 = por %p275, %p276
      %p278 = scmp.ne.s32.totalorder %s270, %s272
      %p279 = scmp.eq.s32.totalorder %s33, 1
      %p280 = por %p278, %p279
      %p281 = scmp.ne.s32.totalorder %s272, %s273
      %p282 = scmp.eq.s32.totalorder %s33, 0
      %p283 = por %p281, %p282
      %p284 = scmp.ne.s32.totalorder %s272, %s273
      %p285 = scmp.eq.s32.totalorder %s34, 1
      %p286 = por %p284, %p285
      %p288 = scmp.ne.s32.totalorder %s273, %s287
      %p289 = scmp.eq.s32.totalorder %s34, 0
      %p290 = por %p288, %p289
      %s292 = sadd.s32 %s291, 1
      %p295 = scmp.eq.s32.totalorder %s28, 1
      %p296 = scmp.ne.s32.totalorder %s291, %s293
      %p297 = scmp.eq.s32.totalorder %s28, 0
      %p298 = por %p296, %p297
      %p299 = scmp.ne.s32.totalorder %s291, %s293
      %p300 = scmp.eq.s32.totalorder %s33, 1
      %p301 = por %p299, %p300
      %p302 = scmp.ne.s32.totalorder %s293, %s294
      %p303 = scmp.eq.s32.totalorder %s33, 0
      %p304 = por %p302, %p303
      %p305 = scmp.ne.s32.totalorder %s293, %s294
      %p306 = scmp.eq.s32.totalorder %s34, 1
      %p307 = por %p305, %p306
      %p309 = scmp.ne.s32.totalorder %s294, %s308
      %p310 = scmp.eq.s32.totalorder %s34, 0
      %p311 = por %p309, %p310
      %s313 = sadd.s32 %s312, 1
      %p316 = scmp.eq.s32.totalorder %s28, 1
      %p317 = scmp.ne.s32.totalorder %s312, %s314
      %p318 = scmp.eq.s32.totalorder %s28, 0
      %p319 = por %p317, %p318
      %p320 = scmp.ne.s32.totalorder %s312, %s314
      %p321 = scmp.eq.s32.totalorder %s33, 1
      %p322 = por %p320, %p321
      %p323 = scmp.ne.s32.totalorder %s314, %s315
      %p324 = scmp.eq.s32.totalorder %s33, 0
      %p325 = por %p323, %p324
      %p326 = scmp.ne.s32.totalorder %s314, %s315
      %p327 = scmp.eq.s32.totalorder %s34, 1
      %p328 = por %p326, %p327
      %p330 = scmp.ne.s32.totalorder %s315, %s329
      %p331 = scmp.eq.s32.totalorder %s34, 0
      %p332 = por %p330, %p331
      %s334 = sadd.s32 %s333, 1
      %p337 = scmp.eq.s32.totalorder %s28, 1
      %p338 = scmp.ne.s32.totalorder %s333, %s335
      %p339 = scmp.eq.s32.totalorder %s28, 0
      %p340 = por %p338, %p339
      %p341 = scmp.ne.s32.totalorder %s333, %s335
      %p342 = scmp.eq.s32.totalorder %s33, 1
      %p343 = por %p341, %p342
      %p344 = scmp.ne.s32.totalorder %s335, %s336
      %p345 = scmp.eq.s32.totalorder %s33, 0
      %p346 = por %p344, %p345
      %p347 = scmp.ne.s32.totalorder %s335, %s336
      %p348 = scmp.eq.s32.totalorder %s34, 1
      %p349 = por %p347, %p348
      %p351 = scmp.ne.s32.totalorder %s336, %s350
      %p352 = scmp.eq.s32.totalorder %s34, 0
      %p353 = por %p351, %p352
      %s355 = sadd.s32 %s354, 1
      %p358 = scmp.eq.s32.totalorder %s28, 1
      %p359 = scmp.ne.s32.totalorder %s354, %s356
      %p360 = scmp.eq.s32.totalorder %s28, 0
      %p361 = por %p359, %p360
      %p362 = scmp.ne.s32.totalorder %s354, %s356
      %p363 = scmp.eq.s32.totalorder %s33, 1
      %p364 = por %p362, %p363
      %p365 = scmp.ne.s32.totalorder %s356, %s357
      %p366 = scmp.eq.s32.totalorder %s33, 0
      %p367 = por %p365, %p366
      %p368 = scmp.ne.s32.totalorder %s356, %s357
      %p369 = scmp.eq.s32.totalorder %s34, 1
      %p370 = por %p368, %p369
      %p372 = scmp.ne.s32.totalorder %s357, %s371
      %p373 = scmp.eq.s32.totalorder %s34, 0
      %p374 = por %p372, %p373
      %s375 = ssub.s32 %s35, %s47
      %s376 = ssub.s32 %s36, %s43
      %s377 = sor.u32 %s375, %s376
      %p378 = scmp.eq.s32.totalorder %s377, 0
      %s380 = sadd.s32 %s379, 1
      %s381 = scalar_select %p378, %s379, %s380
      %p384 = pneg %p378
      %p385 = scmp.eq.s32.totalorder %s28, 1
      %p386 = por %p384, %p385
      %p387 = scmp.ne.s32.totalorder %s379, %s382
      %p388 = scmp.eq.s32.totalorder %s28, 0
      %p389 = por %p387, %p388
      %p390 = scmp.ne.s32.totalorder %s379, %s382
      %p391 = scmp.eq.s32.totalorder %s33, 1
      %p392 = por %p390, %p391
      %p393 = scmp.ne.s32.totalorder %s382, %s383
      %p394 = scmp.eq.s32.totalorder %s33, 0
      %p395 = por %p393, %p394
      %p396 = scmp.ne.s32.totalorder %s382, %s383
      %p397 = scmp.eq.s32.totalorder %s34, 1
      %p398 = por %p396, %p397
      %p400 = scmp.ne.s32.totalorder %s383, %s399
      %p401 = scmp.eq.s32.totalorder %s34, 0
      %p402 = por %p400, %p401
      %p403 = scmp.le.s32.totalorder 1, %s28
      %p404 = scmp.lt.s32.totalorder %s28, 3
      %p405 = pnand %p403, %p404
      %p406 = pneg %p405
      // Predicated region
      $region9: #{tpu_custom_call.1} parent=5 // pred_check
        _
      $region10: #{tpu_custom_call.1} parent=5 // pred_check_branch
        %408 = sbr.rel (%p405) target = $region12
      $region11: #{tpu_custom_call.1} parent=5 // pred_region
        %s409 = ssub.s32 %s28, 1
        // Predicated region
        $region13: #{tpu_custom_call.1} parent=11 // pred_check
          %p410 = pneg %p115
        $region14: #{tpu_custom_call.1} parent=11 // pred_check_branch
          %412 = sbr.rel (%p410) target = $region16
        $region15: #{tpu_custom_call.1} parent=11 // pred_region
          _
        $region16: #{tpu_custom_call.1} parent=11 // pred_fallthru
          _
        // Predicated region
        $region17: #{tpu_custom_call.1} parent=11 // pred_check
          %p413 = pneg %p136
        $region18: #{tpu_custom_call.1} parent=11 // pred_check_branch
          %415 = sbr.rel (%p413) target = $region20
        $region19: #{tpu_custom_call.1} parent=11 // pred_region
          _
        $region20: #{tpu_custom_call.1} parent=11 // pred_fallthru
          _
        // Predicated region
        $region21: #{tpu_custom_call.1} parent=11 // pred_check
          %p416 = pneg %p157
        $region22: #{tpu_custom_call.1} parent=11 // pred_check_branch
          %418 = sbr.rel (%p416) target = $region24
        $region23: #{tpu_custom_call.1} parent=11 // pred_region
          _
        $region24: #{tpu_custom_call.1} parent=11 // pred_fallthru
          _
        // Predicated region
        $region25: #{tpu_custom_call.1} parent=11 // pred_check
          %p419 = pneg %p178
        $region26: #{tpu_custom_call.1} parent=11 // pred_check_branch
          %421 = sbr.rel (%p419) target = $region28
        $region27: #{tpu_custom_call.1} parent=11 // pred_region
          _
        $region28: #{tpu_custom_call.1} parent=11 // pred_fallthru
          _
        // Predicated region
        $region29: #{tpu_custom_call.1} parent=11 // pred_check
          %p422 = pneg %p199
        $region30: #{tpu_custom_call.1} parent=11 // pred_check_branch
          %424 = sbr.rel (%p422) target = $region32
        $region31: #{tpu_custom_call.1} parent=11 // pred_region
          _
        $region32: #{tpu_custom_call.1} parent=11 // pred_fallthru
          _
        // Predicated region
        $region33: #{tpu_custom_call.1} parent=11 // pred_check
          %p425 = pneg %p220
        $region34: #{tpu_custom_call.1} parent=11 // pred_check_branch
          %427 = sbr.rel (%p425) target = $region36
        $region35: #{tpu_custom_call.1} parent=11 // pred_region
          _
        $region36: #{tpu_custom_call.1} parent=11 // pred_fallthru
          _
        // Predicated region
        $region37: #{tpu_custom_call.1} parent=11 // pred_check
          %p428 = pneg %p241
        $region38: #{tpu_custom_call.1} parent=11 // pred_check_branch
          %430 = sbr.rel (%p428) target = $region40
        $region39: #{tpu_custom_call.1} parent=11 // pred_region
          %s432 = ssub.s32 16, 16
          %433 = vsyncadd [#allocation9], %s432
          %s435 = sshll.u32 [#allocation8], 4
          %s436 = int_to_ptr.vmem [resolvable:$true] %s435
          %438 = dma.hbm_to_vmem [thread:$0]  %s8, 16, %s436, [#allocation9]
        $region40: #{tpu_custom_call.1} parent=11 // pred_fallthru
          _
        // Predicated region
        $region41: #{tpu_custom_call.1} parent=11 // pred_check
          %p439 = pneg %p262
        $region42: #{tpu_custom_call.1} parent=11 // pred_check_branch
          %441 = sbr.rel (%p439) target = $region44
        $region43: #{tpu_custom_call.1} parent=11 // pred_region
          %s443 = ssub.s32 16, 16
          %444 = vsyncadd [#allocation9], %s443
          %s446 = sshll.u32 [#allocation10], 4
          %s447 = int_to_ptr.vmem [resolvable:$true] %s446
          %449 = dma.hbm_to_vmem [thread:$0]  %s9, 16, %s447, [#allocation9]
        $region44: #{tpu_custom_call.1} parent=11 // pred_fallthru
          _
        // Predicated region
        $region45: #{tpu_custom_call.1} parent=11 // pred_check
          %p450 = pneg %p283
        $region46: #{tpu_custom_call.1} parent=11 // pred_check_branch
          %452 = sbr.rel (%p450) target = $region48
        $region47: #{tpu_custom_call.1} parent=11 // pred_region
          _
        $region48: #{tpu_custom_call.1} parent=11 // pred_fallthru
          _
        // Predicated region
        $region49: #{tpu_custom_call.1} parent=11 // pred_check
          %p453 = pneg %p304
        $region50: #{tpu_custom_call.1} parent=11 // pred_check_branch
          %455 = sbr.rel (%p453) target = $region52
        $region51: #{tpu_custom_call.1} parent=11 // pred_region
          _
        $region52: #{tpu_custom_call.1} parent=11 // pred_fallthru
          _
        // Predicated region
        $region53: #{tpu_custom_call.1} parent=11 // pred_check
          %p456 = pneg %p325
        $region54: #{tpu_custom_call.1} parent=11 // pred_check_branch
          %458 = sbr.rel (%p456) target = $region56
        $region55: #{tpu_custom_call.1} parent=11 // pred_region
          _
        $region56: #{tpu_custom_call.1} parent=11 // pred_fallthru
          _
        // Predicated region
        $region57: #{tpu_custom_call.1} parent=11 // pred_check
          %p459 = pneg %p346
        $region58: #{tpu_custom_call.1} parent=11 // pred_check_branch
          %461 = sbr.rel (%p459) target = $region60
        $region59: #{tpu_custom_call.1} parent=11 // pred_region
          _
        $region60: #{tpu_custom_call.1} parent=11 // pred_fallthru
          _
        // Predicated region
        $region61: #{tpu_custom_call.1} parent=11 // pred_check
          %p462 = pneg %p367
        $region62: #{tpu_custom_call.1} parent=11 // pred_check_branch
          %464 = sbr.rel (%p462) target = $region64
        $region63: #{tpu_custom_call.1} parent=11 // pred_region
          _
        $region64: #{tpu_custom_call.1} parent=11 // pred_fallthru
          _
      $region12: #{tpu_custom_call.1} parent=5 // pred_fallthru
        _
      %p465 = scmp.lt.s32.totalorder %s28, 2
      // Predicated region
      $region65: #{tpu_custom_call.1} parent=5 // pred_check
        %p466 = pneg %p465
      $region66: #{tpu_custom_call.1} parent=5 // pred_check_branch
        %468 = sbr.rel (%p466) target = $region68
      $region67: #{tpu_custom_call.1} parent=5 // pred_region
        // Predicated region
        $region69: #{tpu_custom_call.1} parent=67 // pred_check
          %p469 = pneg %p62
        $region70: #{tpu_custom_call.1} parent=67 // pred_check_branch
          %471 = sbr.rel (%p469) target = $region72
        $region71: #{tpu_custom_call.1} parent=67 // pred_region
          %p472 = scmp.lt.s32.totalorder %s35, 1
          %s473 = scalar_select %p472, %s35, 1
          %p474 = scmp.lt.s32.totalorder %s36, 0
          %s475 = scalar_select %p474, %s36, 0
          %s476 = sadd.s32 %s475, %s473
          %s477 = smul.addr %s476, 8
          %s478 = scalar_lea.vmem %s0, %s477
        $region72: #{tpu_custom_call.1} parent=67 // pred_fallthru
          _
        // Predicated region
        $region73: #{tpu_custom_call.1} parent=67 // pred_check
          %p479 = pneg %p88
        $region74: #{tpu_custom_call.1} parent=67 // pred_check_branch
          %481 = sbr.rel (%p479) target = $region76
        $region75: #{tpu_custom_call.1} parent=67 // pred_region
          %s482 = sand.u32 %s78, 1
          %s483 = scalar_lea.sflag [#allocation6], %s482
          %s484 = sand.u32 %s78, 1
          %s485 = smul.addr %s484, 4
          %s486 = scalar_lea.vmem [#allocation5], %s485
          %s488 = ssub.s32 64, 64
          %489 = vsyncadd %s483, %s488
          %s490 = smul.addr %s35, 64
          %s491 = scalar_lea.hbm %s1, %s490
          %s493 = sshll.u32 %s486, 4
          %s494 = int_to_ptr.vmem [resolvable:$true] %s493
          %496 = dma.hbm_to_vmem [thread:$0]  %s491, 64, %s494, %s483
        $region76: #{tpu_custom_call.1} parent=67 // pred_fallthru
          _
      $region68: #{tpu_custom_call.1} parent=5 // pred_fallthru
        _
      %p497 = scmp.le.s32.totalorder 1, %s28
      %p498 = scmp.lt.s32.totalorder %s28, 3
      %p499 = pnand %p497, %p498
      %p500 = pneg %p499
      // Predicated region
      $region77: #{tpu_custom_call.1} parent=5 // pred_check
        _
      $region78: #{tpu_custom_call.1} parent=5 // pred_check_branch
        %502 = sbr.rel (%p499) target = $region80
      $region79: #{tpu_custom_call.1} parent=5 // pred_region
        %s503 = ssub.s32 %s28, 1
        %s504 = sand.u32 %s81, 1
        %s505 = scalar_lea.sflag [#allocation6], %s504
        %s506 = sand.u32 %s81, 1
        %s507 = smul.addr %s506, 4
        %s508 = scalar_lea.vmem [#allocation5], %s507
        // Predicated region
        $region81: #{tpu_custom_call.1} parent=79 // pred_check
          %p509 = pneg %p94
        $region82: #{tpu_custom_call.1} parent=79 // pred_check_branch
          %511 = sbr.rel (%p509) target = $region84
        $region83: #{tpu_custom_call.1} parent=79 // pred_region
          %512 = dma.done %s505, 64
        $region84: #{tpu_custom_call.1} parent=79 // pred_fallthru
          _
        // Predicated region
        $region85: #{tpu_custom_call.1} parent=79 // pred_check
          %p513 = pneg %p241
        $region86: #{tpu_custom_call.1} parent=79 // pred_check_branch
          %515 = sbr.rel (%p513) target = $region88
        $region87: #{tpu_custom_call.1} parent=79 // pred_region
          %516 = dma.done [#allocation9], 16
        $region88: #{tpu_custom_call.1} parent=79 // pred_fallthru
          _
        // Predicated region
        $region89: #{tpu_custom_call.1} parent=79 // pred_check
          %p517 = pneg %p262
        $region90: #{tpu_custom_call.1} parent=79 // pred_check_branch
          %519 = sbr.rel (%p517) target = $region92
        $region91: #{tpu_custom_call.1} parent=79 // pred_region
          %520 = dma.done [#allocation9], 16
        $region92: #{tpu_custom_call.1} parent=79 // pred_fallthru
          _
        %p521 = scmp.lt.s32.totalorder %s37, 1
        %s522 = scalar_select %p521, %s37, 1
        %p523 = scmp.lt.s32.totalorder %s38, 0
        %s524 = scalar_select %p523, %s38, 0
        %s525 = sadd.s32 %s524, %s522
        %s526 = smul.addr %s525, 8
        %s527 = scalar_lea.vmem %s0, %s526
        %p528 = pneg %p68
        %p529 = pneg %p65
        %s530 = sand.u32 %s81, 1
        %s531 = scalar_lea.sflag [#allocation6], %s530
        %s532 = sand.u32 %s81, 1
        %s533 = smul.addr %s532, 4
        %s534 = scalar_lea.vmem [#allocation5], %s533
        %p535 = pneg %p94
        %p536 = pneg %p91
        %p537 = pneg %p115
        %p538 = pneg %p112
        %p539 = pneg %p136
        %p540 = pneg %p133
        %p541 = pneg %p157
        %p542 = pneg %p154
        %p543 = pneg %p178
        %p544 = pneg %p175
        %p545 = pneg %p199
        %p546 = pneg %p196
        %p547 = pneg %p220
        %p548 = pneg %p217
        %p549 = pneg %p241
        %p550 = pneg %p238
        %p551 = pneg %p262
        %p552 = pneg %p259
        %p553 = pneg %p283
        %p554 = pneg %p280
        %p555 = pneg %p304
        %p556 = pneg %p301
        %p557 = pneg %p325
        %p558 = pneg %p322
        %p559 = pneg %p346
        %p560 = pneg %p343
        %p561 = pneg %p367
        %p562 = pneg %p364
        %p563 = pneg %p395
        %p564 = pneg %p392
        %s565 = sand.u32 %s382, 1
        %s566 = scalar_lea.sflag [#allocation7], %s565
        %s567 = sand.u32 %s382, 1
        %s568 = smul.addr %s567, 8
        %s569 = scalar_lea.vmem [#allocation11], %s568
        %p570 = scmp.lt.s32.totalorder %s37, 1
        %s571 = scalar_select %p570, %s37, 1
        %p572 = scmp.lt.s32.totalorder %s38, 0
        %s573 = scalar_select %p572, %s38, 0
        %s574 = sadd.s32 %s573, %s571
        %s575 = smul.addr %s574, 8
        %s576 = scalar_lea.vmem %s0, %s575
        %v578 = vld [vmem:[%s576] sm:$0xff]
        %v579 = vld [vmem:[%s2] sm:$0x1]
        %v580 = vld [vmem:[%s3] sm:$0x1]
        %p581 = scmp.eq.s32.totalorder %s38, 0
        // Predicated region
        $region93: #{tpu_custom_call.1} parent=79 // pred_check
          %p582 = pneg %p581
        $region94: #{tpu_custom_call.1} parent=79 // pred_check_branch
          %584 = sbr.rel (%p582) target = $region96
        $region95: #{tpu_custom_call.1} parent=79 // pred_region
          %v585 = vld [vmem:[%s508] sm:$0xf]
          %v586 = vunpack.c.l.bf16 %v585
          %vm587 = vcmask 261120
          %v588 = vsel %vm587, %v586, 0.0
          %589 = vadd.xlane.f32.xlu0 %v588
          %v590 = vpop.xlane.xlu0 %589
          %v591 = vrcp.pop 32.0
          %v592 = vmul.f32 %v590, %v591
          %v593 = vsub.f32 %v586, %v592
          %v594 = vmul.f32 %v593, %v593
          %v595 = vsel %vm587, %v594, 0.0
          %596 = vadd.xlane.f32.xlu0 %v595
          %v597 = vpop.xlane.xlu0 %596
          %v598 = vmul.f32 %v597, %v591
          %v599 = vadd.f32 %v598, 1e-05
          %v600 = vrsqrt.pop %v599
          %v601 = vmul.f32 %v593, %v600
          %v603 = vlaneseq
          %v604 = vshrl.u32 %v603, 7
          %v605 = vsub.s32 0, %v604
          %v606 = vrot.slane %v579, %v605
          %v608 = vmul.f32 %v601, %v606
          %v610 = vlaneseq
          %v611 = vshrl.u32 %v610, 7
          %v612 = vsub.s32 0, %v611
          %v613 = vrot.slane %v580, %v612
          %v615 = vadd.f32 %v608, %v613
          %v616 = vpack.c.bf16 %v615, %v615
          %v617 = vld [vmem:[%s5] sm:$0xf]
          %v618 = vld [vmem:[%s5 + $0x4] sm:$0xf]
          %v619 = vld [vmem:[%s5 + $0x8] sm:$0xf]
          %v620 = vld [vmem:[%s5 + $0xc] sm:$0xf]
          %v625 = vunpack.c.l.b16 %v617
          %v626 = vunpack.c.l.b16 %v618
          %v627 = vunpack.c.l.b16 %v619
          %v628 = vunpack.c.l.b16 %v620
          %v629 = vpack.c.b16 %v626, %v625
          %v630 = vpack.c.b16 %v628, %v627
          %v634 = vsel %vm587, %v616, 0
          %636 = vmatprep.subr.bf16.mxu0 0
          %637 = vmatpush1.bf16.msra.mxu0 %v629
          %638 = vmatprep.subr.bf16.mxu0 0
          %639 = vmatpush1.bf16.msra.mxu0 %v630
          %640 = vmatprep.subr.bf16.mxu0 0
          %641 = vmatpush1.bf16.msra.mxu0 0
          %642 = vmatprep.subr.bf16.mxu0 0
          %643 = vmatpush1.bf16.msra.mxu0 0
          %644 = vmatprep.subr.bf16.mxu0 0
          %645 = vmatpush1.bf16.msra.mxu0 0
          %646 = vmatprep.subr.bf16.mxu0 0
          %647 = vmatpush1.bf16.msra.mxu0 0
          %648 = vmatprep.subr.bf16.mxu0 0
          %649 = vmatpush1.bf16.msra.mxu0 0
          %650 = vmatprep.subr.bf16.mxu0 0
          %651 = vmatpush1.bf16.msra.mxu0 0
          %652 = vmatprep.subr.bf16.mxu0 0
          %653 = vmatpush1.bf16.msra.mxu0 0
          %654 = vmatprep.subr.bf16.mxu0 0
          %655 = vmatpush1.bf16.msra.mxu0 0
          %656 = vmatprep.subr.bf16.mxu0 0
          %657 = vmatpush1.bf16.msra.mxu0 0
          %658 = vmatprep.subr.bf16.mxu0 0
          %659 = vmatpush1.bf16.msra.mxu0 0
          %660 = vmatprep.subr.bf16.mxu0 0
          %661 = vmatpush1.bf16.msra.mxu0 0
          %662 = vmatprep.subr.bf16.mxu0 0
          %663 = vmatpush1.bf16.msra.mxu0 0
          %664 = vmatprep.subr.bf16.mxu0 0
          %665 = vmatpush1.bf16.msra.mxu0 0
          %666 = vmatprep.subr.bf16.mxu0 0
          %667 = vmatpush1.bf16.msra.mxu0 0
          %668 = vmatprep.mubr.bf16.mxu0 0
          %669 = vmatmul.mubr.bf16.gmra.mrb[0].mxu0 %v634
          %v670 = vpop.f32.mrb[0].mxu0
          %v671 = vadd.f32 0.0, %v670
          %v672 = vpop.f32.mrb[0].mxu0
          %v673 = vpop.f32.mrb[0].mxu0
          %v674 = vpop.f32.mrb[0].mxu0
          %675 = vdwg.mxu0
          %v676 = vpack.c.bf16 %v671, %v671
          %vm677 = vcmask 257024
          %678 = vst.msk [vmem:[#allocation2] sm:$0xf] %vm677, %v676
          %v679 = vld [vmem:[%s6] sm:$0xf]
          %v680 = vld [vmem:[%s6 + $0x4] sm:$0xf]
          %v681 = vld [vmem:[%s6 + $0x8] sm:$0xf]
          %v682 = vld [vmem:[%s6 + $0xc] sm:$0xf]
          %v687 = vunpack.c.l.b16 %v679
          %v688 = vunpack.c.l.b16 %v680
          %v689 = vunpack.c.l.b16 %v681
          %v690 = vunpack.c.l.b16 %v682
          %v691 = vpack.c.b16 %v688, %v687
          %v692 = vpack.c.b16 %v690, %v689
          %695 = vmatprep.subr.bf16.mxu0 0
          %696 = vmatpush1.bf16.msra.mxu0 %v691
          %697 = vmatprep.subr.bf16.mxu0 0
          %698 = vmatpush1.bf16.msra.mxu0 %v692
          %699 = vmatprep.subr.bf16.mxu0 0
          %700 = vmatpush1.bf16.msra.mxu0 0
          %701 = vmatprep.subr.bf16.mxu0 0
          %702 = vmatpush1.bf16.msra.mxu0 0
          %703 = vmatprep.subr.bf16.mxu0 0
          %704 = vmatpush1.bf16.msra.mxu0 0
          %705 = vmatprep.subr.bf16.mxu0 0
          %706 = vmatpush1.bf16.msra.mxu0 0
          %707 = vmatprep.subr.bf16.mxu0 0
          %708 = vmatpush1.bf16.msra.mxu0 0
          %709 = vmatprep.subr.bf16.mxu0 0
          %710 = vmatpush1.bf16.msra.mxu0 0
          %711 = vmatprep.subr.bf16.mxu0 0
          %712 = vmatpush1.bf16.msra.mxu0 0
          %713 = vmatprep.subr.bf16.mxu0 0
          %714 = vmatpush1.bf16.msra.mxu0 0
          %715 = vmatprep.subr.bf16.mxu0 0
          %716 = vmatpush1.bf16.msra.mxu0 0
          %717 = vmatprep.subr.bf16.mxu0 0
          %718 = vmatpush1.bf16.msra.mxu0 0
          %719 = vmatprep.subr.bf16.mxu0 0
          %720 = vmatpush1.bf16.msra.mxu0 0
          %721 = vmatprep.subr.bf16.mxu0 0
          %722 = vmatpush1.bf16.msra.mxu0 0
          %723 = vmatprep.subr.bf16.mxu0 0
          %724 = vmatpush1.bf16.msra.mxu0 0
          %725 = vmatprep.subr.bf16.mxu0 0
          %726 = vmatpush1.bf16.msra.mxu0 0
          %727 = vmatprep.mubr.bf16.mxu0 0
          %728 = vmatmul.mubr.bf16.gmra.mrb[0].mxu0 %v634
          %v729 = vpop.f32.mrb[0].mxu0
          %v730 = vadd.f32 0.0, %v729
          %v731 = vpop.f32.mrb[0].mxu0
          %v732 = vpop.f32.mrb[0].mxu0
          %v733 = vpop.f32.mrb[0].mxu0
          %734 = vdwg.mxu0
          %v735 = vpack.c.bf16 %v730, %v730
          %736 = vst.msk [vmem:[#allocation3] sm:$0xf] %vm677, %v735
        $region96: #{tpu_custom_call.1} parent=79 // pred_fallthru
          _
        %vm737 = vcmask 261120
        %v738 = vsel %vm737, %v578, 0.0
        %739 = vadd.xlane.f32.xlu0 %v738
        %v740 = vpop.xlane.xlu0 %739
        %v741 = vrcp.pop 32.0
        %v742 = vmul.f32 %v740, %v741
        %v743 = vsub.f32 %v578, %v742
        %v744 = vmul.f32 %v743, %v743
        %v745 = vsel %vm737, %v744, 0.0
        %746 = vadd.xlane.f32.xlu0 %v745
        %v747 = vpop.xlane.xlu0 %746
        %v748 = vmul.f32 %v747, %v741
        %v749 = vadd.f32 %v748, 1e-05
        %v750 = vrsqrt.pop %v749
        %v751 = vmul.f32 %v743, %v750
        %v753 = vlaneseq
        %v754 = vshrl.u32 %v753, 7
        %v755 = vsub.s32 0, %v754
        %v756 = vrot.slane %v579, %v755
        %v758 = vmul.f32 %v751, %v756
        %v760 = vlaneseq
        %v761 = vshrl.u32 %v760, 7
        %v762 = vsub.s32 0, %v761
        %v763 = vrot.slane %v580, %v762
        %v765 = vadd.f32 %v758, %v763
        %v766 = vpack.c.bf16 %v765, %v765
        %v767 = vld [vmem:[%s4] sm:$0xf]
        %v768 = vld [vmem:[%s4 + $0x4] sm:$0xf]
        %v769 = vld [vmem:[%s4 + $0x8] sm:$0xf]
        %v770 = vld [vmem:[%s4 + $0xc] sm:$0xf]
        %v775 = vunpack.c.l.b16 %v767
        %v776 = vunpack.c.l.b16 %v768
        %v777 = vunpack.c.l.b16 %v769
        %v778 = vunpack.c.l.b16 %v770
        %v779 = vpack.c.b16 %v776, %v775
        %v780 = vpack.c.b16 %v778, %v777
        %v784 = vsel %vm737, %v766, 0
        %786 = vmatprep.subr.bf16.mxu0 0
        %787 = vmatpush1.bf16.msra.mxu0 %v779
        %788 = vmatprep.subr.bf16.mxu0 0
        %789 = vmatpush1.bf16.msra.mxu0 %v780
        %790 = vmatprep.subr.bf16.mxu0 0
        %791 = vmatpush1.bf16.msra.mxu0 0
        %792 = vmatprep.subr.bf16.mxu0 0
        %793 = vmatpush1.bf16.msra.mxu0 0
        %794 = vmatprep.subr.bf16.mxu0 0
        %795 = vmatpush1.bf16.msra.mxu0 0
        %796 = vmatprep.subr.bf16.mxu0 0
        %797 = vmatpush1.bf16.msra.mxu0 0
        %798 = vmatprep.subr.bf16.mxu0 0
        %799 = vmatpush1.bf16.msra.mxu0 0
        %800 = vmatprep.subr.bf16.mxu0 0
        %801 = vmatpush1.bf16.msra.mxu0 0
        %802 = vmatprep.subr.bf16.mxu0 0
        %803 = vmatpush1.bf16.msra.mxu0 0
        %804 = vmatprep.subr.bf16.mxu0 0
        %805 = vmatpush1.bf16.msra.mxu0 0
        %806 = vmatprep.subr.bf16.mxu0 0
        %807 = vmatpush1.bf16.msra.mxu0 0
        %808 = vmatprep.subr.bf16.mxu0 0
        %809 = vmatpush1.bf16.msra.mxu0 0
        %810 = vmatprep.subr.bf16.mxu0 0
        %811 = vmatpush1.bf16.msra.mxu0 0
        %812 = vmatprep.subr.bf16.mxu0 0
        %813 = vmatpush1.bf16.msra.mxu0 0
        %814 = vmatprep.subr.bf16.mxu0 0
        %815 = vmatpush1.bf16.msra.mxu0 0
        %816 = vmatprep.subr.bf16.mxu0 0
        %817 = vmatpush1.bf16.msra.mxu0 0
        %818 = vmatprep.mubr.bf16.mxu0 0
        %819 = vmatmul.mubr.bf16.gmra.mrb[0].mxu0 %v784
        %v820 = vpop.f32.mrb[0].mxu0
        %v821 = vadd.f32 0.0, %v820
        %v822 = vpop.f32.mrb[0].mxu0
        %v823 = vpop.f32.mrb[0].mxu0
        %v824 = vpop.f32.mrb[0].mxu0
        %825 = vdwg.mxu0
        %v826 = vmul.f32 %v821, 0.17677669
        %v827 = vpack.c.bf16 %v826, %v826
        %v828 = vld [vmem:[#allocation2] sm:$0xf]
        %v829 = vld [vmem:[#allocation3] sm:$0xf]
        %vm830 = vcmask 64512
        %v832 = vsel %vm830, %v827, 0
        %v835 = vsel %vm830, %v828, 0
        %837 = vmatprep.subr.bf16.mxu0 0
        %838 = vmatpush1.bf16.xpose.msra.mxu0 %v835
        %839 = vmatprep.subr.bf16.mxu0 0
        %840 = vmatpush1.bf16.xpose.msra.mxu0 0
        %841 = vmatprep.subr.bf16.mxu0 0
        %842 = vmatpush1.bf16.xpose.msra.mxu0 0
        %843 = vmatprep.subr.bf16.mxu0 0
        %844 = vmatpush1.bf16.xpose.msra.mxu0 0
        %845 = vmatprep.subr.bf16.mxu0 0
        %846 = vmatpush1.bf16.xpose.msra.mxu0 0
        %847 = vmatprep.subr.bf16.mxu0 0
        %848 = vmatpush1.bf16.xpose.msra.mxu0 0
        %849 = vmatprep.subr.bf16.mxu0 0
        %850 = vmatpush1.bf16.xpose.msra.mxu0 0
        %851 = vmatprep.subr.bf16.mxu0 0
        %852 = vmatpush1.bf16.xpose.msra.mxu0 0
        %853 = vmatprep.subr.bf16.mxu0 0
        %854 = vmatpush1.bf16.xpose.msra.mxu0 0
        %855 = vmatprep.subr.bf16.mxu0 0
        %856 = vmatpush1.bf16.xpose.msra.mxu0 0
        %857 = vmatprep.subr.bf16.mxu0 0
        %858 = vmatpush1.bf16.xpose.msra.mxu0 0
        %859 = vmatprep.subr.bf16.mxu0 0
        %860 = vmatpush1.bf16.xpose.msra.mxu0 0
        %861 = vmatprep.subr.bf16.mxu0 0
        %862 = vmatpush1.bf16.xpose.msra.mxu0 0
        %863 = vmatprep.subr.bf16.mxu0 0
        %864 = vmatpush1.bf16.xpose.msra.mxu0 0
        %865 = vmatprep.subr.bf16.mxu0 0
        %866 = vmatpush1.bf16.xpose.msra.mxu0 0
        %867 = vmatprep.subr.bf16.mxu0 0
        %868 = vmatpush1.bf16.xpose.msra.mxu0 0
        %869 = vmatprep.mubr.bf16.mxu0 0
        %870 = vmatmul.mubr.bf16.gmra.mrb[0].mxu0 %v832
        %v871 = vpop.f32.mrb[0].mxu0
        %v872 = vadd.f32 0.0, %v871
        %v873 = vpop.f32.mrb[0].mxu0
        %v874 = vpop.f32.mrb[0].mxu0
        %v875 = vpop.f32.mrb[0].mxu0
        %876 = vdwg.mxu0
        %v877 = vsel %vm830, %v872, -inf
        %878 = vmax.xlane.f32.xlu0 %v877
        %v879 = vpop.xlane.xlu0 %878
        %v880 = vsub.f32 %v872, %v879
        %v881 = vmul.f32 %v880, 1.442695
        %v882 = vpow.pop %v881
        %v883 = vsel %vm830, %v882, 0.0
        %884 = vadd.xlane.f32.xlu0 %v883
        %v885 = vpop.xlane.xlu0 %884
        %v886 = vrcp.pop %v885
        %v887 = vmul.f32 %v882, %v886
        %v888 = vpack.c.bf16 %v887, %v887
        %v890 = vsel %vm830, %v888, 0
        %vm892 = vcmask 1043456
        %v894 = vsel %vm892, %v829, 0
        %896 = vmatprep.subr.bf16.mxu0 0
        %897 = vmatpush1.bf16.msra.mxu0 %v894
        %898 = vmatprep.subr.bf16.mxu0 0
        %899 = vmatpush1.bf16.msra.mxu0 0
        %900 = vmatprep.subr.bf16.mxu0 0
        %901 = vmatpush1.bf16.msra.mxu0 0
        %902 = vmatprep.subr.bf16.mxu0 0
        %903 = vmatpush1.bf16.msra.mxu0 0
        %904 = vmatprep.subr.bf16.mxu0 0
        %905 = vmatpush1.bf16.msra.mxu0 0
        %906 = vmatprep.subr.bf16.mxu0 0
        %907 = vmatpush1.bf16.msra.mxu0 0
        %908 = vmatprep.subr.bf16.mxu0 0
        %909 = vmatpush1.bf16.msra.mxu0 0
        %910 = vmatprep.subr.bf16.mxu0 0
        %911 = vmatpush1.bf16.msra.mxu0 0
        %912 = vmatprep.subr.bf16.mxu0 0
        %913 = vmatpush1.bf16.msra.mxu0 0
        %914 = vmatprep.subr.bf16.mxu0 0
        %915 = vmatpush1.bf16.msra.mxu0 0
        %916 = vmatprep.subr.bf16.mxu0 0
        %917 = vmatpush1.bf16.msra.mxu0 0
        %918 = vmatprep.subr.bf16.mxu0 0
        %919 = vmatpush1.bf16.msra.mxu0 0
        %920 = vmatprep.subr.bf16.mxu0 0
        %921 = vmatpush1.bf16.msra.mxu0 0
        %922 = vmatprep.subr.bf16.mxu0 0
        %923 = vmatpush1.bf16.msra.mxu0 0
        %924 = vmatprep.subr.bf16.mxu0 0
        %925 = vmatpush1.bf16.msra.mxu0 0
        %926 = vmatprep.subr.bf16.mxu0 0
        %927 = vmatpush1.bf16.msra.mxu0 0
        %928 = vmatprep.mubr.bf16.mxu0 0
        %929 = vmatmul.mubr.bf16.gmra.mrb[0].mxu0 %v890
        %v930 = vpop.f32.mrb[0].mxu0
        %v931 = vadd.f32 0.0, %v930
        %v932 = vpop.f32.mrb[0].mxu0
        %v933 = vpop.f32.mrb[0].mxu0
        %v934 = vpop.f32.mrb[0].mxu0
        %935 = vdwg.mxu0
        %936 = vst.msk [vmem:[#allocation4] sm:$0xff] %vm830, %v931
        %938 = vrot.lane.b32.xlu0 %v827, 120
        %v939 = vpop.permute.xlu0 %938
        %v941 = vunpack.c.l.b16 %v828
        %v942 = vpack.c.b16 %v941, %v941
        %943 = vrot.lane.b32.xlu0 %v942, 120
        %v944 = vpop.permute.xlu0 %943
        %v946 = vsel %vm830, %v939, 0
        %v949 = vsel %vm830, %v944, 0
        %951 = vmatprep.subr.bf16.mxu0 0
        %952 = vmatpush1.bf16.xpose.msra.mxu0 %v949
        %953 = vmatprep.subr.bf16.mxu0 0
        %954 = vmatpush1.bf16.xpose.msra.mxu0 0
        %955 = vmatprep.subr.bf16.mxu0 0
        %956 = vmatpush1.bf16.xpose.msra.mxu0 0
        %957 = vmatprep.subr.bf16.mxu0 0
        %958 = vmatpush1.bf16.xpose.msra.mxu0 0
        %959 = vmatprep.subr.bf16.mxu0 0
        %960 = vmatpush1.bf16.xpose.msra.mxu0 0
        %961 = vmatprep.subr.bf16.mxu0 0
        %962 = vmatpush1.bf16.xpose.msra.mxu0 0
        %963 = vmatprep.subr.bf16.mxu0 0
        %964 = vmatpush1.bf16.xpose.msra.mxu0 0
        %965 = vmatprep.subr.bf16.mxu0 0
        %966 = vmatpush1.bf16.xpose.msra.mxu0 0
        %967 = vmatprep.subr.bf16.mxu0 0
        %968 = vmatpush1.bf16.xpose.msra.mxu0 0
        %969 = vmatprep.subr.bf16.mxu0 0
        %970 = vmatpush1.bf16.xpose.msra.mxu0 0
        %971 = vmatprep.subr.bf16.mxu0 0
        %972 = vmatpush1.bf16.xpose.msra.mxu0 0
        %973 = vmatprep.subr.bf16.mxu0 0
        %974 = vmatpush1.bf16.xpose.msra.mxu0 0
        %975 = vmatprep.subr.bf16.mxu0 0
        %976 = vmatpush1.bf16.xpose.msra.mxu0 0
        %977 = vmatprep.subr.bf16.mxu0 0
        %978 = vmatpush1.bf16.xpose.msra.mxu0 0
        %979 = vmatprep.subr.bf16.mxu0 0
        %980 = vmatpush1.bf16.xpose.msra.mxu0 0
        %981 = vmatprep.subr.bf16.mxu0 0
        %982 = vmatpush1.bf16.xpose.msra.mxu0 0
        %983 = vmatprep.mubr.bf16.mxu0 0
        %984 = vmatmul.mubr.bf16.gmra.mrb[0].mxu0 %v946
        %v985 = vpop.f32.mrb[0].mxu0
        %v986 = vadd.f32 0.0, %v985
        %v987 = vpop.f32.mrb[0].mxu0
        %v988 = vpop.f32.mrb[0].mxu0
        %v989 = vpop.f32.mrb[0].mxu0
        %990 = vdwg.mxu0
        %v991 = vsel %vm830, %v986, -inf
        %992 = vmax.xlane.f32.xlu0 %v991
        %v993 = vpop.xlane.xlu0 %992
        %v994 = vsub.f32 %v986, %v993
        %v995 = vmul.f32 %v994, 1.442695
        %v996 = vpow.pop %v995
        %v997 = vsel %vm830, %v996, 0.0
        %998 = vadd.xlane.f32.xlu0 %v997
        %v999 = vpop.xlane.xlu0 %998
        %v1000 = vrcp.pop %v999
        %v1001 = vmul.f32 %v996, %v1000
        %v1002 = vpack.c.bf16 %v1001, %v1001
        %v1004 = vunpack.c.l.b16 %v829
        %v1005 = vpack.c.b16 %v1004, %v1004
        %1006 = vrot.lane.b32.xlu0 %v1005, 120
        %v1007 = vpop.permute.xlu0 %1006
        %v1009 = vsel %vm830, %v1002, 0
        %v1012 = vsel %vm892, %v1007, 0
        %1014 = vmatprep.subr.bf16.mxu0 0
        %1015 = vmatpush1.bf16.msra.mxu0 %v1012
        %1016 = vmatprep.subr.bf16.mxu0 0
        %1017 = vmatpush1.bf16.msra.mxu0 0
        %1018 = vmatprep.subr.bf16.mxu0 0
        %1019 = vmatpush1.bf16.msra.mxu0 0
        %1020 = vmatprep.subr.bf16.mxu0 0
        %1021 = vmatpush1.bf16.msra.mxu0 0
        %1022 = vmatprep.subr.bf16.mxu0 0
        %1023 = vmatpush1.bf16.msra.mxu0 0
        %1024 = vmatprep.subr.bf16.mxu0 0
        %1025 = vmatpush1.bf16.msra.mxu0 0
        %1026 = vmatprep.subr.bf16.mxu0 0
        %1027 = vmatpush1.bf16.msra.mxu0 0
        %1028 = vmatprep.subr.bf16.mxu0 0
        %1029 = vmatpush1.bf16.msra.mxu0 0
        %1030 = vmatprep.subr.bf16.mxu0 0
        %1031 = vmatpush1.bf16.msra.mxu0 0
        %1032 = vmatprep.subr.bf16.mxu0 0
        %1033 = vmatpush1.bf16.msra.mxu0 0
        %1034 = vmatprep.subr.bf16.mxu0 0
        %1035 = vmatpush1.bf16.msra.mxu0 0
        %1036 = vmatprep.subr.bf16.mxu0 0
        %1037 = vmatpush1.bf16.msra.mxu0 0
        %1038 = vmatprep.subr.bf16.mxu0 0
        %1039 = vmatpush1.bf16.msra.mxu0 0
        %1040 = vmatprep.subr.bf16.mxu0 0
        %1041 = vmatpush1.bf16.msra.mxu0 0
        %1042 = vmatprep.subr.bf16.mxu0 0
        %1043 = vmatpush1.bf16.msra.mxu0 0
        %1044 = vmatprep.subr.bf16.mxu0 0
        %1045 = vmatpush1.bf16.msra.mxu0 0
        %1046 = vmatprep.mubr.bf16.mxu0 0
        %1047 = vmatmul.mubr.bf16.gmra.mrb[0].mxu0 %v1009
        %v1048 = vpop.f32.mrb[0].mxu0
        %v1049 = vadd.f32 0.0, %v1048
        %v1050 = vpop.f32.mrb[0].mxu0
        %v1051 = vpop.f32.mrb[0].mxu0
        %v1052 = vpop.f32.mrb[0].mxu0
        %1053 = vdwg.mxu0
        %1055 = vrot.lane.b32.xlu0 %v1049, 8
        %v1056 = vpop.permute.xlu0 %1055
        %vm1058 = vcmask 130112
        %1059 = vst.msk [vmem:[#allocation4] sm:$0xff] %vm1058, %v1056
        %1060 = vrot.lane.b32.xlu0 %v827, 112
        %v1061 = vpop.permute.xlu0 %1060
        %1062 = vrot.lane.b32.xlu0 %v942, 112
        %v1063 = vpop.permute.xlu0 %1062
        %v1065 = vsel %vm830, %v1061, 0
        %v1068 = vsel %vm830, %v1063, 0
        %1070 = vmatprep.subr.bf16.mxu0 0
        %1071 = vmatpush1.bf16.xpose.msra.mxu0 %v1068
        %1072 = vmatprep.subr.bf16.mxu0 0
        %1073 = vmatpush1.bf16.xpose.msra.mxu0 0
        %1074 = vmatprep.subr.bf16.mxu0 0
        %1075 = vmatpush1.bf16.xpose.msra.mxu0 0
        %1076 = vmatprep.subr.bf16.mxu0 0
        %1077 = vmatpush1.bf16.xpose.msra.mxu0 0
        %1078 = vmatprep.subr.bf16.mxu0 0
        %1079 = vmatpush1.bf16.xpose.msra.mxu0 0
        %1080 = vmatprep.subr.bf16.mxu0 0
        %1081 = vmatpush1.bf16.xpose.msra.mxu0 0
        %1082 = vmatprep.subr.bf16.mxu0 0
        %1083 = vmatpush1.bf16.xpose.msra.mxu0 0
        %1084 = vmatprep.subr.bf16.mxu0 0
        %1085 = vmatpush1.bf16.xpose.msra.mxu0 0
        %1086 = vmatprep.subr.bf16.mxu0 0
        %1087 = vmatpush1.bf16.xpose.msra.mxu0 0
        %1088 = vmatprep.subr.bf16.mxu0 0
        %1089 = vmatpush1.bf16.xpose.msra.mxu0 0
        %1090 = vmatprep.subr.bf16.mxu0 0
        %1091 = vmatpush1.bf16.xpose.msra.mxu0 0
        %1092 = vmatprep.subr.bf16.mxu0 0
        %1093 = vmatpush1.bf16.xpose.msra.mxu0 0
        %1094 = vmatprep.subr.bf16.mxu0 0
        %1095 = vmatpush1.bf16.xpose.msra.mxu0 0
        %1096 = vmatprep.subr.bf16.mxu0 0
        %1097 = vmatpush1.bf16.xpose.msra.mxu0 0
        %1098 = vmatprep.subr.bf16.mxu0 0
        %1099 = vmatpush1.bf16.xpose.msra.mxu0 0
        %1100 = vmatprep.subr.bf16.mxu0 0
        %1101 = vmatpush1.bf16.xpose.msra.mxu0 0
        %1102 = vmatprep.mubr.bf16.mxu0 0
        %1103 = vmatmul.mubr.bf16.gmra.mrb[0].mxu0 %v1065
        %v1104 = vpop.f32.mrb[0].mxu0
        %v1105 = vadd.f32 0.0, %v1104
        %v1106 = vpop.f32.mrb[0].mxu0
        %v1107 = vpop.f32.mrb[0].mxu0
        %v1108 = vpop.f32.mrb[0].mxu0
        %1109 = vdwg.mxu0
        %v1110 = vsel %vm830, %v1105, -inf
        %1111 = vmax.xlane.f32.xlu0 %v1110
        %v1112 = vpop.xlane.xlu0 %1111
        %v1113 = vsub.f32 %v1105, %v1112
        %v1114 = vmul.f32 %v1113, 1.442695
        %v1115 = vpow.pop %v1114
        %v1116 = vsel %vm830, %v1115, 0.0
        %1117 = vadd.xlane.f32.xlu0 %v1116
        %v1118 = vpop.xlane.xlu0 %1117
        %v1119 = vrcp.pop %v1118
        %v1120 = vmul.f32 %v1115, %v1119
        %v1121 = vpack.c.bf16 %v1120, %v1120
        %1122 = vrot.lane.b32.xlu0 %v1005, 112
        %v1123 = vpop.permute.xlu0 %1122
        %v1125 = vsel %vm830, %v1121, 0
        %v1128 = vsel %vm892, %v1123, 0
        %1130 = vmatprep.subr.bf16.mxu0 0
        %1131 = vmatpush1.bf16.msra.mxu0 %v1128
        %1132 = vmatprep.subr.bf16.mxu0 0
        %1133 = vmatpush1.bf16.msra.mxu0 0
        %1134 = vmatprep.subr.bf16.mxu0 0
        %1135 = vmatpush1.bf16.msra.mxu0 0
        %1136 = vmatprep.subr.bf16.mxu0 0
        %1137 = vmatpush1.bf16.msra.mxu0 0
        %1138 = vmatprep.subr.bf16.mxu0 0
        %1139 = vmatpush1.bf16.msra.mxu0 0
        %1140 = vmatprep.subr.bf16.mxu0 0
        %1141 = vmatpush1.bf16.msra.mxu0 0
        %1142 = vmatprep.subr.bf16.mxu0 0
        %1143 = vmatpush1.bf16.msra.mxu0 0
        %1144 = vmatprep.subr.bf16.mxu0 0
        %1145 = vmatpush1.bf16.msra.mxu0 0
        %1146 = vmatprep.subr.bf16.mxu0 0
        %1147 = vmatpush1.bf16.msra.mxu0 0
        %1148 = vmatprep.subr.bf16.mxu0 0
        %1149 = vmatpush1.bf16.msra.mxu0 0
        %1150 = vmatprep.subr.bf16.mxu0 0
        %1151 = vmatpush1.bf16.msra.mxu0 0
        %1152 = vmatprep.subr.bf16.mxu0 0
        %1153 = vmatpush1.bf16.msra.mxu0 0
        %1154 = vmatprep.subr.bf16.mxu0 0
        %1155 = vmatpush1.bf16.msra.mxu0 0
        %1156 = vmatprep.subr.bf16.mxu0 0
        %1157 = vmatpush1.bf16.msra.mxu0 0
        %1158 = vmatprep.subr.bf16.mxu0 0
        %1159 = vmatpush1.bf16.msra.mxu0 0
        %1160 = vmatprep.subr.bf16.mxu0 0
        %1161 = vmatpush1.bf16.msra.mxu0 0
        %1162 = vmatprep.mubr.bf16.mxu0 0
        %1163 = vmatmul.mubr.bf16.gmra.mrb[0].mxu0 %v1125
        %v1164 = vpop.f32.mrb[0].mxu0
        %v1165 = vadd.f32 0.0, %v1164
        %v1166 = vpop.f32.mrb[0].mxu0
        %v1167 = vpop.f32.mrb[0].mxu0
        %v1168 = vpop.f32.mrb[0].mxu0
        %1169 = vdwg.mxu0
        %1171 = vrot.lane.b32.xlu0 %v1165, 16
        %v1172 = vpop.permute.xlu0 %1171
        %vm1174 = vcmask 195712
        %1175 = vst.msk [vmem:[#allocation4] sm:$0xff] %vm1174, %v1172
        %1176 = vrot.lane.b32.xlu0 %v827, 104
        %v1177 = vpop.permute.xlu0 %1176
        %1178 = vrot.lane.b32.xlu0 %v942, 104
        %v1179 = vpop.permute.xlu0 %1178
        %v1181 = vsel %vm830, %v1177, 0
        %v1184 = vsel %vm830, %v1179, 0
        %1186 = vmatprep.subr.bf16.mxu0 0
        %1187 = vmatpush1.bf16.xpose.msra.mxu0 %v1184
        %1188 = vmatprep.subr.bf16.mxu0 0
        %1189 = vmatpush1.bf16.xpose.msra.mxu0 0
        %1190 = vmatprep.subr.bf16.mxu0 0
        %1191 = vmatpush1.bf16.xpose.msra.mxu0 0
        %1192 = vmatprep.subr.bf16.mxu0 0
        %1193 = vmatpush1.bf16.xpose.msra.mxu0 0
        %1194 = vmatprep.subr.bf16.mxu0 0
        %1195 = vmatpush1.bf16.xpose.msra.mxu0 0
        %1196 = vmatprep.subr.bf16.mxu0 0
        %1197 = vmatpush1.bf16.xpose.msra.mxu0 0
        %1198 = vmatprep.subr.bf16.mxu0 0
        %1199 = vmatpush1.bf16.xpose.msra.mxu0 0
        %1200 = vmatprep.subr.bf16.mxu0 0
        %1201 = vmatpush1.bf16.xpose.msra.mxu0 0
        %1202 = vmatprep.subr.bf16.mxu0 0
        %1203 = vmatpush1.bf16.xpose.msra.mxu0 0
        %1204 = vmatprep.subr.bf16.mxu0 0
        %1205 = vmatpush1.bf16.xpose.msra.mxu0 0
        %1206 = vmatprep.subr.bf16.mxu0 0
        %1207 = vmatpush1.bf16.xpose.msra.mxu0 0
        %1208 = vmatprep.subr.bf16.mxu0 0
        %1209 = vmatpush1.bf16.xpose.msra.mxu0 0
        %1210 = vmatprep.subr.bf16.mxu0 0
        %1211 = vmatpush1.bf16.xpose.msra.mxu0 0
        %1212 = vmatprep.subr.bf16.mxu0 0
        %1213 = vmatpush1.bf16.xpose.msra.mxu0 0
        %1214 = vmatprep.subr.bf16.mxu0 0
        %1215 = vmatpush1.bf16.xpose.msra.mxu0 0
        %1216 = vmatprep.subr.bf16.mxu0 0
        %1217 = vmatpush1.bf16.xpose.msra.mxu0 0
        %1218 = vmatprep.mubr.bf16.mxu0 0
        %1219 = vmatmul.mubr.bf16.gmra.mrb[0].mxu0 %v1181
        %v1220 = vpop.f32.mrb[0].mxu0
        %v1221 = vadd.f32 0.0, %v1220
        %v1222 = vpop.f32.mrb[0].mxu0
        %v1223 = vpop.f32.mrb[0].mxu0
        %v1224 = vpop.f32.mrb[0].mxu0
        %1225 = vdwg.mxu0
        %v1226 = vsel %vm830, %v1221, -inf
        %1227 = vmax.xlane.f32.xlu0 %v1226
        %v1228 = vpop.xlane.xlu0 %1227
        %v1229 = vsub.f32 %v1221, %v1228
        %v1230 = vmul.f32 %v1229, 1.442695
        %v1231 = vpow.pop %v1230
        %v1232 = vsel %vm830, %v1231, 0.0
        %1233 = vadd.xlane.f32.xlu0 %v1232
        %v1234 = vpop.xlane.xlu0 %1233
        %v1235 = vrcp.pop %v1234
        %v1236 = vmul.f32 %v1231, %v1235
        %v1237 = vpack.c.bf16 %v1236, %v1236
        %1238 = vrot.lane.b32.xlu0 %v1005, 104
        %v1239 = vpop.permute.xlu0 %1238
        %v1241 = vsel %vm830, %v1237, 0
        %v1244 = vsel %vm892, %v1239, 0
        %1246 = vmatprep.subr.bf16.mxu0 0
        %1247 = vmatpush1.bf16.msra.mxu0 %v1244
        %1248 = vmatprep.subr.bf16.mxu0 0
        %1249 = vmatpush1.bf16.msra.mxu0 0
        %1250 = vmatprep.subr.bf16.mxu0 0
        %1251 = vmatpush1.bf16.msra.mxu0 0
        %1252 = vmatprep.subr.bf16.mxu0 0
        %1253 = vmatpush1.bf16.msra.mxu0 0
        %1254 = vmatprep.subr.bf16.mxu0 0
        %1255 = vmatpush1.bf16.msra.mxu0 0
        %1256 = vmatprep.subr.bf16.mxu0 0
        %1257 = vmatpush1.bf16.msra.mxu0 0
        %1258 = vmatprep.subr.bf16.mxu0 0
        %1259 = vmatpush1.bf16.msra.mxu0 0
        %1260 = vmatprep.subr.bf16.mxu0 0
        %1261 = vmatpush1.bf16.msra.mxu0 0
        %1262 = vmatprep.subr.bf16.mxu0 0
        %1263 = vmatpush1.bf16.msra.mxu0 0
        %1264 = vmatprep.subr.bf16.mxu0 0
        %1265 = vmatpush1.bf16.msra.mxu0 0
        %1266 = vmatprep.subr.bf16.mxu0 0
        %1267 = vmatpush1.bf16.msra.mxu0 0
        %1268 = vmatprep.subr.bf16.mxu0 0
        %1269 = vmatpush1.bf16.msra.mxu0 0
        %1270 = vmatprep.subr.bf16.mxu0 0
        %1271 = vmatpush1.bf16.msra.mxu0 0
        %1272 = vmatprep.subr.bf16.mxu0 0
        %1273 = vmatpush1.bf16.msra.mxu0 0
        %1274 = vmatprep.subr.bf16.mxu0 0
        %1275 = vmatpush1.bf16.msra.mxu0 0
        %1276 = vmatprep.subr.bf16.mxu0 0
        %1277 = vmatpush1.bf16.msra.mxu0 0
        %1278 = vmatprep.mubr.bf16.mxu0 0
        %1279 = vmatmul.mubr.bf16.gmra.mrb[0].mxu0 %v1241
        %v1280 = vpop.f32.mrb[0].mxu0
        %v1281 = vadd.f32 0.0, %v1280
        %v1282 = vpop.f32.mrb[0].mxu0
        %v1283 = vpop.f32.mrb[0].mxu0
        %v1284 = vpop.f32.mrb[0].mxu0
        %1285 = vdwg.mxu0
        %1287 = vrot.lane.b32.xlu0 %v1281, 24
        %v1288 = vpop.permute.xlu0 %1287
        %vm1290 = vcmask 261312
        %1291 = vst.msk [vmem:[#allocation4] sm:$0xff] %vm1290, %v1288
        %v1292 = vld [vmem:[#allocation4] sm:$0xff]
        %v1293 = vpack.c.bf16 %v1292, %v1292
        %v1294 = vld [vmem:[%s7] sm:$0xf]
        %v1295 = vld [vmem:[%s7 + $0x4] sm:$0xf]
        %v1296 = vld [vmem:[%s7 + $0x8] sm:$0xf]
        %v1297 = vld [vmem:[%s7 + $0xc] sm:$0xf]
        %v1298 = vld [vmem:[#allocation8] sm:$0x1]
        %v1300 = vlaneseq
        %v1301 = vshrl.u32 %v1300, 7
        %v1302 = vsub.s32 0, %v1301
        %v1303 = vrot.slane %v1298, %v1302
        %v1309 = vunpack.c.l.b16 %v1294
        %v1310 = vunpack.c.l.b16 %v1295
        %v1311 = vunpack.c.l.b16 %v1296
        %v1312 = vunpack.c.l.b16 %v1297
        %v1313 = vpack.c.b16 %v1310, %v1309
        %v1314 = vpack.c.b16 %v1312, %v1311
        %v1318 = vsel %vm737, %v1293, 0
        %1320 = vmatprep.subr.bf16.mxu0 0
        %1321 = vmatpush1.bf16.msra.mxu0 %v1313
        %1322 = vmatprep.subr.bf16.mxu0 0
        %1323 = vmatpush1.bf16.msra.mxu0 %v1314
        %1324 = vmatprep.subr.bf16.mxu0 0
        %1325 = vmatpush1.bf16.msra.mxu0 0
        %1326 = vmatprep.subr.bf16.mxu0 0
        %1327 = vmatpush1.bf16.msra.mxu0 0
        %1328 = vmatprep.subr.bf16.mxu0 0
        %1329 = vmatpush1.bf16.msra.mxu0 0
        %1330 = vmatprep.subr.bf16.mxu0 0
        %1331 = vmatpush1.bf16.msra.mxu0 0
        %1332 = vmatprep.subr.bf16.mxu0 0
        %1333 = vmatpush1.bf16.msra.mxu0 0
        %1334 = vmatprep.subr.bf16.mxu0 0
        %1335 = vmatpush1.bf16.msra.mxu0 0
        %1336 = vmatprep.subr.bf16.mxu0 0
        %1337 = vmatpush1.bf16.msra.mxu0 0
        %1338 = vmatprep.subr.bf16.mxu0 0
        %1339 = vmatpush1.bf16.msra.mxu0 0
        %1340 = vmatprep.subr.bf16.mxu0 0
        %1341 = vmatpush1.bf16.msra.mxu0 0
        %1342 = vmatprep.subr.bf16.mxu0 0
        %1343 = vmatpush1.bf16.msra.mxu0 0
        %1344 = vmatprep.subr.bf16.mxu0 0
        %1345 = vmatpush1.bf16.msra.mxu0 0
        %1346 = vmatprep.subr.bf16.mxu0 0
        %1347 = vmatpush1.bf16.msra.mxu0 0
        %1348 = vmatprep.subr.bf16.mxu0 0
        %1349 = vmatpush1.bf16.msra.mxu0 0
        %1350 = vmatprep.subr.bf16.mxu0 0
        %1351 = vmatpush1.bf16.msra.mxu0 0
        %1352 = vmatprep.mubr.bf16.mxu0 0
        %1353 = vmatmul.mubr.bf16.gmra.mrb[0].mxu0 %v1318
        %v1354 = vpop.f32.mrb[0].mxu0
        %v1355 = vadd.f32 %v1303, %v1354
        %v1356 = vpop.f32.mrb[0].mxu0
        %v1357 = vpop.f32.mrb[0].mxu0
        %v1358 = vpop.f32.mrb[0].mxu0
        %1359 = vdwg.mxu0
        %v1360 = vadd.f32 %v578, %v1355
        %v1361 = vld [vmem:[#allocation10] sm:$0x1]
        %v1362 = vld [vmem:[%s10] sm:$0x1]
        %v1363 = vsel %vm737, %v1360, 0.0
        %1364 = vadd.xlane.f32.xlu0 %v1363
        %v1365 = vpop.xlane.xlu0 %1364
        %v1366 = vmul.f32 %v1365, %v741
        %v1367 = vsub.f32 %v1360, %v1366
        %v1368 = vmul.f32 %v1367, %v1367
        %v1369 = vsel %vm737, %v1368, 0.0
        %1370 = vadd.xlane.f32.xlu0 %v1369
        %v1371 = vpop.xlane.xlu0 %1370
        %v1372 = vmul.f32 %v1371, %v741
        %v1373 = vadd.f32 %v1372, 1e-05
        %v1374 = vrsqrt.pop %v1373
        %v1375 = vmul.f32 %v1367, %v1374
        %v1377 = vlaneseq
        %v1378 = vshrl.u32 %v1377, 7
        %v1379 = vsub.s32 0, %v1378
        %v1380 = vrot.slane %v1361, %v1379
        %v1382 = vmul.f32 %v1375, %v1380
        %v1384 = vlaneseq
        %v1385 = vshrl.u32 %v1384, 7
        %v1386 = vsub.s32 0, %v1385
        %v1387 = vrot.slane %v1362, %v1386
        %v1389 = vadd.f32 %v1382, %v1387
        %v1390 = vpack.c.bf16 %v1389, %v1389
        %v1391 = vld [vmem:[%s11] sm:$0xf]
        %v1392 = vld [vmem:[%s11 + $0x4] sm:$0xf]
        %v1393 = vld [vmem:[%s11 + $0x8] sm:$0xf]
        %v1394 = vld [vmem:[%s11 + $0xc] sm:$0xf]
        %v1395 = vld [vmem:[%s12] sm:$0x1]
        %v1397 = vlaneseq
        %v1398 = vshrl.u32 %v1397, 7
        %v1399 = vsub.s32 0, %v1398
        %v1400 = vrot.slane %v1395, %v1399
        %v1406 = vunpack.c.l.b16 %v1391
        %v1407 = vunpack.c.l.b16 %v1392
        %v1408 = vunpack.c.l.b16 %v1393
        %v1409 = vunpack.c.l.b16 %v1394
        %v1410 = vpack.c.b16 %v1407, %v1406
        %v1411 = vpack.c.b16 %v1409, %v1408
        %v1415 = vsel %vm737, %v1390, 0
        %1417 = vmatprep.subr.bf16.mxu0 0
        %1418 = vmatpush1.bf16.msra.mxu0 %v1410
        %1419 = vmatprep.subr.bf16.mxu0 0
        %1420 = vmatpush1.bf16.msra.mxu0 %v1411
        %1421 = vmatprep.subr.bf16.mxu0 0
        %1422 = vmatpush1.bf16.msra.mxu0 0
        %1423 = vmatprep.subr.bf16.mxu0 0
        %1424 = vmatpush1.bf16.msra.mxu0 0
        %1425 = vmatprep.subr.bf16.mxu0 0
        %1426 = vmatpush1.bf16.msra.mxu0 0
        %1427 = vmatprep.subr.bf16.mxu0 0
        %1428 = vmatpush1.bf16.msra.mxu0 0
        %1429 = vmatprep.subr.bf16.mxu0 0
        %1430 = vmatpush1.bf16.msra.mxu0 0
        %1431 = vmatprep.subr.bf16.mxu0 0
        %1432 = vmatpush1.bf16.msra.mxu0 0
        %1433 = vmatprep.subr.bf16.mxu0 0
        %1434 = vmatpush1.bf16.msra.mxu0 0
        %1435 = vmatprep.subr.bf16.mxu0 0
        %1436 = vmatpush1.bf16.msra.mxu0 0
        %1437 = vmatprep.subr.bf16.mxu0 0
        %1438 = vmatpush1.bf16.msra.mxu0 0
        %1439 = vmatprep.subr.bf16.mxu0 0
        %1440 = vmatpush1.bf16.msra.mxu0 0
        %1441 = vmatprep.subr.bf16.mxu0 0
        %1442 = vmatpush1.bf16.msra.mxu0 0
        %1443 = vmatprep.subr.bf16.mxu0 0
        %1444 = vmatpush1.bf16.msra.mxu0 0
        %1445 = vmatprep.subr.bf16.mxu0 0
        %1446 = vmatpush1.bf16.msra.mxu0 0
        %1447 = vmatprep.subr.bf16.mxu0 0
        %1448 = vmatpush1.bf16.msra.mxu0 0
        %1449 = vmatprep.mubr.bf16.mxu0 0
        %1450 = vmatmul.mubr.bf16.gmra.mrb[0].mxu0 %v1415
        %v1451 = vpop.f32.mrb[0].mxu0
        %v1452 = vadd.f32 %v1400, %v1451
        %v1453 = vpop.f32.mrb[0].mxu0
        %v1454 = vpop.f32.mrb[0].mxu0
        %v1455 = vpop.f32.mrb[0].mxu0
        %1456 = vdwg.mxu0
        %v1457 = vmul.f32 %v1452, 0.5
        %v1458 = vmul.f32 %v1452, 0.70710677
        %v1459 = verf.f32.pop %v1458
        %v1460 = vadd.f32 %v1459, 1.0
        %v1461 = vmul.f32 %v1457, %v1460
        %v1462 = vpack.c.bf16 %v1461, %v1461
        %v1463 = vld [vmem:[%s13] sm:$0xf]
        %v1464 = vld [vmem:[%s13 + $0x4] sm:$0xf]
        %v1465 = vld [vmem:[%s13 + $0x8] sm:$0xf]
        %v1466 = vld [vmem:[%s13 + $0xc] sm:$0xf]
        %v1467 = vld [vmem:[%s13 + $0x10] sm:$0xf]
        %v1468 = vld [vmem:[%s13 + $0x14] sm:$0xf]
        %v1469 = vld [vmem:[%s13 + $0x18] sm:$0xf]
        %v1470 = vld [vmem:[%s13 + $0x1c] sm:$0xf]
        %v1471 = vld [vmem:[%s13 + $0x20] sm:$0xf]
        %v1472 = vld [vmem:[%s13 + $0x24] sm:$0xf]
        %v1473 = vld [vmem:[%s13 + $0x28] sm:$0xf]
        %v1474 = vld [vmem:[%s13 + $0x2c] sm:$0xf]
        %v1475 = vld [vmem:[%s13 + $0x30] sm:$0xf]
        %v1476 = vld [vmem:[%s13 + $0x34] sm:$0xf]
        %v1477 = vld [vmem:[%s13 + $0x38] sm:$0xf]
        %v1478 = vld [vmem:[%s13 + $0x3c] sm:$0xf]
        %v1479 = vld [vmem:[%s14] sm:$0x1]
        %v1481 = vlaneseq
        %v1482 = vshrl.u32 %v1481, 7
        %v1483 = vsub.s32 0, %v1482
        %v1484 = vrot.slane %v1479, %v1483
        %v1502 = vunpack.c.l.b16 %v1463
        %v1503 = vunpack.c.l.b16 %v1464
        %v1504 = vunpack.c.l.b16 %v1465
        %v1505 = vunpack.c.l.b16 %v1466
        %v1506 = vunpack.c.l.b16 %v1467
        %v1507 = vunpack.c.l.b16 %v1468
        %v1508 = vunpack.c.l.b16 %v1469
        %v1509 = vunpack.c.l.b16 %v1470
        %v1510 = vunpack.c.l.b16 %v1471
        %v1511 = vunpack.c.l.b16 %v1472
        %v1512 = vunpack.c.l.b16 %v1473
        %v1513 = vunpack.c.l.b16 %v1474
        %v1514 = vunpack.c.l.b16 %v1475
        %v1515 = vunpack.c.l.b16 %v1476
        %v1516 = vunpack.c.l.b16 %v1477
        %v1517 = vunpack.c.l.b16 %v1478
        %v1518 = vpack.c.b16 %v1503, %v1502
        %v1519 = vpack.c.b16 %v1505, %v1504
        %v1520 = vpack.c.b16 %v1507, %v1506
        %v1521 = vpack.c.b16 %v1509, %v1508
        %v1522 = vpack.c.b16 %v1511, %v1510
        %v1523 = vpack.c.b16 %v1513, %v1512
        %v1524 = vpack.c.b16 %v1515, %v1514
        %v1525 = vpack.c.b16 %v1517, %v1516
        %1534 = vmatprep.subr.bf16.mxu0 0
        %1535 = vmatpush1.bf16.msra.mxu0 %v1518
        %1536 = vmatprep.subr.bf16.mxu0 0
        %1537 = vmatpush1.bf16.msra.mxu0 %v1519
        %1538 = vmatprep.subr.bf16.mxu0 0
        %1539 = vmatpush1.bf16.msra.mxu0 %v1520
        %1540 = vmatprep.subr.bf16.mxu0 0
        %1541 = vmatpush1.bf16.msra.mxu0 %v1521
        %1542 = vmatprep.subr.bf16.mxu0 0
        %1543 = vmatpush1.bf16.msra.mxu0 %v1522
        %1544 = vmatprep.subr.bf16.mxu0 0
        %1545 = vmatpush1.bf16.msra.mxu0 %v1523
        %1546 = vmatprep.subr.bf16.mxu0 0
        %1547 = vmatpush1.bf16.msra.mxu0 %v1524
        %1548 = vmatprep.subr.bf16.mxu0 0
        %1549 = vmatpush1.bf16.msra.mxu0 %v1525
        %1550 = vmatprep.subr.bf16.mxu0 0
        %1551 = vmatpush1.bf16.msra.mxu0 0
        %1552 = vmatprep.subr.bf16.mxu0 0
        %1553 = vmatpush1.bf16.msra.mxu0 0
        %1554 = vmatprep.subr.bf16.mxu0 0
        %1555 = vmatpush1.bf16.msra.mxu0 0
        %1556 = vmatprep.subr.bf16.mxu0 0
        %1557 = vmatpush1.bf16.msra.mxu0 0
        %1558 = vmatprep.subr.bf16.mxu0 0
        %1559 = vmatpush1.bf16.msra.mxu0 0
        %1560 = vmatprep.subr.bf16.mxu0 0
        %1561 = vmatpush1.bf16.msra.mxu0 0
        %1562 = vmatprep.subr.bf16.mxu0 0
        %1563 = vmatpush1.bf16.msra.mxu0 0
        %1564 = vmatprep.subr.bf16.mxu0 0
        %1565 = vmatpush1.bf16.msra.mxu0 0
        %1566 = vmatprep.mubr.bf16.mxu0 0
        %1567 = vmatmul.mubr.bf16.gmra.mrb[0].mxu0 %v1462
        %v1568 = vpop.f32.mrb[0].mxu0
        %v1569 = vadd.f32 %v1484, %v1568
        %v1570 = vpop.f32.mrb[0].mxu0
        %v1571 = vpop.f32.mrb[0].mxu0
        %v1572 = vpop.f32.mrb[0].mxu0
        %1573 = vdwg.mxu0
        %v1574 = vadd.f32 %v1360, %v1569
        %1575 = vst.msk [vmem:[%s569] sm:$0xff] %vm737, %v1574
        %s1576 = sand.u32 %s382, 1
        %s1577 = scalar_lea.sflag [#allocation7], %s1576
        %s1578 = sand.u32 %s382, 1
        %s1579 = smul.addr %s1578, 8
        %s1580 = scalar_lea.vmem [#allocation11], %s1579
        // Predicated region
        $region97: #{tpu_custom_call.1} parent=79 // pred_check
          %p1581 = pneg %p392
        $region98: #{tpu_custom_call.1} parent=79 // pred_check_branch
          %1583 = sbr.rel (%p1581) target = $region100
        $region99: #{tpu_custom_call.1} parent=79 // pred_region
          %s1585 = ssub.s32 128, 128
          %1586 = vsyncadd %s1577, %s1585
          %s1587 = sadd.s32 %s38, %s37
          %s1588 = smul.addr %s1587, 128
          %s1589 = scalar_lea.hbm %s15, %s1588
          %s1591 = sshll.u32 %s1580, 4
          %s1592 = int_to_ptr.vmem [resolvable:$true] %s1591
          %1594 = dma.vmem_to_hbm [thread:$0]  %s1592, 128, %s1589, %s1577
        $region100: #{tpu_custom_call.1} parent=79 // pred_fallthru
          _
      $region80: #{tpu_custom_call.1} parent=5 // pred_fallthru
        _
      %p1595 = scmp.le.s32.totalorder 2, %s28
      // Predicated region
      $region101: #{tpu_custom_call.1} parent=5 // pred_check
        %p1596 = pneg %p1595
      $region102: #{tpu_custom_call.1} parent=5 // pred_check_branch
        %1598 = sbr.rel (%p1596) target = $region104
      $region103: #{tpu_custom_call.1} parent=5 // pred_region
        %s1599 = ssub.s32 %s28, 2
        // Predicated region
        $region105: #{tpu_custom_call.1} parent=103 // pred_check
          %p1600 = pneg %p398
        $region106: #{tpu_custom_call.1} parent=103 // pred_check_branch
          %1602 = sbr.rel (%p1600) target = $region108
        $region107: #{tpu_custom_call.1} parent=103 // pred_region
          %s1603 = sand.u32 %s383, 1
          %s1604 = scalar_lea.sflag [#allocation7], %s1603
          %s1605 = sand.u32 %s383, 1
          %s1606 = smul.addr %s1605, 8
          %s1607 = scalar_lea.vmem [#allocation11], %s1606
          %1608 = dma.done %s1604, 128
        $region108: #{tpu_custom_call.1} parent=103 // pred_fallthru
          _
      $region104: #{tpu_custom_call.1} parent=5 // pred_fallthru
        _
    $region6: #{tpu_custom_call.1} parent=1 // loop_footer
      %s32 = sadd.s32 1, %s28
    $region7: #{tpu_custom_call.1} parent=1 // loop_footer_branch
      %27 = sbr.rel target = $region3
    $region8: #{tpu_custom_call.1} parent=1 // loop_exit
      _
    %1609 = vsyncpa [#allocation6], 1
    %s1610 = scalar_lea.sflag [#allocation6], 1
    %1611 = vsyncpa %s1610, 1
    %1612 = vsyncpa [#allocation9], 1
    %1613 = vsyncpa [#allocation7], 1
    %s1614 = scalar_lea.sflag [#allocation7], 1
    %1615 = vsyncpa %s1614, 1

</llo_original>
